<compile_context>
chip_gen: v5e
topology: v5e:2x2
jax: 0.10.0
libtpu: 0.0.40
codegen_flags: <defaults>
</compile_context>

<pallas_src>
import functools

import jax
import jax.numpy as jnp
from jax.experimental import pallas as pl
from jax.experimental.pallas import tpu as pltpu


# ------------------------------------------------------------------ fused kernel

def _fused_forward_kernel(patches_ref, start_ref, cmd_ref,
                          w_conv_ref, b_conv_ref,
                          w_encfc_ref, b_encfc_ref,
                          w_cmd_ref, b_cmd_ref,
                          w_emb_ref, b_emb_ref,
                          w_ih_ref, w_hh_ref, b_g_ref,
                          w_out_t_ref, b_out_ref,
                          path_ref, *, hidden_dim, n_predict):
    """One grid step == one batch BLOCK; everything stays in VMEM / vregs."""
    f32, bf16 = jnp.float32, jnp.bfloat16
    H = hidden_dim
    bb, HW, Kp = patches_ref.shape
    Cc = w_conv_ref.shape[1]

    # -------- encoder: conv3x3 (as one big matmul over im2col patches) + ReLU + GAP + FC
    x = patches_ref[...].reshape(bb * HW, Kp)                            # bf16, M=bb*HW
    conv = jnp.dot(x, w_conv_ref[...], preferred_element_type=f32)       # (bb*HW, Cc) f32
    conv = jnp.maximum(conv + b_conv_ref[...], 0.0)
    pooled = jnp.mean(conv.reshape(bb, HW, Cc), axis=1)                  # (bb, Cc)  f32
    pos_emb = (jnp.dot(pooled.astype(bf16), w_encfc_ref[...],
                       preferred_element_type=f32) + b_encfc_ref[...])   # (bb, H)   f32

    # -------- command encoder: Linear(768, H)
    cmd_emb = (jnp.dot(cmd_ref[...], w_cmd_ref[...],
                       preferred_element_type=f32) + b_cmd_ref[...])     # (bb, H)   f32

    # -------- autoregressive LSTMCell rollout (PyTorch gate order i, f, g, o)
    w_emb = w_emb_ref[...]                                               # (2, E) f32
    w_emb_x, w_emb_y = w_emb[0:1, :], w_emb[1:2, :]                      # (1, E) each
    b_emb = b_emb_ref[...]                                               # (1, E)
    w_ih = w_ih_ref[...]                                                 # (E, 4H) bf16
    w_hh = w_hh_ref[...]                                                 # (H, 4H) bf16
    b_g = b_g_ref[...]                                                   # (1, 4H) f32 (b_ih+b_hh)
    w_out_t = w_out_t_ref[...]                                           # (2, H) f32
    w_out_x, w_out_y = w_out_t[0:1, :], w_out_t[1:2, :]                  # (1, H) each
    b_out = b_out_ref[...]                                               # (1, 2)
    b_out_x, b_out_y = b_out[:, 0:1], b_out[:, 1:2]                      # (1, 1) each

    h = pos_emb                                                          # (bb, H) f32
    c = cmd_emb                                                          # (bb, H) f32
    start = start_ref[...]                                               # (bb, 2) f32
    pos_x, pos_y = start[:, 0:1], start[:, 1:2]                          # (bb, 1) each

    t_iota = jax.lax.broadcasted_iota(jnp.int32, (bb, n_predict), 1)
    path_x = jnp.zeros((bb, n_predict), f32)
    path_y = jnp.zeros((bb, n_predict), f32)

    for t in range(n_predict):                    # statically unrolled serial rollout
        # coordinate embedding Linear(2, E) + ReLU as two VPU broadcast FMAs (K=2 dot = MXU waste)
        e = jnp.maximum(pos_x * w_emb_x + pos_y * w_emb_y + b_emb, 0.0)  # (bb, E) f32
        # fused gate pre-activations: two wide (., 4H) bf16 MXU dots, f32 accumulation
        gates = (jnp.dot(e.astype(bf16), w_ih, preferred_element_type=f32)
                 + jnp.dot(h.astype(bf16), w_hh, preferred_element_type=f32)
                 + b_g)                                                  # (bb, 4H) f32
        i_g = jax.nn.sigmoid(gates[:, 0 * H:1 * H])
        f_g = jax.nn.sigmoid(gates[:, 1 * H:2 * H])
        g_g = jnp.tanh(gates[:, 2 * H:3 * H])
        o_g = jax.nn.sigmoid(gates[:, 3 * H:4 * H])
        c = f_g * c + i_g * g_g
        h = o_g * jnp.tanh(c)
        # hidden -> next coordinate: Linear(H, 2) as two lane reductions (N=2 dot = MXU waste)
        pos_x = jnp.sum(h * w_out_x, axis=-1, keepdims=True) + b_out_x   # (bb, 1)
        pos_y = jnp.sum(h * w_out_y, axis=-1, keepdims=True) + b_out_y   # (bb, 1)
        path_x = jnp.where(t_iota == t, pos_x, path_x)                   # stage in vregs
        path_y = jnp.where(t_iota == t, pos_y, path_y)

    path_ref[0] = path_x.astype(path_ref.dtype)                          # two bulk stores
    path_ref[1] = path_y.astype(path_ref.dtype)


# ------------------------------------------------------------------ glue & params

def _im2col_3x3(x_nhwc):
    """3x3 same-padded patches: (B,H,W,C) -> (B, H*W, 9*C); tap-major, channel-minor."""
    B, H, W, C = x_nhwc.shape
    xp = jnp.pad(x_nhwc, ((0, 0), (1, 1), (1, 1), (0, 0)))
    cols = [xp[:, dy:dy + H, dx:dx + W, :] for dy in range(3) for dx in range(3)]
    return jnp.concatenate(cols, axis=-1).reshape(B, H * W, 9 * C)


def init_params(key, *, in_channels, conv_channels, embedding_dim, hidden_dim):
    ks = jax.random.split(key, 8)
    s = lambda fan_in: 1.0 / jnp.sqrt(jnp.float32(fan_in))
    return {
        # encoder: conv3x3 -> relu -> GAP -> fc(hidden_dim)   (ResNet-18 stand-in)
        "w_conv":   jax.random.normal(ks[0], (9 * in_channels, conv_channels), jnp.float32) * s(9 * in_channels),
        "b_conv":   jnp.zeros((1, conv_channels), jnp.float32),
        "w_enc_fc": jax.random.normal(ks[1], (conv_channels, hidden_dim), jnp.float32) * s(conv_channels),
        "b_enc_fc": jnp.zeros((1, hidden_dim), jnp.float32),
        # command_encoder = nn.Linear(768, hidden_dim)
        "w_cmd":    jax.random.normal(ks[2], (768, hidden_dim), jnp.float32) * s(768),
        "b_cmd":    jnp.zeros((1, hidden_dim), jnp.float32),
        # LSTM decoder
        "w_embed":  jax.random.normal(ks[3], (2, embedding_dim), jnp.float32) * s(2),
        "b_embed":  jnp.zeros((1, embedding_dim), jnp.float32),
        "w_ih":     jax.random.normal(ks[4], (embedding_dim, 4 * hidden_dim), jnp.float32) * s(embedding_dim),
        "b_ih":     jnp.zeros((1, 4 * hidden_dim), jnp.float32),
        "w_hh":     jax.random.normal(ks[5], (hidden_dim, 4 * hidden_dim), jnp.float32) * s(hidden_dim),
        "b_hh":     jnp.zeros((1, 4 * hidden_dim), jnp.float32),
        "w_out":    jax.random.normal(ks[6], (hidden_dim, 2), jnp.float32) * s(hidden_dim),
        "b_out":    jnp.zeros((1, 2), jnp.float32),
    }


def lstm_model_forward(params, layout_nchw, start_positions, command_embedding,
                       *, hidden_dim, n_predict=20):
    """Returns path_coords of shape (n_predict, B, 2)."""
    f32, bf16 = jnp.float32, jnp.bfloat16

    # ---- trace-time glue: NCHW->NHWC, im2col, K padding, bf16 casts, weight prep
    x = jnp.transpose(layout_nchw, (0, 2, 3, 1))                    # NCHW -> NHWC
    B = x.shape[0]
    HW = x.shape[1] * x.shape[2]
    patches = _im2col_3x3(x)                                        # (B, HW, 9C)
    K = patches.shape[-1]
    Kp = ((K + 15) // 16) * 16                                      # 135 -> 144
    patches_p = jnp.pad(patches, ((0, 0), (0, 0), (0, Kp - K))).astype(bf16)
    w_conv_p = jnp.pad(params["w_conv"], ((0, Kp - K), (0, 0))).astype(bf16)

    start2 = start_positions.reshape(B, 2).astype(f32)
    cmd2 = command_embedding.reshape(B, -1).astype(bf16)
    d_cmd = cmd2.shape[-1]
    H = hidden_dim

    # fused gate weights (lane-concatenated i|f|g|o) in bf16; biases pre-added, f32
    w_ih = params["w_ih"].astype(bf16)                              # (E, 4H)
    w_hh = params["w_hh"].astype(bf16)                              # (H, 4H)
    b_g = (params["b_ih"] + params["b_hh"]).astype(f32)             # (1, 4H)
    w_out_t = jnp.transpose(params["w_out"]).astype(f32)            # (2, H)

    # ---- batch blocking: whole batch in one block when it fits (M=B matmuls, no grid overhead)
    bb = B if B <= 128 else 128
    Bp = ((B + bb - 1) // bb) * bb
    nb = Bp // bb
    if Bp != B:
        patches_p = jnp.pad(patches_p, ((0, Bp - B), (0, 0), (0, 0)))
        start2 = jnp.pad(start2, ((0, Bp - B), (0, 0)))
        cmd2 = jnp.pad(cmd2, ((0, Bp - B), (0, 0)))

    operands = (patches_p, start2, cmd2,
                w_conv_p, params["b_conv"],
                params["w_enc_fc"].astype(bf16), params["b_enc_fc"],
                params["w_cmd"].astype(bf16), params["b_cmd"],
                params["w_embed"], params["b_embed"],
                w_ih, w_hh, b_g,
                w_out_t, params["b_out"])

    def _const_spec(arr):
        zeros = (0,) * arr.ndim
        return pl.BlockSpec(arr.shape, lambda b, _z=zeros: _z)      # VMEM-resident weights

    in_specs = [
        pl.BlockSpec((bb, HW, Kp), lambda b: (b, 0, 0)),            # im2col patches (per batch block)
        pl.BlockSpec((bb, 2), lambda b: (b, 0)),                    # start positions
        pl.BlockSpec((bb, d_cmd), lambda b: (b, 0)),                # command embedding
    ] + [_const_spec(op) for op in operands[3:]]

    path = pl.pallas_call(
        functools.partial(_fused_forward_kernel, hidden_dim=H, n_predict=n_predict),
        out_shape=jax.ShapeDtypeStruct((2, Bp, n_predict), f32),
        grid=(nb,),
        in_specs=in_specs,
        out_specs=pl.BlockSpec((2, bb, n_predict), lambda b: (0, b, 0)),
        compiler_params=pltpu.CompilerParams(dimension_semantics=("parallel",)),
    )(*operands)

    return jnp.transpose(path, (2, 1, 0))[:, :B, :]                 # (n_predict, B, 2)


# ------------------------------------------------------------------ main

if __name__ == "__main__":
    B = 2
    IN_CHANNELS = 15        # 14 + 1 (use_ref_obj=True)
    SPATIAL = 16
    CONV_CHANNELS = 32
    EMBEDDING_DIM = 32
    HIDDEN_DIM = 64
    N_PREDICT = 8

    key = jax.random.PRNGKey(0)
    k_params, k_layout, k_start, k_cmd = jax.random.split(key, 4)

    params = init_params(k_params,
                         in_channels=IN_CHANNELS,
                         conv_channels=CONV_CHANNELS,
                         embedding_dim=EMBEDDING_DIM,
                         hidden_dim=HIDDEN_DIM)

    layout = jax.random.normal(k_layout, (B, IN_CHANNELS, SPATIAL, SPATIAL), jnp.float32)
    start_positions = jax.random.normal(k_start, (B, 2), jnp.float32)
    command_embedding = jax.random.normal(k_cmd, (B, 768), jnp.float32)

    fwd = jax.jit(functools.partial(lstm_model_forward,
                                    hidden_dim=HIDDEN_DIM, n_predict=N_PREDICT))
    path_coords = fwd(params, layout, start_positions, command_embedding)
    jax.block_until_ready(path_coords)

    assert path_coords.shape == (N_PREDICT, B, 2)
    assert bool(jnp.all(jnp.isfinite(path_coords)))
    print("KERNEL_OK")
</pallas_src>

<mosaic_0001>
module attributes {stable_mosaic.version = 11 : i64} {
  func.func @_fused_forward_kernel(%arg0: i32, %arg1: memref<2x256x144xbf16, #tpu.memory_space<vmem>>, %arg2: memref<2x2xf32, #tpu.memory_space<vmem>>, %arg3: memref<2x768xbf16, #tpu.memory_space<vmem>>, %arg4: memref<144x32xbf16, #tpu.memory_space<vmem>>, %arg5: memref<1x32xf32, #tpu.memory_space<vmem>>, %arg6: memref<32x64xbf16, #tpu.memory_space<vmem>>, %arg7: memref<1x64xf32, #tpu.memory_space<vmem>>, %arg8: memref<768x64xbf16, #tpu.memory_space<vmem>>, %arg9: memref<1x64xf32, #tpu.memory_space<vmem>>, %arg10: memref<2x32xf32, #tpu.memory_space<vmem>>, %arg11: memref<1x32xf32, #tpu.memory_space<vmem>>, %arg12: memref<32x256xbf16, #tpu.memory_space<vmem>>, %arg13: memref<64x256xbf16, #tpu.memory_space<vmem>>, %arg14: memref<1x256xf32, #tpu.memory_space<vmem>>, %arg15: memref<2x64xf32, #tpu.memory_space<vmem>>, %arg16: memref<1x2xf32, #tpu.memory_space<vmem>>, %arg17: memref<2x2x8xf32, #tpu.memory_space<vmem>>) attributes {dimension_semantics = [#tpu.dimension_semantics<parallel>], iteration_bounds = array<i64: 1>, scalar_prefetch = 0 : i64, scratch_operands = 0 : i64, tpu.core_type = #tpu.core_type<tc>, window_params = [{transform_indices = @transform_0, window_bounds = array<i64: 2, 256, 144>}, {transform_indices = @transform_1, window_bounds = array<i64: 2, 2>}, {transform_indices = @transform_2, window_bounds = array<i64: 2, 768>}, {pipeline_mode = #tpu.pipeline_mode<synchronous>, transform_indices = @transform_3, window_bounds = array<i64: 144, 32>}, {pipeline_mode = #tpu.pipeline_mode<synchronous>, transform_indices = @transform_4, window_bounds = array<i64: 1, 32>}, {pipeline_mode = #tpu.pipeline_mode<synchronous>, transform_indices = @transform_5, window_bounds = array<i64: 32, 64>}, {pipeline_mode = #tpu.pipeline_mode<synchronous>, transform_indices = @transform_6, window_bounds = array<i64: 1, 64>}, {pipeline_mode = #tpu.pipeline_mode<synchronous>, transform_indices = @transform_7, window_bounds = array<i64: 768, 64>}, {pipeline_mode = #tpu.pipeline_mode<synchronous>, transform_indices = @transform_8, window_bounds = array<i64: 1, 64>}, {pipeline_mode = #tpu.pipeline_mode<synchronous>, transform_indices = @transform_9, window_bounds = array<i64: 2, 32>}, {pipeline_mode = #tpu.pipeline_mode<synchronous>, transform_indices = @transform_10, window_bounds = array<i64: 1, 32>}, {pipeline_mode = #tpu.pipeline_mode<synchronous>, transform_indices = @transform_11, window_bounds = array<i64: 32, 256>}, {pipeline_mode = #tpu.pipeline_mode<synchronous>, transform_indices = @transform_12, window_bounds = array<i64: 64, 256>}, {pipeline_mode = #tpu.pipeline_mode<synchronous>, transform_indices = @transform_13, window_bounds = array<i64: 1, 256>}, {pipeline_mode = #tpu.pipeline_mode<synchronous>, transform_indices = @transform_14, window_bounds = array<i64: 2, 64>}, {pipeline_mode = #tpu.pipeline_mode<synchronous>, transform_indices = @transform_15, window_bounds = array<i64: 1, 2>}, {transform_indices = @transform_16, window_bounds = array<i64: 2, 2, 8>}]} {
    %c0 = arith.constant 0 : index
    %c0_0 = arith.constant 0 : index
    %c0_1 = arith.constant 0 : index
    %0 = vector.load %arg1[%c0, %c0_0, %c0_1] : memref<2x256x144xbf16, #tpu.memory_space<vmem>>, vector<2x256x144xbf16>
    %1 = vector.shape_cast %0 : vector<2x256x144xbf16> to vector<512x144xbf16>
    %c0_2 = arith.constant 0 : index
    %c0_3 = arith.constant 0 : index
    %2 = vector.load %arg4[%c0_2, %c0_3] : memref<144x32xbf16, #tpu.memory_space<vmem>>, vector<144x32xbf16>
    %cst = arith.constant dense<0.000000e+00> : vector<512x32xf32>
    %3 = tpu.matmul %1, %2, %cst {dimension_numbers = #tpu.dot_dimension_numbers<[1], [0], [0], [1], [0, 0, 1, 1], [], []>} : vector<512x144xbf16>, vector<144x32xbf16>, vector<512x32xf32> -> vector<512x32xf32>
    %c0_4 = arith.constant 0 : index
    %c0_5 = arith.constant 0 : index
    %4 = vector.load %arg5[%c0_4, %c0_5] : memref<1x32xf32, #tpu.memory_space<vmem>>, vector<1x32xf32>
    %5 = vector.broadcast %4 : vector<1x32xf32> to vector<512x32xf32>
    %6 = arith.addf %3, %5 : vector<512x32xf32>
    %cst_6 = arith.constant 0.000000e+00 : f32
    %7 = vector.broadcast %cst_6 : f32 to vector<512x32xf32>
    %8 = arith.maximumf %6, %7 : vector<512x32xf32>
    %9 = vector.shape_cast %8 : vector<512x32xf32> to vector<2x256x32xf32>
    %cst_7 = arith.constant dense<0.000000e+00> : vector<2x32xf32>
    %10 = vector.multi_reduction <add>, %9, %cst_7 [1] : vector<2x256x32xf32> to vector<2x32xf32>
    %cst_8 = arith.constant 2.560000e+02 : f32
    %11 = vector.broadcast %cst_8 : f32 to vector<2x32xf32>
    %12 = arith.divf %10, %11 : vector<2x32xf32>
    %13 = arith.truncf %12 : vector<2x32xf32> to vector<2x32xbf16>
    %c0_9 = arith.constant 0 : index
    %c0_10 = arith.constant 0 : index
    %14 = vector.load %arg6[%c0_9, %c0_10] : memref<32x64xbf16, #tpu.memory_space<vmem>>, vector<32x64xbf16>
    %cst_11 = arith.constant dense<0.000000e+00> : vector<2x64xf32>
    %15 = tpu.matmul %13, %14, %cst_11 {dimension_numbers = #tpu.dot_dimension_numbers<[1], [0], [0], [1], [0, 0, 1, 1], [], []>} : vector<2x32xbf16>, vector<32x64xbf16>, vector<2x64xf32> -> vector<2x64xf32>
    %c0_12 = arith.constant 0 : index
    %c0_13 = arith.constant 0 : index
    %16 = vector.load %arg7[%c0_12, %c0_13] : memref<1x64xf32, #tpu.memory_space<vmem>>, vector<1x64xf32>
    %17 = vector.broadcast %16 : vector<1x64xf32> to vector<2x64xf32>
    %18 = arith.addf %15, %17 : vector<2x64xf32>
    %c0_14 = arith.constant 0 : index
    %c0_15 = arith.constant 0 : index
    %19 = vector.load %arg3[%c0_14, %c0_15] : memref<2x768xbf16, #tpu.memory_space<vmem>>, vector<2x768xbf16>
    %c0_16 = arith.constant 0 : index
    %c0_17 = arith.constant 0 : index
    %20 = vector.load %arg8[%c0_16, %c0_17] : memref<768x64xbf16, #tpu.memory_space<vmem>>, vector<768x64xbf16>
    %cst_18 = arith.constant dense<0.000000e+00> : vector<2x64xf32>
    %21 = tpu.matmul %19, %20, %cst_18 {dimension_numbers = #tpu.dot_dimension_numbers<[1], [0], [0], [1], [0, 0, 1, 1], [], []>} : vector<2x768xbf16>, vector<768x64xbf16>, vector<2x64xf32> -> vector<2x64xf32>
    %c0_19 = arith.constant 0 : index
    %c0_20 = arith.constant 0 : index
    %22 = vector.load %arg9[%c0_19, %c0_20] : memref<1x64xf32, #tpu.memory_space<vmem>>, vector<1x64xf32>
    %23 = vector.broadcast %22 : vector<1x64xf32> to vector<2x64xf32>
    %24 = arith.addf %21, %23 : vector<2x64xf32>
    %c0_21 = arith.constant 0 : index
    %c0_22 = arith.constant 0 : index
    %25 = vector.load %arg10[%c0_21, %c0_22] : memref<2x32xf32, #tpu.memory_space<vmem>>, vector<2x32xf32>
    %26 = vector.extract_strided_slice %25 {offsets = [0, 0], sizes = [1, 32], strides = [1, 1]} : vector<2x32xf32> to vector<1x32xf32>
    %27 = vector.extract_strided_slice %25 {offsets = [1, 0], sizes = [1, 32], strides = [1, 1]} : vector<2x32xf32> to vector<1x32xf32>
    %c0_23 = arith.constant 0 : index
    %c0_24 = arith.constant 0 : index
    %28 = vector.load %arg11[%c0_23, %c0_24] : memref<1x32xf32, #tpu.memory_space<vmem>>, vector<1x32xf32>
    %c0_25 = arith.constant 0 : index
    %c0_26 = arith.constant 0 : index
    %29 = vector.load %arg12[%c0_25, %c0_26] : memref<32x256xbf16, #tpu.memory_space<vmem>>, vector<32x256xbf16>
    %c0_27 = arith.constant 0 : index
    %c0_28 = arith.constant 0 : index
    %30 = vector.load %arg13[%c0_27, %c0_28] : memref<64x256xbf16, #tpu.memory_space<vmem>>, vector<64x256xbf16>
    %c0_29 = arith.constant 0 : index
    %c0_30 = arith.constant 0 : index
    %31 = vector.load %arg14[%c0_29, %c0_30] : memref<1x256xf32, #tpu.memory_space<vmem>>, vector<1x256xf32>
    %c0_31 = arith.constant 0 : index
    %c0_32 = arith.constant 0 : index
    %32 = vector.load %arg15[%c0_31, %c0_32] : memref<2x64xf32, #tpu.memory_space<vmem>>, vector<2x64xf32>
    %33 = vector.extract_strided_slice %32 {offsets = [0, 0], sizes = [1, 64], strides = [1, 1]} : vector<2x64xf32> to vector<1x64xf32>
    %34 = vector.extract_strided_slice %32 {offsets = [1, 0], sizes = [1, 64], strides = [1, 1]} : vector<2x64xf32> to vector<1x64xf32>
    %c0_33 = arith.constant 0 : index
    %c0_34 = arith.constant 0 : index
    %35 = vector.load %arg16[%c0_33, %c0_34] : memref<1x2xf32, #tpu.memory_space<vmem>>, vector<1x2xf32>
    %36 = vector.extract_strided_slice %35 {offsets = [0, 0], sizes = [1, 1], strides = [1, 1]} : vector<1x2xf32> to vector<1x1xf32>
    %37 = vector.extract_strided_slice %35 {offsets = [0, 1], sizes = [1, 1], strides = [1, 1]} : vector<1x2xf32> to vector<1x1xf32>
    %c0_35 = arith.constant 0 : index
    %c0_36 = arith.constant 0 : index
    %38 = vector.load %arg2[%c0_35, %c0_36] : memref<2x2xf32, #tpu.memory_space<vmem>>, vector<2x2xf32>
    %39 = vector.extract_strided_slice %38 {offsets = [0, 0], sizes = [2, 1], strides = [1, 1]} : vector<2x2xf32> to vector<2x1xf32>
    %40 = vector.extract_strided_slice %38 {offsets = [0, 1], sizes = [2, 1], strides = [1, 1]} : vector<2x2xf32> to vector<2x1xf32>
    %41 = tpu.iota {dimensions = array<i32: 1>} : vector<2x8xi32>
    %cst_37 = arith.constant 0.000000e+00 : f32
    %42 = vector.broadcast %cst_37 : f32 to vector<2x8xf32>
    %cst_38 = arith.constant 0.000000e+00 : f32
    %43 = vector.broadcast %cst_38 : f32 to vector<2x8xf32>
    %44 = vector.broadcast %39 : vector<2x1xf32> to vector<2x32xf32>
    %45 = vector.broadcast %26 : vector<1x32xf32> to vector<2x32xf32>
    %46 = arith.mulf %44, %45 : vector<2x32xf32>
    %47 = vector.broadcast %40 : vector<2x1xf32> to vector<2x32xf32>
    %48 = vector.broadcast %27 : vector<1x32xf32> to vector<2x32xf32>
    %49 = arith.mulf %47, %48 : vector<2x32xf32>
    %50 = arith.addf %46, %49 : vector<2x32xf32>
    %51 = vector.broadcast %28 : vector<1x32xf32> to vector<2x32xf32>
    %52 = arith.addf %50, %51 : vector<2x32xf32>
    %cst_39 = arith.constant 0.000000e+00 : f32
    %53 = vector.broadcast %cst_39 : f32 to vector<2x32xf32>
    %54 = arith.maximumf %52, %53 : vector<2x32xf32>
    %55 = arith.truncf %54 : vector<2x32xf32> to vector<2x32xbf16>
    %cst_40 = arith.constant dense<0.000000e+00> : vector<2x256xf32>
    %56 = tpu.matmul %55, %29, %cst_40 {dimension_numbers = #tpu.dot_dimension_numbers<[1], [0], [0], [1], [0, 0, 1, 1], [], []>} : vector<2x32xbf16>, vector<32x256xbf16>, vector<2x256xf32> -> vector<2x256xf32>
    %57 = arith.truncf %18 : vector<2x64xf32> to vector<2x64xbf16>
    %cst_41 = arith.constant dense<0.000000e+00> : vector<2x256xf32>
    %58 = tpu.matmul %57, %30, %cst_41 {dimension_numbers = #tpu.dot_dimension_numbers<[1], [0], [0], [1], [0, 0, 1, 1], [], []>} : vector<2x64xbf16>, vector<64x256xbf16>, vector<2x256xf32> -> vector<2x256xf32>
    %59 = arith.addf %56, %58 : vector<2x256xf32>
    %60 = vector.broadcast %31 : vector<1x256xf32> to vector<2x256xf32>
    %61 = arith.addf %59, %60 : vector<2x256xf32>
    %62 = vector.extract_strided_slice %61 {offsets = [0, 0], sizes = [2, 64], strides = [1, 1]} : vector<2x256xf32> to vector<2x64xf32>
    %63 = arith.negf %62 : vector<2x64xf32>
    %64 = math.exp %63 : vector<2x64xf32>
    %cst_42 = arith.constant 1.000000e+00 : f32
    %65 = vector.broadcast %cst_42 : f32 to vector<2x64xf32>
    %66 = arith.addf %65, %64 : vector<2x64xf32>
    %67 = arith.divf %65, %66 : vector<2x64xf32>
    %68 = vector.extract_strided_slice %61 {offsets = [0, 64], sizes = [2, 64], strides = [1, 1]} : vector<2x256xf32> to vector<2x64xf32>
    %69 = arith.negf %68 : vector<2x64xf32>
    %70 = math.exp %69 : vector<2x64xf32>
    %cst_43 = arith.constant 1.000000e+00 : f32
    %71 = vector.broadcast %cst_43 : f32 to vector<2x64xf32>
    %72 = arith.addf %71, %70 : vector<2x64xf32>
    %73 = arith.divf %71, %72 : vector<2x64xf32>
    %74 = vector.extract_strided_slice %61 {offsets = [0, 128], sizes = [2, 64], strides = [1, 1]} : vector<2x256xf32> to vector<2x64xf32>
    %75 = math.tanh %74 : vector<2x64xf32>
    %76 = vector.extract_strided_slice %61 {offsets = [0, 192], sizes = [2, 64], strides = [1, 1]} : vector<2x256xf32> to vector<2x64xf32>
    %77 = arith.negf %76 : vector<2x64xf32>
    %78 = math.exp %77 : vector<2x64xf32>
    %cst_44 = arith.constant 1.000000e+00 : f32
    %79 = vector.broadcast %cst_44 : f32 to vector<2x64xf32>
    %80 = arith.addf %79, %78 : vector<2x64xf32>
    %81 = arith.divf %79, %80 : vector<2x64xf32>
    %82 = arith.mulf %73, %24 : vector<2x64xf32>
    %83 = arith.mulf %67, %75 : vector<2x64xf32>
    %84 = arith.addf %82, %83 : vector<2x64xf32>
    %85 = math.tanh %84 : vector<2x64xf32>
    %86 = arith.mulf %81, %85 : vector<2x64xf32>
    %87 = vector.broadcast %33 : vector<1x64xf32> to vector<2x64xf32>
    %88 = arith.mulf %86, %87 : vector<2x64xf32>
    %cst_45 = arith.constant dense<0.000000e+00> : vector<2xf32>
    %89 = vector.multi_reduction <add>, %88, %cst_45 [1] : vector<2x64xf32> to vector<2xf32>
    %90 = vector.shape_cast %89 : vector<2xf32> to vector<2x1xf32>
    %91 = vector.broadcast %36 : vector<1x1xf32> to vector<2x1xf32>
    %92 = arith.addf %90, %91 : vector<2x1xf32>
    %93 = vector.broadcast %34 : vector<1x64xf32> to vector<2x64xf32>
    %94 = arith.mulf %86, %93 : vector<2x64xf32>
    %cst_46 = arith.constant dense<0.000000e+00> : vector<2xf32>
    %95 = vector.multi_reduction <add>, %94, %cst_46 [1] : vector<2x64xf32> to vector<2xf32>
    %96 = vector.shape_cast %95 : vector<2xf32> to vector<2x1xf32>
    %97 = vector.broadcast %37 : vector<1x1xf32> to vector<2x1xf32>
    %98 = arith.addf %96, %97 : vector<2x1xf32>
    %c0_i32 = arith.constant 0 : i32
    %99 = vector.broadcast %c0_i32 : i32 to vector<2x8xi32>
    %100 = arith.cmpi eq, %41, %99 : vector<2x8xi32>
    %101 = vector.shape_cast %92 : vector<2x1xf32> to vector<2x1xf32>
    %102 = vector.broadcast %101 : vector<2x1xf32> to vector<2x8xf32>
    %103 = arith.select %100, %102, %42 : vector<2x8xi1>, vector<2x8xf32>
    %c0_i32_47 = arith.constant 0 : i32
    %104 = vector.broadcast %c0_i32_47 : i32 to vector<2x8xi32>
    %105 = arith.cmpi eq, %41, %104 : vector<2x8xi32>
    %106 = vector.shape_cast %98 : vector<2x1xf32> to vector<2x1xf32>
    %107 = vector.broadcast %106 : vector<2x1xf32> to vector<2x8xf32>
    %108 = arith.select %105, %107, %43 : vector<2x8xi1>, vector<2x8xf32>
    %109 = vector.broadcast %92 : vector<2x1xf32> to vector<2x32xf32>
    %110 = vector.broadcast %26 : vector<1x32xf32> to vector<2x32xf32>
    %111 = arith.mulf %109, %110 : vector<2x32xf32>
    %112 = vector.broadcast %98 : vector<2x1xf32> to vector<2x32xf32>
    %113 = vector.broadcast %27 : vector<1x32xf32> to vector<2x32xf32>
    %114 = arith.mulf %112, %113 : vector<2x32xf32>
    %115 = arith.addf %111, %114 : vector<2x32xf32>
    %116 = vector.broadcast %28 : vector<1x32xf32> to vector<2x32xf32>
    %117 = arith.addf %115, %116 : vector<2x32xf32>
    %cst_48 = arith.constant 0.000000e+00 : f32
    %118 = vector.broadcast %cst_48 : f32 to vector<2x32xf32>
    %119 = arith.maximumf %117, %118 : vector<2x32xf32>
    %120 = arith.truncf %119 : vector<2x32xf32> to vector<2x32xbf16>
    %cst_49 = arith.constant dense<0.000000e+00> : vector<2x256xf32>
    %121 = tpu.matmul %120, %29, %cst_49 {dimension_numbers = #tpu.dot_dimension_numbers<[1], [0], [0], [1], [0, 0, 1, 1], [], []>} : vector<2x32xbf16>, vector<32x256xbf16>, vector<2x256xf32> -> vector<2x256xf32>
    %122 = arith.truncf %86 : vector<2x64xf32> to vector<2x64xbf16>
    %cst_50 = arith.constant dense<0.000000e+00> : vector<2x256xf32>
    %123 = tpu.matmul %122, %30, %cst_50 {dimension_numbers = #tpu.dot_dimension_numbers<[1], [0], [0], [1], [0, 0, 1, 1], [], []>} : vector<2x64xbf16>, vector<64x256xbf16>, vector<2x256xf32> -> vector<2x256xf32>
    %124 = arith.addf %121, %123 : vector<2x256xf32>
    %125 = vector.broadcast %31 : vector<1x256xf32> to vector<2x256xf32>
    %126 = arith.addf %124, %125 : vector<2x256xf32>
    %127 = vector.extract_strided_slice %126 {offsets = [0, 0], sizes = [2, 64], strides = [1, 1]} : vector<2x256xf32> to vector<2x64xf32>
    %128 = arith.negf %127 : vector<2x64xf32>
    %129 = math.exp %128 : vector<2x64xf32>
    %cst_51 = arith.constant 1.000000e+00 : f32
    %130 = vector.broadcast %cst_51 : f32 to vector<2x64xf32>
    %131 = arith.addf %130, %129 : vector<2x64xf32>
    %132 = arith.divf %130, %131 : vector<2x64xf32>
    %133 = vector.extract_strided_slice %126 {offsets = [0, 64], sizes = [2, 64], strides = [1, 1]} : vector<2x256xf32> to vector<2x64xf32>
    %134 = arith.negf %133 : vector<2x64xf32>
    %135 = math.exp %134 : vector<2x64xf32>
    %cst_52 = arith.constant 1.000000e+00 : f32
    %136 = vector.broadcast %cst_52 : f32 to vector<2x64xf32>
    %137 = arith.addf %136, %135 : vector<2x64xf32>
    %138 = arith.divf %136, %137 : vector<2x64xf32>
    %139 = vector.extract_strided_slice %126 {offsets = [0, 128], sizes = [2, 64], strides = [1, 1]} : vector<2x256xf32> to vector<2x64xf32>
    %140 = math.tanh %139 : vector<2x64xf32>
    %141 = vector.extract_strided_slice %126 {offsets = [0, 192], sizes = [2, 64], strides = [1, 1]} : vector<2x256xf32> to vector<2x64xf32>
    %142 = arith.negf %141 : vector<2x64xf32>
    %143 = math.exp %142 : vector<2x64xf32>
    %cst_53 = arith.constant 1.000000e+00 : f32
    %144 = vector.broadcast %cst_53 : f32 to vector<2x64xf32>
    %145 = arith.addf %144, %143 : vector<2x64xf32>
    %146 = arith.divf %144, %145 : vector<2x64xf32>
    %147 = arith.mulf %138, %84 : vector<2x64xf32>
    %148 = arith.mulf %132, %140 : vector<2x64xf32>
    %149 = arith.addf %147, %148 : vector<2x64xf32>
    %150 = math.tanh %149 : vector<2x64xf32>
    %151 = arith.mulf %146, %150 : vector<2x64xf32>
    %152 = vector.broadcast %33 : vector<1x64xf32> to vector<2x64xf32>
    %153 = arith.mulf %151, %152 : vector<2x64xf32>
    %cst_54 = arith.constant dense<0.000000e+00> : vector<2xf32>
    %154 = vector.multi_reduction <add>, %153, %cst_54 [1] : vector<2x64xf32> to vector<2xf32>
    %155 = vector.shape_cast %154 : vector<2xf32> to vector<2x1xf32>
    %156 = vector.broadcast %36 : vector<1x1xf32> to vector<2x1xf32>
    %157 = arith.addf %155, %156 : vector<2x1xf32>
    %158 = vector.broadcast %34 : vector<1x64xf32> to vector<2x64xf32>
    %159 = arith.mulf %151, %158 : vector<2x64xf32>
    %cst_55 = arith.constant dense<0.000000e+00> : vector<2xf32>
    %160 = vector.multi_reduction <add>, %159, %cst_55 [1] : vector<2x64xf32> to vector<2xf32>
    %161 = vector.shape_cast %160 : vector<2xf32> to vector<2x1xf32>
    %162 = vector.broadcast %37 : vector<1x1xf32> to vector<2x1xf32>
    %163 = arith.addf %161, %162 : vector<2x1xf32>
    %c1_i32 = arith.constant 1 : i32
    %164 = vector.broadcast %c1_i32 : i32 to vector<2x8xi32>
    %165 = arith.cmpi eq, %41, %164 : vector<2x8xi32>
    %166 = vector.shape_cast %157 : vector<2x1xf32> to vector<2x1xf32>
    %167 = vector.broadcast %166 : vector<2x1xf32> to vector<2x8xf32>
    %168 = arith.select %165, %167, %103 : vector<2x8xi1>, vector<2x8xf32>
    %c1_i32_56 = arith.constant 1 : i32
    %169 = vector.broadcast %c1_i32_56 : i32 to vector<2x8xi32>
    %170 = arith.cmpi eq, %41, %169 : vector<2x8xi32>
    %171 = vector.shape_cast %163 : vector<2x1xf32> to vector<2x1xf32>
    %172 = vector.broadcast %171 : vector<2x1xf32> to vector<2x8xf32>
    %173 = arith.select %170, %172, %108 : vector<2x8xi1>, vector<2x8xf32>
    %174 = vector.broadcast %157 : vector<2x1xf32> to vector<2x32xf32>
    %175 = vector.broadcast %26 : vector<1x32xf32> to vector<2x32xf32>
    %176 = arith.mulf %174, %175 : vector<2x32xf32>
    %177 = vector.broadcast %163 : vector<2x1xf32> to vector<2x32xf32>
    %178 = vector.broadcast %27 : vector<1x32xf32> to vector<2x32xf32>
    %179 = arith.mulf %177, %178 : vector<2x32xf32>
    %180 = arith.addf %176, %179 : vector<2x32xf32>
    %181 = vector.broadcast %28 : vector<1x32xf32> to vector<2x32xf32>
    %182 = arith.addf %180, %181 : vector<2x32xf32>
    %cst_57 = arith.constant 0.000000e+00 : f32
    %183 = vector.broadcast %cst_57 : f32 to vector<2x32xf32>
    %184 = arith.maximumf %182, %183 : vector<2x32xf32>
    %185 = arith.truncf %184 : vector<2x32xf32> to vector<2x32xbf16>
    %cst_58 = arith.constant dense<0.000000e+00> : vector<2x256xf32>
    %186 = tpu.matmul %185, %29, %cst_58 {dimension_numbers = #tpu.dot_dimension_numbers<[1], [0], [0], [1], [0, 0, 1, 1], [], []>} : vector<2x32xbf16>, vector<32x256xbf16>, vector<2x256xf32> -> vector<2x256xf32>
    %187 = arith.truncf %151 : vector<2x64xf32> to vector<2x64xbf16>
    %cst_59 = arith.constant dense<0.000000e+00> : vector<2x256xf32>
    %188 = tpu.matmul %187, %30, %cst_59 {dimension_numbers = #tpu.dot_dimension_numbers<[1], [0], [0], [1], [0, 0, 1, 1], [], []>} : vector<2x64xbf16>, vector<64x256xbf16>, vector<2x256xf32> -> vector<2x256xf32>
    %189 = arith.addf %186, %188 : vector<2x256xf32>
    %190 = vector.broadcast %31 : vector<1x256xf32> to vector<2x256xf32>
    %191 = arith.addf %189, %190 : vector<2x256xf32>
    %192 = vector.extract_strided_slice %191 {offsets = [0, 0], sizes = [2, 64], strides = [1, 1]} : vector<2x256xf32> to vector<2x64xf32>
    %193 = arith.negf %192 : vector<2x64xf32>
    %194 = math.exp %193 : vector<2x64xf32>
    %cst_60 = arith.constant 1.000000e+00 : f32
    %195 = vector.broadcast %cst_60 : f32 to vector<2x64xf32>
    %196 = arith.addf %195, %194 : vector<2x64xf32>
    %197 = arith.divf %195, %196 : vector<2x64xf32>
    %198 = vector.extract_strided_slice %191 {offsets = [0, 64], sizes = [2, 64], strides = [1, 1]} : vector<2x256xf32> to vector<2x64xf32>
    %199 = arith.negf %198 : vector<2x64xf32>
    %200 = math.exp %199 : vector<2x64xf32>
    %cst_61 = arith.constant 1.000000e+00 : f32
    %201 = vector.broadcast %cst_61 : f32 to vector<2x64xf32>
    %202 = arith.addf %201, %200 : vector<2x64xf32>
    %203 = arith.divf %201, %202 : vector<2x64xf32>
    %204 = vector.extract_strided_slice %191 {offsets = [0, 128], sizes = [2, 64], strides = [1, 1]} : vector<2x256xf32> to vector<2x64xf32>
    %205 = math.tanh %204 : vector<2x64xf32>
    %206 = vector.extract_strided_slice %191 {offsets = [0, 192], sizes = [2, 64], strides = [1, 1]} : vector<2x256xf32> to vector<2x64xf32>
    %207 = arith.negf %206 : vector<2x64xf32>
    %208 = math.exp %207 : vector<2x64xf32>
    %cst_62 = arith.constant 1.000000e+00 : f32
    %209 = vector.broadcast %cst_62 : f32 to vector<2x64xf32>
    %210 = arith.addf %209, %208 : vector<2x64xf32>
    %211 = arith.divf %209, %210 : vector<2x64xf32>
    %212 = arith.mulf %203, %149 : vector<2x64xf32>
    %213 = arith.mulf %197, %205 : vector<2x64xf32>
    %214 = arith.addf %212, %213 : vector<2x64xf32>
    %215 = math.tanh %214 : vector<2x64xf32>
    %216 = arith.mulf %211, %215 : vector<2x64xf32>
    %217 = vector.broadcast %33 : vector<1x64xf32> to vector<2x64xf32>
    %218 = arith.mulf %216, %217 : vector<2x64xf32>
    %cst_63 = arith.constant dense<0.000000e+00> : vector<2xf32>
    %219 = vector.multi_reduction <add>, %218, %cst_63 [1] : vector<2x64xf32> to vector<2xf32>
    %220 = vector.shape_cast %219 : vector<2xf32> to vector<2x1xf32>
    %221 = vector.broadcast %36 : vector<1x1xf32> to vector<2x1xf32>
    %222 = arith.addf %220, %221 : vector<2x1xf32>
    %223 = vector.broadcast %34 : vector<1x64xf32> to vector<2x64xf32>
    %224 = arith.mulf %216, %223 : vector<2x64xf32>
    %cst_64 = arith.constant dense<0.000000e+00> : vector<2xf32>
    %225 = vector.multi_reduction <add>, %224, %cst_64 [1] : vector<2x64xf32> to vector<2xf32>
    %226 = vector.shape_cast %225 : vector<2xf32> to vector<2x1xf32>
    %227 = vector.broadcast %37 : vector<1x1xf32> to vector<2x1xf32>
    %228 = arith.addf %226, %227 : vector<2x1xf32>
    %c2_i32 = arith.constant 2 : i32
    %229 = vector.broadcast %c2_i32 : i32 to vector<2x8xi32>
    %230 = arith.cmpi eq, %41, %229 : vector<2x8xi32>
    %231 = vector.shape_cast %222 : vector<2x1xf32> to vector<2x1xf32>
    %232 = vector.broadcast %231 : vector<2x1xf32> to vector<2x8xf32>
    %233 = arith.select %230, %232, %168 : vector<2x8xi1>, vector<2x8xf32>
    %c2_i32_65 = arith.constant 2 : i32
    %234 = vector.broadcast %c2_i32_65 : i32 to vector<2x8xi32>
    %235 = arith.cmpi eq, %41, %234 : vector<2x8xi32>
    %236 = vector.shape_cast %228 : vector<2x1xf32> to vector<2x1xf32>
    %237 = vector.broadcast %236 : vector<2x1xf32> to vector<2x8xf32>
    %238 = arith.select %235, %237, %173 : vector<2x8xi1>, vector<2x8xf32>
    %239 = vector.broadcast %222 : vector<2x1xf32> to vector<2x32xf32>
    %240 = vector.broadcast %26 : vector<1x32xf32> to vector<2x32xf32>
    %241 = arith.mulf %239, %240 : vector<2x32xf32>
    %242 = vector.broadcast %228 : vector<2x1xf32> to vector<2x32xf32>
    %243 = vector.broadcast %27 : vector<1x32xf32> to vector<2x32xf32>
    %244 = arith.mulf %242, %243 : vector<2x32xf32>
    %245 = arith.addf %241, %244 : vector<2x32xf32>
    %246 = vector.broadcast %28 : vector<1x32xf32> to vector<2x32xf32>
    %247 = arith.addf %245, %246 : vector<2x32xf32>
    %cst_66 = arith.constant 0.000000e+00 : f32
    %248 = vector.broadcast %cst_66 : f32 to vector<2x32xf32>
    %249 = arith.maximumf %247, %248 : vector<2x32xf32>
    %250 = arith.truncf %249 : vector<2x32xf32> to vector<2x32xbf16>
    %cst_67 = arith.constant dense<0.000000e+00> : vector<2x256xf32>
    %251 = tpu.matmul %250, %29, %cst_67 {dimension_numbers = #tpu.dot_dimension_numbers<[1], [0], [0], [1], [0, 0, 1, 1], [], []>} : vector<2x32xbf16>, vector<32x256xbf16>, vector<2x256xf32> -> vector<2x256xf32>
    %252 = arith.truncf %216 : vector<2x64xf32> to vector<2x64xbf16>
    %cst_68 = arith.constant dense<0.000000e+00> : vector<2x256xf32>
    %253 = tpu.matmul %252, %30, %cst_68 {dimension_numbers = #tpu.dot_dimension_numbers<[1], [0], [0], [1], [0, 0, 1, 1], [], []>} : vector<2x64xbf16>, vector<64x256xbf16>, vector<2x256xf32> -> vector<2x256xf32>
    %254 = arith.addf %251, %253 : vector<2x256xf32>
    %255 = vector.broadcast %31 : vector<1x256xf32> to vector<2x256xf32>
    %256 = arith.addf %254, %255 : vector<2x256xf32>
    %257 = vector.extract_strided_slice %256 {offsets = [0, 0], sizes = [2, 64], strides = [1, 1]} : vector<2x256xf32> to vector<2x64xf32>
    %258 = arith.negf %257 : vector<2x64xf32>
    %259 = math.exp %258 : vector<2x64xf32>
    %cst_69 = arith.constant 1.000000e+00 : f32
    %260 = vector.broadcast %cst_69 : f32 to vector<2x64xf32>
    %261 = arith.addf %260, %259 : vector<2x64xf32>
    %262 = arith.divf %260, %261 : vector<2x64xf32>
    %263 = vector.extract_strided_slice %256 {offsets = [0, 64], sizes = [2, 64], strides = [1, 1]} : vector<2x256xf32> to vector<2x64xf32>
    %264 = arith.negf %263 : vector<2x64xf32>
    %265 = math.exp %264 : vector<2x64xf32>
    %cst_70 = arith.constant 1.000000e+00 : f32
    %266 = vector.broadcast %cst_70 : f32 to vector<2x64xf32>
    %267 = arith.addf %266, %265 : vector<2x64xf32>
    %268 = arith.divf %266, %267 : vector<2x64xf32>
    %269 = vector.extract_strided_slice %256 {offsets = [0, 128], sizes = [2, 64], strides = [1, 1]} : vector<2x256xf32> to vector<2x64xf32>
    %270 = math.tanh %269 : vector<2x64xf32>
    %271 = vector.extract_strided_slice %256 {offsets = [0, 192], sizes = [2, 64], strides = [1, 1]} : vector<2x256xf32> to vector<2x64xf32>
    %272 = arith.negf %271 : vector<2x64xf32>
    %273 = math.exp %272 : vector<2x64xf32>
    %cst_71 = arith.constant 1.000000e+00 : f32
    %274 = vector.broadcast %cst_71 : f32 to vector<2x64xf32>
    %275 = arith.addf %274, %273 : vector<2x64xf32>
    %276 = arith.divf %274, %275 : vector<2x64xf32>
    %277 = arith.mulf %268, %214 : vector<2x64xf32>
    %278 = arith.mulf %262, %270 : vector<2x64xf32>
    %279 = arith.addf %277, %278 : vector<2x64xf32>
    %280 = math.tanh %279 : vector<2x64xf32>
    %281 = arith.mulf %276, %280 : vector<2x64xf32>
    %282 = vector.broadcast %33 : vector<1x64xf32> to vector<2x64xf32>
    %283 = arith.mulf %281, %282 : vector<2x64xf32>
    %cst_72 = arith.constant dense<0.000000e+00> : vector<2xf32>
    %284 = vector.multi_reduction <add>, %283, %cst_72 [1] : vector<2x64xf32> to vector<2xf32>
    %285 = vector.shape_cast %284 : vector<2xf32> to vector<2x1xf32>
    %286 = vector.broadcast %36 : vector<1x1xf32> to vector<2x1xf32>
    %287 = arith.addf %285, %286 : vector<2x1xf32>
    %288 = vector.broadcast %34 : vector<1x64xf32> to vector<2x64xf32>
    %289 = arith.mulf %281, %288 : vector<2x64xf32>
    %cst_73 = arith.constant dense<0.000000e+00> : vector<2xf32>
    %290 = vector.multi_reduction <add>, %289, %cst_73 [1] : vector<2x64xf32> to vector<2xf32>
    %291 = vector.shape_cast %290 : vector<2xf32> to vector<2x1xf32>
    %292 = vector.broadcast %37 : vector<1x1xf32> to vector<2x1xf32>
    %293 = arith.addf %291, %292 : vector<2x1xf32>
    %c3_i32 = arith.constant 3 : i32
    %294 = vector.broadcast %c3_i32 : i32 to vector<2x8xi32>
    %295 = arith.cmpi eq, %41, %294 : vector<2x8xi32>
    %296 = vector.shape_cast %287 : vector<2x1xf32> to vector<2x1xf32>
    %297 = vector.broadcast %296 : vector<2x1xf32> to vector<2x8xf32>
    %298 = arith.select %295, %297, %233 : vector<2x8xi1>, vector<2x8xf32>
    %c3_i32_74 = arith.constant 3 : i32
    %299 = vector.broadcast %c3_i32_74 : i32 to vector<2x8xi32>
    %300 = arith.cmpi eq, %41, %299 : vector<2x8xi32>
    %301 = vector.shape_cast %293 : vector<2x1xf32> to vector<2x1xf32>
    %302 = vector.broadcast %301 : vector<2x1xf32> to vector<2x8xf32>
    %303 = arith.select %300, %302, %238 : vector<2x8xi1>, vector<2x8xf32>
    %304 = vector.broadcast %287 : vector<2x1xf32> to vector<2x32xf32>
    %305 = vector.broadcast %26 : vector<1x32xf32> to vector<2x32xf32>
    %306 = arith.mulf %304, %305 : vector<2x32xf32>
    %307 = vector.broadcast %293 : vector<2x1xf32> to vector<2x32xf32>
    %308 = vector.broadcast %27 : vector<1x32xf32> to vector<2x32xf32>
    %309 = arith.mulf %307, %308 : vector<2x32xf32>
    %310 = arith.addf %306, %309 : vector<2x32xf32>
    %311 = vector.broadcast %28 : vector<1x32xf32> to vector<2x32xf32>
    %312 = arith.addf %310, %311 : vector<2x32xf32>
    %cst_75 = arith.constant 0.000000e+00 : f32
    %313 = vector.broadcast %cst_75 : f32 to vector<2x32xf32>
    %314 = arith.maximumf %312, %313 : vector<2x32xf32>
    %315 = arith.truncf %314 : vector<2x32xf32> to vector<2x32xbf16>
    %cst_76 = arith.constant dense<0.000000e+00> : vector<2x256xf32>
    %316 = tpu.matmul %315, %29, %cst_76 {dimension_numbers = #tpu.dot_dimension_numbers<[1], [0], [0], [1], [0, 0, 1, 1], [], []>} : vector<2x32xbf16>, vector<32x256xbf16>, vector<2x256xf32> -> vector<2x256xf32>
    %317 = arith.truncf %281 : vector<2x64xf32> to vector<2x64xbf16>
    %cst_77 = arith.constant dense<0.000000e+00> : vector<2x256xf32>
    %318 = tpu.matmul %317, %30, %cst_77 {dimension_numbers = #tpu.dot_dimension_numbers<[1], [0], [0], [1], [0, 0, 1, 1], [], []>} : vector<2x64xbf16>, vector<64x256xbf16>, vector<2x256xf32> -> vector<2x256xf32>
    %319 = arith.addf %316, %318 : vector<2x256xf32>
    %320 = vector.broadcast %31 : vector<1x256xf32> to vector<2x256xf32>
    %321 = arith.addf %319, %320 : vector<2x256xf32>
    %322 = vector.extract_strided_slice %321 {offsets = [0, 0], sizes = [2, 64], strides = [1, 1]} : vector<2x256xf32> to vector<2x64xf32>
    %323 = arith.negf %322 : vector<2x64xf32>
    %324 = math.exp %323 : vector<2x64xf32>
    %cst_78 = arith.constant 1.000000e+00 : f32
    %325 = vector.broadcast %cst_78 : f32 to vector<2x64xf32>
    %326 = arith.addf %325, %324 : vector<2x64xf32>
    %327 = arith.divf %325, %326 : vector<2x64xf32>
    %328 = vector.extract_strided_slice %321 {offsets = [0, 64], sizes = [2, 64], strides = [1, 1]} : vector<2x256xf32> to vector<2x64xf32>
    %329 = arith.negf %328 : vector<2x64xf32>
    %330 = math.exp %329 : vector<2x64xf32>
    %cst_79 = arith.constant 1.000000e+00 : f32
    %331 = vector.broadcast %cst_79 : f32 to vector<2x64xf32>
    %332 = arith.addf %331, %330 : vector<2x64xf32>
    %333 = arith.divf %331, %332 : vector<2x64xf32>
    %334 = vector.extract_strided_slice %321 {offsets = [0, 128], sizes = [2, 64], strides = [1, 1]} : vector<2x256xf32> to vector<2x64xf32>
    %335 = math.tanh %334 : vector<2x64xf32>
    %336 = vector.extract_strided_slice %321 {offsets = [0, 192], sizes = [2, 64], strides = [1, 1]} : vector<2x256xf32> to vector<2x64xf32>
    %337 = arith.negf %336 : vector<2x64xf32>
    %338 = math.exp %337 : vector<2x64xf32>
    %cst_80 = arith.constant 1.000000e+00 : f32
    %339 = vector.broadcast %cst_80 : f32 to vector<2x64xf32>
    %340 = arith.addf %339, %338 : vector<2x64xf32>
    %341 = arith.divf %339, %340 : vector<2x64xf32>
    %342 = arith.mulf %333, %279 : vector<2x64xf32>
    %343 = arith.mulf %327, %335 : vector<2x64xf32>
    %344 = arith.addf %342, %343 : vector<2x64xf32>
    %345 = math.tanh %344 : vector<2x64xf32>
    %346 = arith.mulf %341, %345 : vector<2x64xf32>
    %347 = vector.broadcast %33 : vector<1x64xf32> to vector<2x64xf32>
    %348 = arith.mulf %346, %347 : vector<2x64xf32>
    %cst_81 = arith.constant dense<0.000000e+00> : vector<2xf32>
    %349 = vector.multi_reduction <add>, %348, %cst_81 [1] : vector<2x64xf32> to vector<2xf32>
    %350 = vector.shape_cast %349 : vector<2xf32> to vector<2x1xf32>
    %351 = vector.broadcast %36 : vector<1x1xf32> to vector<2x1xf32>
    %352 = arith.addf %350, %351 : vector<2x1xf32>
    %353 = vector.broadcast %34 : vector<1x64xf32> to vector<2x64xf32>
    %354 = arith.mulf %346, %353 : vector<2x64xf32>
    %cst_82 = arith.constant dense<0.000000e+00> : vector<2xf32>
    %355 = vector.multi_reduction <add>, %354, %cst_82 [1] : vector<2x64xf32> to vector<2xf32>
    %356 = vector.shape_cast %355 : vector<2xf32> to vector<2x1xf32>
    %357 = vector.broadcast %37 : vector<1x1xf32> to vector<2x1xf32>
    %358 = arith.addf %356, %357 : vector<2x1xf32>
    %c4_i32 = arith.constant 4 : i32
    %359 = vector.broadcast %c4_i32 : i32 to vector<2x8xi32>
    %360 = arith.cmpi eq, %41, %359 : vector<2x8xi32>
    %361 = vector.shape_cast %352 : vector<2x1xf32> to vector<2x1xf32>
    %362 = vector.broadcast %361 : vector<2x1xf32> to vector<2x8xf32>
    %363 = arith.select %360, %362, %298 : vector<2x8xi1>, vector<2x8xf32>
    %c4_i32_83 = arith.constant 4 : i32
    %364 = vector.broadcast %c4_i32_83 : i32 to vector<2x8xi32>
    %365 = arith.cmpi eq, %41, %364 : vector<2x8xi32>
    %366 = vector.shape_cast %358 : vector<2x1xf32> to vector<2x1xf32>
    %367 = vector.broadcast %366 : vector<2x1xf32> to vector<2x8xf32>
    %368 = arith.select %365, %367, %303 : vector<2x8xi1>, vector<2x8xf32>
    %369 = vector.broadcast %352 : vector<2x1xf32> to vector<2x32xf32>
    %370 = vector.broadcast %26 : vector<1x32xf32> to vector<2x32xf32>
    %371 = arith.mulf %369, %370 : vector<2x32xf32>
    %372 = vector.broadcast %358 : vector<2x1xf32> to vector<2x32xf32>
    %373 = vector.broadcast %27 : vector<1x32xf32> to vector<2x32xf32>
    %374 = arith.mulf %372, %373 : vector<2x32xf32>
    %375 = arith.addf %371, %374 : vector<2x32xf32>
    %376 = vector.broadcast %28 : vector<1x32xf32> to vector<2x32xf32>
    %377 = arith.addf %375, %376 : vector<2x32xf32>
    %cst_84 = arith.constant 0.000000e+00 : f32
    %378 = vector.broadcast %cst_84 : f32 to vector<2x32xf32>
    %379 = arith.maximumf %377, %378 : vector<2x32xf32>
    %380 = arith.truncf %379 : vector<2x32xf32> to vector<2x32xbf16>
    %cst_85 = arith.constant dense<0.000000e+00> : vector<2x256xf32>
    %381 = tpu.matmul %380, %29, %cst_85 {dimension_numbers = #tpu.dot_dimension_numbers<[1], [0], [0], [1], [0, 0, 1, 1], [], []>} : vector<2x32xbf16>, vector<32x256xbf16>, vector<2x256xf32> -> vector<2x256xf32>
    %382 = arith.truncf %346 : vector<2x64xf32> to vector<2x64xbf16>
    %cst_86 = arith.constant dense<0.000000e+00> : vector<2x256xf32>
    %383 = tpu.matmul %382, %30, %cst_86 {dimension_numbers = #tpu.dot_dimension_numbers<[1], [0], [0], [1], [0, 0, 1, 1], [], []>} : vector<2x64xbf16>, vector<64x256xbf16>, vector<2x256xf32> -> vector<2x256xf32>
    %384 = arith.addf %381, %383 : vector<2x256xf32>
    %385 = vector.broadcast %31 : vector<1x256xf32> to vector<2x256xf32>
    %386 = arith.addf %384, %385 : vector<2x256xf32>
    %387 = vector.extract_strided_slice %386 {offsets = [0, 0], sizes = [2, 64], strides = [1, 1]} : vector<2x256xf32> to vector<2x64xf32>
    %388 = arith.negf %387 : vector<2x64xf32>
    %389 = math.exp %388 : vector<2x64xf32>
    %cst_87 = arith.constant 1.000000e+00 : f32
    %390 = vector.broadcast %cst_87 : f32 to vector<2x64xf32>
    %391 = arith.addf %390, %389 : vector<2x64xf32>
    %392 = arith.divf %390, %391 : vector<2x64xf32>
    %393 = vector.extract_strided_slice %386 {offsets = [0, 64], sizes = [2, 64], strides = [1, 1]} : vector<2x256xf32> to vector<2x64xf32>
    %394 = arith.negf %393 : vector<2x64xf32>
    %395 = math.exp %394 : vector<2x64xf32>
    %cst_88 = arith.constant 1.000000e+00 : f32
    %396 = vector.broadcast %cst_88 : f32 to vector<2x64xf32>
    %397 = arith.addf %396, %395 : vector<2x64xf32>
    %398 = arith.divf %396, %397 : vector<2x64xf32>
    %399 = vector.extract_strided_slice %386 {offsets = [0, 128], sizes = [2, 64], strides = [1, 1]} : vector<2x256xf32> to vector<2x64xf32>
    %400 = math.tanh %399 : vector<2x64xf32>
    %401 = vector.extract_strided_slice %386 {offsets = [0, 192], sizes = [2, 64], strides = [1, 1]} : vector<2x256xf32> to vector<2x64xf32>
    %402 = arith.negf %401 : vector<2x64xf32>
    %403 = math.exp %402 : vector<2x64xf32>
    %cst_89 = arith.constant 1.000000e+00 : f32
    %404 = vector.broadcast %cst_89 : f32 to vector<2x64xf32>
    %405 = arith.addf %404, %403 : vector<2x64xf32>
    %406 = arith.divf %404, %405 : vector<2x64xf32>
    %407 = arith.mulf %398, %344 : vector<2x64xf32>
    %408 = arith.mulf %392, %400 : vector<2x64xf32>
    %409 = arith.addf %407, %408 : vector<2x64xf32>
    %410 = math.tanh %409 : vector<2x64xf32>
    %411 = arith.mulf %406, %410 : vector<2x64xf32>
    %412 = vector.broadcast %33 : vector<1x64xf32> to vector<2x64xf32>
    %413 = arith.mulf %411, %412 : vector<2x64xf32>
    %cst_90 = arith.constant dense<0.000000e+00> : vector<2xf32>
    %414 = vector.multi_reduction <add>, %413, %cst_90 [1] : vector<2x64xf32> to vector<2xf32>
    %415 = vector.shape_cast %414 : vector<2xf32> to vector<2x1xf32>
    %416 = vector.broadcast %36 : vector<1x1xf32> to vector<2x1xf32>
    %417 = arith.addf %415, %416 : vector<2x1xf32>
    %418 = vector.broadcast %34 : vector<1x64xf32> to vector<2x64xf32>
    %419 = arith.mulf %411, %418 : vector<2x64xf32>
    %cst_91 = arith.constant dense<0.000000e+00> : vector<2xf32>
    %420 = vector.multi_reduction <add>, %419, %cst_91 [1] : vector<2x64xf32> to vector<2xf32>
    %421 = vector.shape_cast %420 : vector<2xf32> to vector<2x1xf32>
    %422 = vector.broadcast %37 : vector<1x1xf32> to vector<2x1xf32>
    %423 = arith.addf %421, %422 : vector<2x1xf32>
    %c5_i32 = arith.constant 5 : i32
    %424 = vector.broadcast %c5_i32 : i32 to vector<2x8xi32>
    %425 = arith.cmpi eq, %41, %424 : vector<2x8xi32>
    %426 = vector.shape_cast %417 : vector<2x1xf32> to vector<2x1xf32>
    %427 = vector.broadcast %426 : vector<2x1xf32> to vector<2x8xf32>
    %428 = arith.select %425, %427, %363 : vector<2x8xi1>, vector<2x8xf32>
    %c5_i32_92 = arith.constant 5 : i32
    %429 = vector.broadcast %c5_i32_92 : i32 to vector<2x8xi32>
    %430 = arith.cmpi eq, %41, %429 : vector<2x8xi32>
    %431 = vector.shape_cast %423 : vector<2x1xf32> to vector<2x1xf32>
    %432 = vector.broadcast %431 : vector<2x1xf32> to vector<2x8xf32>
    %433 = arith.select %430, %432, %368 : vector<2x8xi1>, vector<2x8xf32>
    %434 = vector.broadcast %417 : vector<2x1xf32> to vector<2x32xf32>
    %435 = vector.broadcast %26 : vector<1x32xf32> to vector<2x32xf32>
    %436 = arith.mulf %434, %435 : vector<2x32xf32>
    %437 = vector.broadcast %423 : vector<2x1xf32> to vector<2x32xf32>
    %438 = vector.broadcast %27 : vector<1x32xf32> to vector<2x32xf32>
    %439 = arith.mulf %437, %438 : vector<2x32xf32>
    %440 = arith.addf %436, %439 : vector<2x32xf32>
    %441 = vector.broadcast %28 : vector<1x32xf32> to vector<2x32xf32>
    %442 = arith.addf %440, %441 : vector<2x32xf32>
    %cst_93 = arith.constant 0.000000e+00 : f32
    %443 = vector.broadcast %cst_93 : f32 to vector<2x32xf32>
    %444 = arith.maximumf %442, %443 : vector<2x32xf32>
    %445 = arith.truncf %444 : vector<2x32xf32> to vector<2x32xbf16>
    %cst_94 = arith.constant dense<0.000000e+00> : vector<2x256xf32>
    %446 = tpu.matmul %445, %29, %cst_94 {dimension_numbers = #tpu.dot_dimension_numbers<[1], [0], [0], [1], [0, 0, 1, 1], [], []>} : vector<2x32xbf16>, vector<32x256xbf16>, vector<2x256xf32> -> vector<2x256xf32>
    %447 = arith.truncf %411 : vector<2x64xf32> to vector<2x64xbf16>
    %cst_95 = arith.constant dense<0.000000e+00> : vector<2x256xf32>
    %448 = tpu.matmul %447, %30, %cst_95 {dimension_numbers = #tpu.dot_dimension_numbers<[1], [0], [0], [1], [0, 0, 1, 1], [], []>} : vector<2x64xbf16>, vector<64x256xbf16>, vector<2x256xf32> -> vector<2x256xf32>
    %449 = arith.addf %446, %448 : vector<2x256xf32>
    %450 = vector.broadcast %31 : vector<1x256xf32> to vector<2x256xf32>
    %451 = arith.addf %449, %450 : vector<2x256xf32>
    %452 = vector.extract_strided_slice %451 {offsets = [0, 0], sizes = [2, 64], strides = [1, 1]} : vector<2x256xf32> to vector<2x64xf32>
    %453 = arith.negf %452 : vector<2x64xf32>
    %454 = math.exp %453 : vector<2x64xf32>
    %cst_96 = arith.constant 1.000000e+00 : f32
    %455 = vector.broadcast %cst_96 : f32 to vector<2x64xf32>
    %456 = arith.addf %455, %454 : vector<2x64xf32>
    %457 = arith.divf %455, %456 : vector<2x64xf32>
    %458 = vector.extract_strided_slice %451 {offsets = [0, 64], sizes = [2, 64], strides = [1, 1]} : vector<2x256xf32> to vector<2x64xf32>
    %459 = arith.negf %458 : vector<2x64xf32>
    %460 = math.exp %459 : vector<2x64xf32>
    %cst_97 = arith.constant 1.000000e+00 : f32
    %461 = vector.broadcast %cst_97 : f32 to vector<2x64xf32>
    %462 = arith.addf %461, %460 : vector<2x64xf32>
    %463 = arith.divf %461, %462 : vector<2x64xf32>
    %464 = vector.extract_strided_slice %451 {offsets = [0, 128], sizes = [2, 64], strides = [1, 1]} : vector<2x256xf32> to vector<2x64xf32>
    %465 = math.tanh %464 : vector<2x64xf32>
    %466 = vector.extract_strided_slice %451 {offsets = [0, 192], sizes = [2, 64], strides = [1, 1]} : vector<2x256xf32> to vector<2x64xf32>
    %467 = arith.negf %466 : vector<2x64xf32>
    %468 = math.exp %467 : vector<2x64xf32>
    %cst_98 = arith.constant 1.000000e+00 : f32
    %469 = vector.broadcast %cst_98 : f32 to vector<2x64xf32>
    %470 = arith.addf %469, %468 : vector<2x64xf32>
    %471 = arith.divf %469, %470 : vector<2x64xf32>
    %472 = arith.mulf %463, %409 : vector<2x64xf32>
    %473 = arith.mulf %457, %465 : vector<2x64xf32>
    %474 = arith.addf %472, %473 : vector<2x64xf32>
    %475 = math.tanh %474 : vector<2x64xf32>
    %476 = arith.mulf %471, %475 : vector<2x64xf32>
    %477 = vector.broadcast %33 : vector<1x64xf32> to vector<2x64xf32>
    %478 = arith.mulf %476, %477 : vector<2x64xf32>
    %cst_99 = arith.constant dense<0.000000e+00> : vector<2xf32>
    %479 = vector.multi_reduction <add>, %478, %cst_99 [1] : vector<2x64xf32> to vector<2xf32>
    %480 = vector.shape_cast %479 : vector<2xf32> to vector<2x1xf32>
    %481 = vector.broadcast %36 : vector<1x1xf32> to vector<2x1xf32>
    %482 = arith.addf %480, %481 : vector<2x1xf32>
    %483 = vector.broadcast %34 : vector<1x64xf32> to vector<2x64xf32>
    %484 = arith.mulf %476, %483 : vector<2x64xf32>
    %cst_100 = arith.constant dense<0.000000e+00> : vector<2xf32>
    %485 = vector.multi_reduction <add>, %484, %cst_100 [1] : vector<2x64xf32> to vector<2xf32>
    %486 = vector.shape_cast %485 : vector<2xf32> to vector<2x1xf32>
    %487 = vector.broadcast %37 : vector<1x1xf32> to vector<2x1xf32>
    %488 = arith.addf %486, %487 : vector<2x1xf32>
    %c6_i32 = arith.constant 6 : i32
    %489 = vector.broadcast %c6_i32 : i32 to vector<2x8xi32>
    %490 = arith.cmpi eq, %41, %489 : vector<2x8xi32>
    %491 = vector.shape_cast %482 : vector<2x1xf32> to vector<2x1xf32>
    %492 = vector.broadcast %491 : vector<2x1xf32> to vector<2x8xf32>
    %493 = arith.select %490, %492, %428 : vector<2x8xi1>, vector<2x8xf32>
    %c6_i32_101 = arith.constant 6 : i32
    %494 = vector.broadcast %c6_i32_101 : i32 to vector<2x8xi32>
    %495 = arith.cmpi eq, %41, %494 : vector<2x8xi32>
    %496 = vector.shape_cast %488 : vector<2x1xf32> to vector<2x1xf32>
    %497 = vector.broadcast %496 : vector<2x1xf32> to vector<2x8xf32>
    %498 = arith.select %495, %497, %433 : vector<2x8xi1>, vector<2x8xf32>
    %499 = vector.broadcast %482 : vector<2x1xf32> to vector<2x32xf32>
    %500 = vector.broadcast %26 : vector<1x32xf32> to vector<2x32xf32>
    %501 = arith.mulf %499, %500 : vector<2x32xf32>
    %502 = vector.broadcast %488 : vector<2x1xf32> to vector<2x32xf32>
    %503 = vector.broadcast %27 : vector<1x32xf32> to vector<2x32xf32>
    %504 = arith.mulf %502, %503 : vector<2x32xf32>
    %505 = arith.addf %501, %504 : vector<2x32xf32>
    %506 = vector.broadcast %28 : vector<1x32xf32> to vector<2x32xf32>
    %507 = arith.addf %505, %506 : vector<2x32xf32>
    %cst_102 = arith.constant 0.000000e+00 : f32
    %508 = vector.broadcast %cst_102 : f32 to vector<2x32xf32>
    %509 = arith.maximumf %507, %508 : vector<2x32xf32>
    %510 = arith.truncf %509 : vector<2x32xf32> to vector<2x32xbf16>
    %cst_103 = arith.constant dense<0.000000e+00> : vector<2x256xf32>
    %511 = tpu.matmul %510, %29, %cst_103 {dimension_numbers = #tpu.dot_dimension_numbers<[1], [0], [0], [1], [0, 0, 1, 1], [], []>} : vector<2x32xbf16>, vector<32x256xbf16>, vector<2x256xf32> -> vector<2x256xf32>
    %512 = arith.truncf %476 : vector<2x64xf32> to vector<2x64xbf16>
    %cst_104 = arith.constant dense<0.000000e+00> : vector<2x256xf32>
    %513 = tpu.matmul %512, %30, %cst_104 {dimension_numbers = #tpu.dot_dimension_numbers<[1], [0], [0], [1], [0, 0, 1, 1], [], []>} : vector<2x64xbf16>, vector<64x256xbf16>, vector<2x256xf32> -> vector<2x256xf32>
    %514 = arith.addf %511, %513 : vector<2x256xf32>
    %515 = vector.broadcast %31 : vector<1x256xf32> to vector<2x256xf32>
    %516 = arith.addf %514, %515 : vector<2x256xf32>
    %517 = vector.extract_strided_slice %516 {offsets = [0, 0], sizes = [2, 64], strides = [1, 1]} : vector<2x256xf32> to vector<2x64xf32>
    %518 = arith.negf %517 : vector<2x64xf32>
    %519 = math.exp %518 : vector<2x64xf32>
    %cst_105 = arith.constant 1.000000e+00 : f32
    %520 = vector.broadcast %cst_105 : f32 to vector<2x64xf32>
    %521 = arith.addf %520, %519 : vector<2x64xf32>
    %522 = arith.divf %520, %521 : vector<2x64xf32>
    %523 = vector.extract_strided_slice %516 {offsets = [0, 64], sizes = [2, 64], strides = [1, 1]} : vector<2x256xf32> to vector<2x64xf32>
    %524 = arith.negf %523 : vector<2x64xf32>
    %525 = math.exp %524 : vector<2x64xf32>
    %cst_106 = arith.constant 1.000000e+00 : f32
    %526 = vector.broadcast %cst_106 : f32 to vector<2x64xf32>
    %527 = arith.addf %526, %525 : vector<2x64xf32>
    %528 = arith.divf %526, %527 : vector<2x64xf32>
    %529 = vector.extract_strided_slice %516 {offsets = [0, 128], sizes = [2, 64], strides = [1, 1]} : vector<2x256xf32> to vector<2x64xf32>
    %530 = math.tanh %529 : vector<2x64xf32>
    %531 = vector.extract_strided_slice %516 {offsets = [0, 192], sizes = [2, 64], strides = [1, 1]} : vector<2x256xf32> to vector<2x64xf32>
    %532 = arith.negf %531 : vector<2x64xf32>
    %533 = math.exp %532 : vector<2x64xf32>
    %cst_107 = arith.constant 1.000000e+00 : f32
    %534 = vector.broadcast %cst_107 : f32 to vector<2x64xf32>
    %535 = arith.addf %534, %533 : vector<2x64xf32>
    %536 = arith.divf %534, %535 : vector<2x64xf32>
    %537 = arith.mulf %528, %474 : vector<2x64xf32>
    %538 = arith.mulf %522, %530 : vector<2x64xf32>
    %539 = arith.addf %537, %538 : vector<2x64xf32>
    %540 = math.tanh %539 : vector<2x64xf32>
    %541 = arith.mulf %536, %540 : vector<2x64xf32>
    %542 = vector.broadcast %33 : vector<1x64xf32> to vector<2x64xf32>
    %543 = arith.mulf %541, %542 : vector<2x64xf32>
    %cst_108 = arith.constant dense<0.000000e+00> : vector<2xf32>
    %544 = vector.multi_reduction <add>, %543, %cst_108 [1] : vector<2x64xf32> to vector<2xf32>
    %545 = vector.shape_cast %544 : vector<2xf32> to vector<2x1xf32>
    %546 = vector.broadcast %36 : vector<1x1xf32> to vector<2x1xf32>
    %547 = arith.addf %545, %546 : vector<2x1xf32>
    %548 = vector.broadcast %34 : vector<1x64xf32> to vector<2x64xf32>
    %549 = arith.mulf %541, %548 : vector<2x64xf32>
    %cst_109 = arith.constant dense<0.000000e+00> : vector<2xf32>
    %550 = vector.multi_reduction <add>, %549, %cst_109 [1] : vector<2x64xf32> to vector<2xf32>
    %551 = vector.shape_cast %550 : vector<2xf32> to vector<2x1xf32>
    %552 = vector.broadcast %37 : vector<1x1xf32> to vector<2x1xf32>
    %553 = arith.addf %551, %552 : vector<2x1xf32>
    %c7_i32 = arith.constant 7 : i32
    %554 = vector.broadcast %c7_i32 : i32 to vector<2x8xi32>
    %555 = arith.cmpi eq, %41, %554 : vector<2x8xi32>
    %556 = vector.shape_cast %547 : vector<2x1xf32> to vector<2x1xf32>
    %557 = vector.broadcast %556 : vector<2x1xf32> to vector<2x8xf32>
    %558 = arith.select %555, %557, %493 : vector<2x8xi1>, vector<2x8xf32>
    %c7_i32_110 = arith.constant 7 : i32
    %559 = vector.broadcast %c7_i32_110 : i32 to vector<2x8xi32>
    %560 = arith.cmpi eq, %41, %559 : vector<2x8xi32>
    %561 = vector.shape_cast %553 : vector<2x1xf32> to vector<2x1xf32>
    %562 = vector.broadcast %561 : vector<2x1xf32> to vector<2x8xf32>
    %563 = arith.select %560, %562, %498 : vector<2x8xi1>, vector<2x8xf32>
    %c0_111 = arith.constant 0 : index
    %c0_112 = arith.constant 0 : index
    %c0_113 = arith.constant 0 : index
    %564 = vector.load %arg17[%c0_111, %c0_112, %c0_113] : memref<2x2x8xf32, #tpu.memory_space<vmem>>, vector<1x2x8xf32>
    %565 = vector.shape_cast %564 : vector<1x2x8xf32> to vector<2x8xf32>
    %566 = vector.shape_cast %558 : vector<2x8xf32> to vector<1x2x8xf32>
    tpu.vector_store %arg17[%c0_111, %c0_112, %c0_113], %566 {strides = array<i32>} : memref<2x2x8xf32, #tpu.memory_space<vmem>>, vector<1x2x8xf32>,
    %c1 = arith.constant 1 : index
    %c0_114 = arith.constant 0 : index
    %c0_115 = arith.constant 0 : index
    %567 = vector.load %arg17[%c1, %c0_114, %c0_115] : memref<2x2x8xf32, #tpu.memory_space<vmem>>, vector<1x2x8xf32>
    %568 = vector.shape_cast %567 : vector<1x2x8xf32> to vector<2x8xf32>
    %569 = vector.shape_cast %563 : vector<2x8xf32> to vector<1x2x8xf32>
    tpu.vector_store %arg17[%c1, %c0_114, %c0_115], %569 {strides = array<i32>} : memref<2x2x8xf32, #tpu.memory_space<vmem>>, vector<1x2x8xf32>,
    return
  }
  func.func @transform_0(%arg0: i32) -> (i32, i32, i32) {
    %c0_i32 = arith.constant 0 : i32
    %c0_i32_0 = arith.constant 0 : i32
    %c0_i32_1 = arith.constant 0 : i32
    return %arg0, %c0_i32, %c0_i32_0 : i32, i32, i32
  }
  func.func @transform_1(%arg0: i32) -> (i32, i32) {
    %c0_i32 = arith.constant 0 : i32
    %c0_i32_0 = arith.constant 0 : i32
    return %arg0, %c0_i32 : i32, i32
  }
  func.func @transform_2(%arg0: i32) -> (i32, i32) {
    %c0_i32 = arith.constant 0 : i32
    %c0_i32_0 = arith.constant 0 : i32
    return %arg0, %c0_i32 : i32, i32
  }
  func.func @transform_3(%arg0: i32) -> (i32, i32) {
    %c0_i32 = arith.constant 0 : i32
    %c0_i32_0 = arith.constant 0 : i32
    %c0_i32_1 = arith.constant 0 : i32
    return %c0_i32, %c0_i32_0 : i32, i32
  }
  func.func @transform_4(%arg0: i32) -> (i32, i32) {
    %c0_i32 = arith.constant 0 : i32
    %c0_i32_0 = arith.constant 0 : i32
    %c0_i32_1 = arith.constant 0 : i32
    return %c0_i32, %c0_i32_0 : i32, i32
  }
  func.func @transform_5(%arg0: i32) -> (i32, i32) {
    %c0_i32 = arith.constant 0 : i32
    %c0_i32_0 = arith.constant 0 : i32
    %c0_i32_1 = arith.constant 0 : i32
    return %c0_i32, %c0_i32_0 : i32, i32
  }
  func.func @transform_6(%arg0: i32) -> (i32, i32) {
    %c0_i32 = arith.constant 0 : i32
    %c0_i32_0 = arith.constant 0 : i32
    %c0_i32_1 = arith.constant 0 : i32
    return %c0_i32, %c0_i32_0 : i32, i32
  }
  func.func @transform_7(%arg0: i32) -> (i32, i32) {
    %c0_i32 = arith.constant 0 : i32
    %c0_i32_0 = arith.constant 0 : i32
    %c0_i32_1 = arith.constant 0 : i32
    return %c0_i32, %c0_i32_0 : i32, i32
  }
  func.func @transform_8(%arg0: i32) -> (i32, i32) {
    %c0_i32 = arith.constant 0 : i32
    %c0_i32_0 = arith.constant 0 : i32
    %c0_i32_1 = arith.constant 0 : i32
    return %c0_i32, %c0_i32_0 : i32, i32
  }
  func.func @transform_9(%arg0: i32) -> (i32, i32) {
    %c0_i32 = arith.constant 0 : i32
    %c0_i32_0 = arith.constant 0 : i32
    %c0_i32_1 = arith.constant 0 : i32
    return %c0_i32, %c0_i32_0 : i32, i32
  }
  func.func @transform_10(%arg0: i32) -> (i32, i32) {
    %c0_i32 = arith.constant 0 : i32
    %c0_i32_0 = arith.constant 0 : i32
    %c0_i32_1 = arith.constant 0 : i32
    return %c0_i32, %c0_i32_0 : i32, i32
  }
  func.func @transform_11(%arg0: i32) -> (i32, i32) {
    %c0_i32 = arith.constant 0 : i32
    %c0_i32_0 = arith.constant 0 : i32
    %c0_i32_1 = arith.constant 0 : i32
    return %c0_i32, %c0_i32_0 : i32, i32
  }
  func.func @transform_12(%arg0: i32) -> (i32, i32) {
    %c0_i32 = arith.constant 0 : i32
    %c0_i32_0 = arith.constant 0 : i32
    %c0_i32_1 = arith.constant 0 : i32
    return %c0_i32, %c0_i32_0 : i32, i32
  }
  func.func @transform_13(%arg0: i32) -> (i32, i32) {
    %c0_i32 = arith.constant 0 : i32
    %c0_i32_0 = arith.constant 0 : i32
    %c0_i32_1 = arith.constant 0 : i32
    return %c0_i32, %c0_i32_0 : i32, i32
  }
  func.func @transform_14(%arg0: i32) -> (i32, i32) {
    %c0_i32 = arith.constant 0 : i32
    %c0_i32_0 = arith.constant 0 : i32
    %c0_i32_1 = arith.constant 0 : i32
    return %c0_i32, %c0_i32_0 : i32, i32
  }
  func.func @transform_15(%arg0: i32) -> (i32, i32) {
    %c0_i32 = arith.constant 0 : i32
    %c0_i32_0 = arith.constant 0 : i32
    %c0_i32_1 = arith.constant 0 : i32
    return %c0_i32, %c0_i32_0 : i32, i32
  }
  func.func @transform_16(%arg0: i32) -> (i32, i32, i32) {
    %c0_i32 = arith.constant 0 : i32
    %c0_i32_0 = arith.constant 0 : i32
    %c0_i32_1 = arith.constant 0 : i32
    return %c0_i32, %arg0, %c0_i32_0 : i32, i32, i32
  }
}

</mosaic_0001>

<llo_original>
// kernel: lstm_model_forward.1
$region0: #{lstm_model_forward.1}
  #allocation0 [shape = 'u32[]', space=smem, size = 0x4, offset = 0x4, fixed_abs, tag = 'smem constant byte address 0x4 - core index']
  #allocation1 [shape = 'u32[72,128]{1,0:T(1,128)}', space=vmem, size = 0x9000, scoped, tag = 'internal scratch']
  %s0 = inlined_call_operand.vmem [shape: bf16[2,256,144], index: 0, kind: input, shape index: {}]
  %s1 = inlined_call_operand.vmem [shape: f32[2,2], index: 1, kind: input, shape index: {}]
  %s2 = inlined_call_operand.vmem [shape: bf16[2,768], index: 2, kind: input, shape index: {}]
  %s3 = inlined_call_operand.vmem [shape: bf16[144,32], index: 3, kind: input, shape index: {}]
  %s4 = inlined_call_operand.vmem [shape: f32[1,32], index: 4, kind: input, shape index: {}]
  %s5 = inlined_call_operand.vmem [shape: bf16[32,64], index: 5, kind: input, shape index: {}]
  %s6 = inlined_call_operand.vmem [shape: f32[1,64], index: 6, kind: input, shape index: {}]
  %s7 = inlined_call_operand.vmem [shape: bf16[768,64], index: 7, kind: input, shape index: {}]
  %s8 = inlined_call_operand.vmem [shape: f32[1,64], index: 8, kind: input, shape index: {}]
  %s9 = inlined_call_operand.vmem [shape: f32[2,32], index: 9, kind: input, shape index: {}]
  %s10 = inlined_call_operand.vmem [shape: f32[1,32], index: 10, kind: input, shape index: {}]
  %s11 = inlined_call_operand.vmem [shape: bf16[32,256], index: 11, kind: input, shape index: {}]
  %s12 = inlined_call_operand.vmem [shape: bf16[64,256], index: 12, kind: input, shape index: {}]
  %s13 = inlined_call_operand.vmem [shape: f32[1,256], index: 13, kind: input, shape index: {}]
  %s14 = inlined_call_operand.vmem [shape: f32[2,64], index: 14, kind: input, shape index: {}]
  %s15 = inlined_call_operand.vmem [shape: f32[1,2], index: 15, kind: input, shape index: {}]
  %s16 = inlined_call_operand.vmem [shape: f32[2,2,8], index: 16, kind: output, shape index: {}]
  %s17 = sld [smem:[#allocation0]]
  $region74: #{lstm_model_forward.1} parent=0
    _
  %s19 = ssub.s32 1, %s17
  %s20 = scalar_select 0, %s19, %s17
  // Predicated region
  $region2: #{lstm_model_forward.1} parent=0 // pred_check
    _
  $region3: #{lstm_model_forward.1} parent=0 // pred_check_branch
    %22 = sbr.rel (0) target = $region5
  $region4: #{lstm_model_forward.1} parent=0 // pred_region
    _
  $region5: #{lstm_model_forward.1} parent=0 // pred_fallthru
    _
  // Predicated region
  $region6: #{lstm_model_forward.1} parent=0 // pred_check
    _
  $region7: #{lstm_model_forward.1} parent=0 // pred_check_branch
    %24 = sbr.rel (0) target = $region9
  $region8: #{lstm_model_forward.1} parent=0 // pred_region
    _
  $region9: #{lstm_model_forward.1} parent=0 // pred_fallthru
    _
  // Predicated region
  $region10: #{lstm_model_forward.1} parent=0 // pred_check
    _
  $region11: #{lstm_model_forward.1} parent=0 // pred_check_branch
    %26 = sbr.rel (0) target = $region13
  $region12: #{lstm_model_forward.1} parent=0 // pred_region
    _
  $region13: #{lstm_model_forward.1} parent=0 // pred_fallthru
    _
  // Predicated region
  $region14: #{lstm_model_forward.1} parent=0 // pred_check
    _
  $region15: #{lstm_model_forward.1} parent=0 // pred_check_branch
    %28 = sbr.rel (0) target = $region17
  $region16: #{lstm_model_forward.1} parent=0 // pred_region
    _
  $region17: #{lstm_model_forward.1} parent=0 // pred_fallthru
    _
  // Predicated region
  $region18: #{lstm_model_forward.1} parent=0 // pred_check
    _
  $region19: #{lstm_model_forward.1} parent=0 // pred_check_branch
    %30 = sbr.rel (0) target = $region21
  $region20: #{lstm_model_forward.1} parent=0 // pred_region
    _
  $region21: #{lstm_model_forward.1} parent=0 // pred_fallthru
    _
  // Predicated region
  $region22: #{lstm_model_forward.1} parent=0 // pred_check
    _
  $region23: #{lstm_model_forward.1} parent=0 // pred_check_branch
    %32 = sbr.rel (0) target = $region25
  $region24: #{lstm_model_forward.1} parent=0 // pred_region
    _
  $region25: #{lstm_model_forward.1} parent=0 // pred_fallthru
    _
  // Predicated region
  $region26: #{lstm_model_forward.1} parent=0 // pred_check
    _
  $region27: #{lstm_model_forward.1} parent=0 // pred_check_branch
    %34 = sbr.rel (0) target = $region29
  $region28: #{lstm_model_forward.1} parent=0 // pred_region
    _
  $region29: #{lstm_model_forward.1} parent=0 // pred_fallthru
    _
  // Predicated region
  $region30: #{lstm_model_forward.1} parent=0 // pred_check
    _
  $region31: #{lstm_model_forward.1} parent=0 // pred_check_branch
    %36 = sbr.rel (0) target = $region33
  $region32: #{lstm_model_forward.1} parent=0 // pred_region
    _
  $region33: #{lstm_model_forward.1} parent=0 // pred_fallthru
    _
  // Predicated region
  $region34: #{lstm_model_forward.1} parent=0 // pred_check
    _
  $region35: #{lstm_model_forward.1} parent=0 // pred_check_branch
    %38 = sbr.rel (0) target = $region37
  $region36: #{lstm_model_forward.1} parent=0 // pred_region
    _
  $region37: #{lstm_model_forward.1} parent=0 // pred_fallthru
    _
  // Predicated region
  $region38: #{lstm_model_forward.1} parent=0 // pred_check
    _
  $region39: #{lstm_model_forward.1} parent=0 // pred_check_branch
    %40 = sbr.rel (0) target = $region41
  $region40: #{lstm_model_forward.1} parent=0 // pred_region
    _
  $region41: #{lstm_model_forward.1} parent=0 // pred_fallthru
    _
  // Predicated region
  $region42: #{lstm_model_forward.1} parent=0 // pred_check
    _
  $region43: #{lstm_model_forward.1} parent=0 // pred_check_branch
    %42 = sbr.rel (0) target = $region45
  $region44: #{lstm_model_forward.1} parent=0 // pred_region
    _
  $region45: #{lstm_model_forward.1} parent=0 // pred_fallthru
    _
  // Predicated region
  $region46: #{lstm_model_forward.1} parent=0 // pred_check
    _
  $region47: #{lstm_model_forward.1} parent=0 // pred_check_branch
    %44 = sbr.rel (0) target = $region49
  $region48: #{lstm_model_forward.1} parent=0 // pred_region
    _
  $region49: #{lstm_model_forward.1} parent=0 // pred_fallthru
    _
  // Predicated region
  $region50: #{lstm_model_forward.1} parent=0 // pred_check
    _
  $region51: #{lstm_model_forward.1} parent=0 // pred_check_branch
    %46 = sbr.rel (0) target = $region53
  $region52: #{lstm_model_forward.1} parent=0 // pred_region
    _
  $region53: #{lstm_model_forward.1} parent=0 // pred_fallthru
    _
  // Predicated region
  $region54: #{lstm_model_forward.1} parent=0 // pred_check
    _
  $region55: #{lstm_model_forward.1} parent=0 // pred_check_branch
    %48 = sbr.rel (0) target = $region57
  $region56: #{lstm_model_forward.1} parent=0 // pred_region
    _
  $region57: #{lstm_model_forward.1} parent=0 // pred_fallthru
    _
  // Predicated region
  $region58: #{lstm_model_forward.1} parent=0 // pred_check
    _
  $region59: #{lstm_model_forward.1} parent=0 // pred_check_branch
    %50 = sbr.rel (0) target = $region61
  $region60: #{lstm_model_forward.1} parent=0 // pred_region
    _
  $region61: #{lstm_model_forward.1} parent=0 // pred_fallthru
    _
  // Predicated region
  $region62: #{lstm_model_forward.1} parent=0 // pred_check
    _
  $region63: #{lstm_model_forward.1} parent=0 // pred_check_branch
    %52 = sbr.rel (0) target = $region65
  $region64: #{lstm_model_forward.1} parent=0 // pred_region
    _
  $region65: #{lstm_model_forward.1} parent=0 // pred_fallthru
    _
  %v54 = vld [vmem:[%s0] sm:$0xff]
  %v55 = vld [vmem:[%s0 + $0x8] sm:$0xff]
  %v56 = vld [vmem:[%s0 + $0x10] sm:$0xff]
  %v57 = vld [vmem:[%s0 + $0x18] sm:$0xff]
  %v58 = vld [vmem:[%s0 + $0x20] sm:$0xff]
  %v59 = vld [vmem:[%s0 + $0x28] sm:$0xff]
  %v60 = vld [vmem:[%s0 + $0x30] sm:$0xff]
  %v61 = vld [vmem:[%s0 + $0x38] sm:$0xff]
  %v62 = vld [vmem:[%s0 + $0x40] sm:$0xff]
  %v63 = vld [vmem:[%s0 + $0x48] sm:$0xff]
  %v64 = vld [vmem:[%s0 + $0x50] sm:$0xff]
  %v65 = vld [vmem:[%s0 + $0x58] sm:$0xff]
  %v66 = vld [vmem:[%s0 + $0x60] sm:$0xff]
  %v67 = vld [vmem:[%s0 + $0x68] sm:$0xff]
  %v68 = vld [vmem:[%s0 + $0x70] sm:$0xff]
  %v69 = vld [vmem:[%s0 + $0x78] sm:$0xff]
  %v70 = vld [vmem:[%s0 + $0x80] sm:$0xff]
  %v71 = vld [vmem:[%s0 + $0x88] sm:$0xff]
  %v72 = vld [vmem:[%s0 + $0x90] sm:$0xff]
  %v73 = vld [vmem:[%s0 + $0x98] sm:$0xff]
  %v74 = vld [vmem:[%s0 + $0xa0] sm:$0xff]
  %v75 = vld [vmem:[%s0 + $0xa8] sm:$0xff]
  %v76 = vld [vmem:[%s0 + $0xb0] sm:$0xff]
  %v77 = vld [vmem:[%s0 + $0xb8] sm:$0xff]
  %v78 = vld [vmem:[%s0 + $0xc0] sm:$0xff]
  %v79 = vld [vmem:[%s0 + $0xc8] sm:$0xff]
  %v80 = vld [vmem:[%s0 + $0xd0] sm:$0xff]
  %v81 = vld [vmem:[%s0 + $0xd8] sm:$0xff]
  %v82 = vld [vmem:[%s0 + $0xe0] sm:$0xff]
  %v83 = vld [vmem:[%s0 + $0xe8] sm:$0xff]
  %v84 = vld [vmem:[%s0 + $0xf0] sm:$0xff]
  %v85 = vld [vmem:[%s0 + $0xf8] sm:$0xff]
  %v86 = vld [vmem:[%s0 + $0x100] sm:$0xff]
  %v87 = vld [vmem:[%s0 + $0x108] sm:$0xff]
  %v88 = vld [vmem:[%s0 + $0x110] sm:$0xff]
  %v89 = vld [vmem:[%s0 + $0x118] sm:$0xff]
  %v90 = vld [vmem:[%s0 + $0x120] sm:$0xff]
  %v91 = vld [vmem:[%s0 + $0x128] sm:$0xff]
  %v92 = vld [vmem:[%s0 + $0x130] sm:$0xff]
  %v93 = vld [vmem:[%s0 + $0x138] sm:$0xff]
  %v94 = vld [vmem:[%s0 + $0x140] sm:$0xff]
  %v95 = vld [vmem:[%s0 + $0x148] sm:$0xff]
  %v96 = vld [vmem:[%s0 + $0x150] sm:$0xff]
  %v97 = vld [vmem:[%s0 + $0x158] sm:$0xff]
  %v98 = vld [vmem:[%s0 + $0x160] sm:$0xff]
  %v99 = vld [vmem:[%s0 + $0x168] sm:$0xff]
  %v100 = vld [vmem:[%s0 + $0x170] sm:$0xff]
  %v101 = vld [vmem:[%s0 + $0x178] sm:$0xff]
  %v102 = vld [vmem:[%s0 + $0x180] sm:$0xff]
  %v103 = vld [vmem:[%s0 + $0x188] sm:$0xff]
  %v104 = vld [vmem:[%s0 + $0x190] sm:$0xff]
  %v105 = vld [vmem:[%s0 + $0x198] sm:$0xff]
  %v106 = vld [vmem:[%s0 + $0x1a0] sm:$0xff]
  %v107 = vld [vmem:[%s0 + $0x1a8] sm:$0xff]
  %v108 = vld [vmem:[%s0 + $0x1b0] sm:$0xff]
  %v109 = vld [vmem:[%s0 + $0x1b8] sm:$0xff]
  %v110 = vld [vmem:[%s0 + $0x1c0] sm:$0xff]
  %v111 = vld [vmem:[%s0 + $0x1c8] sm:$0xff]
  %v112 = vld [vmem:[%s0 + $0x1d0] sm:$0xff]
  %v113 = vld [vmem:[%s0 + $0x1d8] sm:$0xff]
  %v114 = vld [vmem:[%s0 + $0x1e0] sm:$0xff]
  %v115 = vld [vmem:[%s0 + $0x1e8] sm:$0xff]
  %v116 = vld [vmem:[%s0 + $0x1f0] sm:$0xff]
  %v117 = vld [vmem:[%s0 + $0x1f8] sm:$0xff]
  %v118 = vld [vmem:[%s3] sm:$0xf]
  %v119 = vld [vmem:[%s3 + $0x4] sm:$0xf]
  %v120 = vld [vmem:[%s3 + $0x8] sm:$0xf]
  %v121 = vld [vmem:[%s3 + $0xc] sm:$0xf]
  %v122 = vld [vmem:[%s3 + $0x10] sm:$0xf]
  %v123 = vld [vmem:[%s3 + $0x14] sm:$0xf]
  %v124 = vld [vmem:[%s3 + $0x18] sm:$0xf]
  %v125 = vld [vmem:[%s3 + $0x1c] sm:$0xf]
  %v126 = vld [vmem:[%s3 + $0x20] sm:$0xf]
  %v127 = vld [vmem:[%s3 + $0x24] sm:$0xf]
  %v128 = vld [vmem:[%s3 + $0x28] sm:$0xf]
  %v129 = vld [vmem:[%s3 + $0x2c] sm:$0xf]
  %v130 = vld [vmem:[%s3 + $0x30] sm:$0xf]
  %v131 = vld [vmem:[%s3 + $0x34] sm:$0xf]
  %v132 = vld [vmem:[%s3 + $0x38] sm:$0xf]
  %v133 = vld [vmem:[%s3 + $0x3c] sm:$0xf]
  %v134 = vld [vmem:[%s3 + $0x40] sm:$0xf]
  %v135 = vld [vmem:[%s3 + $0x44] sm:$0xf]
  %v136 = vld [vmem:[%s4] sm:$0x1]
  %v138 = vperm.slane %v136, 0
  %v204 = vunpack.c.l.b16 %v54
  %v205 = vunpack.c.h.b16 %v54
  %v206 = vunpack.c.l.b16 %v55
  %v207 = vunpack.c.h.b16 %v55
  %v208 = vunpack.c.l.b16 %v56
  %v209 = vunpack.c.h.b16 %v56
  %v210 = vunpack.c.l.b16 %v57
  %v211 = vunpack.c.h.b16 %v57
  %v212 = vunpack.c.l.b16 %v58
  %v213 = vunpack.c.h.b16 %v58
  %v214 = vunpack.c.l.b16 %v59
  %v215 = vunpack.c.h.b16 %v59
  %v216 = vunpack.c.l.b16 %v60
  %v217 = vunpack.c.h.b16 %v60
  %v218 = vunpack.c.l.b16 %v61
  %v219 = vunpack.c.h.b16 %v61
  %v220 = vunpack.c.l.b16 %v62
  %v221 = vunpack.c.h.b16 %v62
  %v222 = vunpack.c.l.b16 %v63
  %v223 = vunpack.c.h.b16 %v63
  %v224 = vunpack.c.l.b16 %v64
  %v225 = vunpack.c.h.b16 %v64
  %v226 = vunpack.c.l.b16 %v65
  %v227 = vunpack.c.h.b16 %v65
  %v228 = vunpack.c.l.b16 %v66
  %v229 = vunpack.c.h.b16 %v66
  %v230 = vunpack.c.l.b16 %v67
  %v231 = vunpack.c.h.b16 %v67
  %v232 = vunpack.c.l.b16 %v68
  %v233 = vunpack.c.h.b16 %v68
  %v234 = vunpack.c.l.b16 %v69
  %v235 = vunpack.c.h.b16 %v69
  %v236 = vunpack.c.l.b16 %v70
  %v237 = vunpack.c.h.b16 %v70
  %v238 = vunpack.c.l.b16 %v71
  %v239 = vunpack.c.h.b16 %v71
  %v240 = vunpack.c.l.b16 %v72
  %v241 = vunpack.c.h.b16 %v72
  %v242 = vunpack.c.l.b16 %v73
  %v243 = vunpack.c.h.b16 %v73
  %v244 = vunpack.c.l.b16 %v74
  %v245 = vunpack.c.h.b16 %v74
  %v246 = vunpack.c.l.b16 %v75
  %v247 = vunpack.c.h.b16 %v75
  %v248 = vunpack.c.l.b16 %v76
  %v249 = vunpack.c.h.b16 %v76
  %v250 = vunpack.c.l.b16 %v77
  %v251 = vunpack.c.h.b16 %v77
  %v252 = vunpack.c.l.b16 %v78
  %v253 = vunpack.c.h.b16 %v78
  %v254 = vunpack.c.l.b16 %v79
  %v255 = vunpack.c.h.b16 %v79
  %v256 = vunpack.c.l.b16 %v80
  %v257 = vunpack.c.h.b16 %v80
  %v258 = vunpack.c.l.b16 %v81
  %v259 = vunpack.c.h.b16 %v81
  %v260 = vunpack.c.l.b16 %v82
  %v261 = vunpack.c.h.b16 %v82
  %v262 = vunpack.c.l.b16 %v83
  %v263 = vunpack.c.h.b16 %v83
  %v264 = vunpack.c.l.b16 %v84
  %v265 = vunpack.c.h.b16 %v84
  %v266 = vunpack.c.l.b16 %v85
  %v267 = vunpack.c.h.b16 %v85
  %v268 = vunpack.c.l.b16 %v86
  %v269 = vunpack.c.h.b16 %v86
  %v270 = vunpack.c.l.b16 %v87
  %v271 = vunpack.c.h.b16 %v87
  %v272 = vunpack.c.l.b16 %v88
  %v273 = vunpack.c.h.b16 %v88
  %v274 = vunpack.c.l.b16 %v89
  %v275 = vunpack.c.h.b16 %v89
  %v276 = vunpack.c.l.b16 %v90
  %v277 = vunpack.c.h.b16 %v90
  %v278 = vunpack.c.l.b16 %v91
  %v279 = vunpack.c.h.b16 %v91
  %v280 = vunpack.c.l.b16 %v92
  %v281 = vunpack.c.h.b16 %v92
  %v282 = vunpack.c.l.b16 %v93
  %v283 = vunpack.c.h.b16 %v93
  %v284 = vunpack.c.l.b16 %v94
  %v285 = vunpack.c.h.b16 %v94
  %v286 = vunpack.c.l.b16 %v95
  %v287 = vunpack.c.h.b16 %v95
  %v288 = vunpack.c.l.b16 %v96
  %v289 = vunpack.c.h.b16 %v96
  %v290 = vunpack.c.l.b16 %v97
  %v291 = vunpack.c.h.b16 %v97
  %v292 = vunpack.c.l.b16 %v98
  %v293 = vunpack.c.h.b16 %v98
  %v294 = vunpack.c.l.b16 %v99
  %v295 = vunpack.c.h.b16 %v99
  %v296 = vunpack.c.l.b16 %v100
  %v297 = vunpack.c.h.b16 %v100
  %v298 = vunpack.c.l.b16 %v101
  %v299 = vunpack.c.h.b16 %v101
  %v300 = vunpack.c.l.b16 %v102
  %v301 = vunpack.c.h.b16 %v102
  %v302 = vunpack.c.l.b16 %v103
  %v303 = vunpack.c.h.b16 %v103
  %v304 = vunpack.c.l.b16 %v104
  %v305 = vunpack.c.h.b16 %v104
  %v306 = vunpack.c.l.b16 %v105
  %v307 = vunpack.c.h.b16 %v105
  %v308 = vunpack.c.l.b16 %v106
  %v309 = vunpack.c.h.b16 %v106
  %v310 = vunpack.c.l.b16 %v107
  %v311 = vunpack.c.h.b16 %v107
  %v312 = vunpack.c.l.b16 %v108
  %v313 = vunpack.c.h.b16 %v108
  %v314 = vunpack.c.l.b16 %v109
  %v315 = vunpack.c.h.b16 %v109
  %v316 = vunpack.c.l.b16 %v110
  %v317 = vunpack.c.h.b16 %v110
  %v318 = vunpack.c.l.b16 %v111
  %v319 = vunpack.c.h.b16 %v111
  %v320 = vunpack.c.l.b16 %v112
  %v321 = vunpack.c.h.b16 %v112
  %v322 = vunpack.c.l.b16 %v113
  %v323 = vunpack.c.h.b16 %v113
  %v324 = vunpack.c.l.b16 %v114
  %v325 = vunpack.c.h.b16 %v114
  %v326 = vunpack.c.l.b16 %v115
  %v327 = vunpack.c.h.b16 %v115
  %v328 = vunpack.c.l.b16 %v116
  %v329 = vunpack.c.h.b16 %v116
  %v330 = vunpack.c.l.b16 %v117
  %v331 = vunpack.c.h.b16 %v117
  %v332 = vpack.c.b16 %v206, %v204
  %v333 = vpack.c.b16 %v207, %v205
  %v334 = vpack.c.b16 %v210, %v208
  %v335 = vpack.c.b16 %v211, %v209
  %v336 = vpack.c.b16 %v214, %v212
  %v337 = vpack.c.b16 %v215, %v213
  %v338 = vpack.c.b16 %v218, %v216
  %v339 = vpack.c.b16 %v219, %v217
  %v340 = vpack.c.b16 %v222, %v220
  %v341 = vpack.c.b16 %v223, %v221
  %v342 = vpack.c.b16 %v226, %v224
  %v343 = vpack.c.b16 %v227, %v225
  %v344 = vpack.c.b16 %v230, %v228
  %v345 = vpack.c.b16 %v231, %v229
  %v346 = vpack.c.b16 %v234, %v232
  %v347 = vpack.c.b16 %v235, %v233
  %v348 = vpack.c.b16 %v238, %v236
  %v349 = vpack.c.b16 %v239, %v237
  %v350 = vpack.c.b16 %v242, %v240
  %v351 = vpack.c.b16 %v243, %v241
  %v352 = vpack.c.b16 %v246, %v244
  %v353 = vpack.c.b16 %v247, %v245
  %v354 = vpack.c.b16 %v250, %v248
  %v355 = vpack.c.b16 %v251, %v249
  %v356 = vpack.c.b16 %v254, %v252
  %v357 = vpack.c.b16 %v255, %v253
  %v358 = vpack.c.b16 %v258, %v256
  %v359 = vpack.c.b16 %v259, %v257
  %v360 = vpack.c.b16 %v262, %v260
  %v361 = vpack.c.b16 %v263, %v261
  %v362 = vpack.c.b16 %v266, %v264
  %v363 = vpack.c.b16 %v267, %v265
  %v364 = vpack.c.b16 %v270, %v268
  %v365 = vpack.c.b16 %v271, %v269
  %v366 = vpack.c.b16 %v274, %v272
  %v367 = vpack.c.b16 %v275, %v273
  %v368 = vpack.c.b16 %v278, %v276
  %v369 = vpack.c.b16 %v279, %v277
  %v370 = vpack.c.b16 %v282, %v280
  %v371 = vpack.c.b16 %v283, %v281
  %v372 = vpack.c.b16 %v286, %v284
  %v373 = vpack.c.b16 %v287, %v285
  %v374 = vpack.c.b16 %v290, %v288
  %v375 = vpack.c.b16 %v291, %v289
  %v376 = vpack.c.b16 %v294, %v292
  %v377 = vpack.c.b16 %v295, %v293
  %v378 = vpack.c.b16 %v298, %v296
  %v379 = vpack.c.b16 %v299, %v297
  %v380 = vpack.c.b16 %v302, %v300
  %v381 = vpack.c.b16 %v303, %v301
  %v382 = vpack.c.b16 %v306, %v304
  %v383 = vpack.c.b16 %v307, %v305
  %v384 = vpack.c.b16 %v310, %v308
  %v385 = vpack.c.b16 %v311, %v309
  %v386 = vpack.c.b16 %v314, %v312
  %v387 = vpack.c.b16 %v315, %v313
  %v388 = vpack.c.b16 %v318, %v316
  %v389 = vpack.c.b16 %v319, %v317
  %v390 = vpack.c.b16 %v322, %v320
  %v391 = vpack.c.b16 %v323, %v321
  %v392 = vpack.c.b16 %v326, %v324
  %v393 = vpack.c.b16 %v327, %v325
  %v394 = vpack.c.b16 %v330, %v328
  %v395 = vpack.c.b16 %v331, %v329
  %v446 = vunpack.c.l.b16 %v118
  %v447 = vunpack.c.l.b16 %v119
  %v448 = vunpack.c.l.b16 %v120
  %v449 = vunpack.c.l.b16 %v121
  %v450 = vunpack.c.l.b16 %v122
  %v451 = vunpack.c.l.b16 %v123
  %v452 = vunpack.c.l.b16 %v124
  %v453 = vunpack.c.l.b16 %v125
  %v454 = vunpack.c.l.b16 %v126
  %v455 = vunpack.c.l.b16 %v127
  %v456 = vunpack.c.l.b16 %v128
  %v457 = vunpack.c.l.b16 %v129
  %v458 = vunpack.c.l.b16 %v130
  %v459 = vunpack.c.l.b16 %v131
  %v460 = vunpack.c.l.b16 %v132
  %v461 = vunpack.c.l.b16 %v133
  %v462 = vunpack.c.l.b16 %v134
  %v463 = vunpack.c.l.b16 %v135
  %v464 = vpack.c.b16 %v447, %v446
  %v465 = vpack.c.b16 %v449, %v448
  %v466 = vpack.c.b16 %v451, %v450
  %v467 = vpack.c.b16 %v453, %v452
  %v468 = vpack.c.b16 %v455, %v454
  %v469 = vpack.c.b16 %v457, %v456
  %v470 = vpack.c.b16 %v459, %v458
  %v471 = vpack.c.b16 %v461, %v460
  %v472 = vpack.c.b16 %v463, %v462
  %vm482 = vcmask 130048
  %v484 = vsel %vm482, %v333, 0
  %v487 = vsel %vm482, %v335, 0
  %v490 = vsel %vm482, %v337, 0
  %v493 = vsel %vm482, %v339, 0
  %v496 = vsel %vm482, %v341, 0
  %v499 = vsel %vm482, %v343, 0
  %v502 = vsel %vm482, %v345, 0
  %v505 = vsel %vm482, %v347, 0
  %v508 = vsel %vm482, %v349, 0
  %v511 = vsel %vm482, %v351, 0
  %v514 = vsel %vm482, %v353, 0
  %v517 = vsel %vm482, %v355, 0
  %v520 = vsel %vm482, %v357, 0
  %v523 = vsel %vm482, %v359, 0
  %v526 = vsel %vm482, %v361, 0
  %v529 = vsel %vm482, %v363, 0
  %v532 = vsel %vm482, %v365, 0
  %v535 = vsel %vm482, %v367, 0
  %v538 = vsel %vm482, %v369, 0
  %v541 = vsel %vm482, %v371, 0
  %v544 = vsel %vm482, %v373, 0
  %v547 = vsel %vm482, %v375, 0
  %v550 = vsel %vm482, %v377, 0
  %v553 = vsel %vm482, %v379, 0
  %v556 = vsel %vm482, %v381, 0
  %v559 = vsel %vm482, %v383, 0
  %v562 = vsel %vm482, %v385, 0
  %v565 = vsel %vm482, %v387, 0
  %v568 = vsel %vm482, %v389, 0
  %v571 = vsel %vm482, %v391, 0
  %v574 = vsel %vm482, %v393, 0
  %v577 = vsel %vm482, %v395, 0
  %579 = vmatpush.bf16.msra.mxu0 %v471
  %580 = vmatpush.bf16.msra.mxu0 %v470
  %581 = vmatpush.bf16.msra.mxu0 %v469
  %582 = vmatpush.bf16.msra.mxu0 %v468
  %583 = vmatpush.bf16.msra.mxu0 %v467
  %584 = vmatpush.bf16.msra.mxu0 %v466
  %585 = vmatpush.bf16.msra.mxu0 %v465
  %586 = vmatpush.bf16.msra.mxu0 %v464
  %587 = vmatmul.bf16.gmra.mxu0 %v332
  %v588 = vpop.f32.mrf.mxu0
  %v589 = vadd.f32 %v138, %v588
  %v590 = vpop.f32.mrf.mxu0
  %v591 = vadd.f32 %v138, %v590
  %592 = vmatmul.bf16.gmra.mxu0 %v334
  %v593 = vpop.f32.mrf.mxu0
  %v594 = vadd.f32 %v138, %v593
  %v595 = vpop.f32.mrf.mxu0
  %v596 = vadd.f32 %v138, %v595
  %597 = vmatmul.bf16.gmra.mxu0 %v336
  %v598 = vpop.f32.mrf.mxu0
  %v599 = vadd.f32 %v138, %v598
  %v600 = vpop.f32.mrf.mxu0
  %v601 = vadd.f32 %v138, %v600
  %602 = vmatmul.bf16.gmra.mxu0 %v338
  %v603 = vpop.f32.mrf.mxu0
  %v604 = vadd.f32 %v138, %v603
  %v605 = vpop.f32.mrf.mxu0
  %v606 = vadd.f32 %v138, %v605
  %607 = vmatmul.bf16.gmra.mxu0 %v340
  %v608 = vpop.f32.mrf.mxu0
  %v609 = vadd.f32 %v138, %v608
  %v610 = vpop.f32.mrf.mxu0
  %v611 = vadd.f32 %v138, %v610
  %612 = vmatmul.bf16.gmra.mxu0 %v342
  %v613 = vpop.f32.mrf.mxu0
  %v614 = vadd.f32 %v138, %v613
  %v615 = vpop.f32.mrf.mxu0
  %v616 = vadd.f32 %v138, %v615
  %617 = vmatmul.bf16.gmra.mxu0 %v344
  %v618 = vpop.f32.mrf.mxu0
  %v619 = vadd.f32 %v138, %v618
  %v620 = vpop.f32.mrf.mxu0
  %v621 = vadd.f32 %v138, %v620
  %622 = vmatmul.bf16.gmra.mxu0 %v346
  %v623 = vpop.f32.mrf.mxu0
  %v624 = vadd.f32 %v138, %v623
  %v625 = vpop.f32.mrf.mxu0
  %v626 = vadd.f32 %v138, %v625
  %627 = vmatmul.bf16.gmra.mxu0 %v348
  %v628 = vpop.f32.mrf.mxu0
  %v629 = vadd.f32 %v138, %v628
  %v630 = vpop.f32.mrf.mxu0
  %v631 = vadd.f32 %v138, %v630
  %632 = vmatmul.bf16.gmra.mxu0 %v350
  %v633 = vpop.f32.mrf.mxu0
  %v634 = vadd.f32 %v138, %v633
  %v635 = vpop.f32.mrf.mxu0
  %v636 = vadd.f32 %v138, %v635
  %637 = vmatmul.bf16.gmra.mxu0 %v352
  %v638 = vpop.f32.mrf.mxu0
  %v639 = vadd.f32 %v138, %v638
  %v640 = vpop.f32.mrf.mxu0
  %v641 = vadd.f32 %v138, %v640
  %642 = vmatmul.bf16.gmra.mxu0 %v354
  %v643 = vpop.f32.mrf.mxu0
  %v644 = vadd.f32 %v138, %v643
  %v645 = vpop.f32.mrf.mxu0
  %v646 = vadd.f32 %v138, %v645
  %647 = vmatmul.bf16.gmra.mxu0 %v356
  %v648 = vpop.f32.mrf.mxu0
  %v649 = vadd.f32 %v138, %v648
  %v650 = vpop.f32.mrf.mxu0
  %v651 = vadd.f32 %v138, %v650
  %652 = vmatmul.bf16.gmra.mxu0 %v358
  %v653 = vpop.f32.mrf.mxu0
  %v654 = vadd.f32 %v138, %v653
  %v655 = vpop.f32.mrf.mxu0
  %v656 = vadd.f32 %v138, %v655
  %657 = vmatmul.bf16.gmra.mxu0 %v360
  %v658 = vpop.f32.mrf.mxu0
  %v659 = vadd.f32 %v138, %v658
  %v660 = vpop.f32.mrf.mxu0
  %v661 = vadd.f32 %v138, %v660
  %662 = vmatmul.bf16.gmra.mxu0 %v362
  %v663 = vpop.f32.mrf.mxu0
  %v664 = vadd.f32 %v138, %v663
  %v665 = vpop.f32.mrf.mxu0
  %v666 = vadd.f32 %v138, %v665
  %667 = vmatmul.bf16.gmra.mxu0 %v364
  %v668 = vpop.f32.mrf.mxu0
  %v669 = vadd.f32 %v138, %v668
  %v670 = vpop.f32.mrf.mxu0
  %v671 = vadd.f32 %v138, %v670
  %672 = vmatmul.bf16.gmra.mxu0 %v366
  %v673 = vpop.f32.mrf.mxu0
  %v674 = vadd.f32 %v138, %v673
  %v675 = vpop.f32.mrf.mxu0
  %v676 = vadd.f32 %v138, %v675
  %677 = vmatmul.bf16.gmra.mxu0 %v368
  %v678 = vpop.f32.mrf.mxu0
  %v679 = vadd.f32 %v138, %v678
  %v680 = vpop.f32.mrf.mxu0
  %v681 = vadd.f32 %v138, %v680
  %682 = vmatmul.bf16.gmra.mxu0 %v370
  %v683 = vpop.f32.mrf.mxu0
  %v684 = vadd.f32 %v138, %v683
  %v685 = vpop.f32.mrf.mxu0
  %v686 = vadd.f32 %v138, %v685
  %687 = vmatmul.bf16.gmra.mxu0 %v372
  %v688 = vpop.f32.mrf.mxu0
  %v689 = vadd.f32 %v138, %v688
  %v690 = vpop.f32.mrf.mxu0
  %v691 = vadd.f32 %v138, %v690
  %692 = vmatmul.bf16.gmra.mxu0 %v374
  %v693 = vpop.f32.mrf.mxu0
  %v694 = vadd.f32 %v138, %v693
  %v695 = vpop.f32.mrf.mxu0
  %v696 = vadd.f32 %v138, %v695
  %697 = vmatmul.bf16.gmra.mxu0 %v376
  %v698 = vpop.f32.mrf.mxu0
  %v699 = vadd.f32 %v138, %v698
  %v700 = vpop.f32.mrf.mxu0
  %v701 = vadd.f32 %v138, %v700
  %702 = vmatmul.bf16.gmra.mxu0 %v378
  %v703 = vpop.f32.mrf.mxu0
  %v704 = vadd.f32 %v138, %v703
  %v705 = vpop.f32.mrf.mxu0
  %v706 = vadd.f32 %v138, %v705
  %707 = vmatmul.bf16.gmra.mxu0 %v380
  %v708 = vpop.f32.mrf.mxu0
  %v709 = vadd.f32 %v138, %v708
  %v710 = vpop.f32.mrf.mxu0
  %v711 = vadd.f32 %v138, %v710
  %712 = vmatmul.bf16.gmra.mxu0 %v382
  %v713 = vpop.f32.mrf.mxu0
  %v714 = vadd.f32 %v138, %v713
  %v715 = vpop.f32.mrf.mxu0
  %v716 = vadd.f32 %v138, %v715
  %717 = vmatmul.bf16.gmra.mxu0 %v384
  %v718 = vpop.f32.mrf.mxu0
  %v719 = vadd.f32 %v138, %v718
  %v720 = vpop.f32.mrf.mxu0
  %v721 = vadd.f32 %v138, %v720
  %722 = vmatmul.bf16.gmra.mxu0 %v386
  %v723 = vpop.f32.mrf.mxu0
  %v724 = vadd.f32 %v138, %v723
  %v725 = vpop.f32.mrf.mxu0
  %v726 = vadd.f32 %v138, %v725
  %727 = vmatmul.bf16.gmra.mxu0 %v388
  %v728 = vpop.f32.mrf.mxu0
  %v729 = vadd.f32 %v138, %v728
  %v730 = vpop.f32.mrf.mxu0
  %v731 = vadd.f32 %v138, %v730
  %732 = vmatmul.bf16.gmra.mxu0 %v390
  %v733 = vpop.f32.mrf.mxu0
  %v734 = vadd.f32 %v138, %v733
  %v735 = vpop.f32.mrf.mxu0
  %v736 = vadd.f32 %v138, %v735
  %737 = vmatmul.bf16.gmra.mxu0 %v392
  %v738 = vpop.f32.mrf.mxu0
  %v739 = vadd.f32 %v138, %v738
  %v740 = vpop.f32.mrf.mxu0
  %v741 = vadd.f32 %v138, %v740
  %742 = vmatmul.bf16.gmra.mxu0 %v394
  %v743 = vpop.f32.mrf.mxu0
  %v744 = vadd.f32 %v138, %v743
  %v745 = vpop.f32.mrf.mxu0
  %v746 = vadd.f32 %v138, %v745
  %747 = vdwg.mxu0
  %748 = vmatpush.bf16.msra.mxu0 0
  %749 = vmatpush.bf16.msra.mxu0 0
  %750 = vmatpush.bf16.msra.mxu0 0
  %751 = vmatpush.bf16.msra.mxu0 0
  %752 = vmatpush.bf16.msra.mxu0 0
  %753 = vmatpush.bf16.msra.mxu0 0
  %754 = vmatpush.bf16.msra.mxu0 0
  %755 = vmatpush.bf16.msra.mxu0 %v472
  %756 = vmatmul.bf16.gmra.mxu0 %v484
  %v757 = vpop.f32.mrf.mxu0
  %v758 = vadd.f32 %v589, %v757
  %v759 = vpop.f32.mrf.mxu0
  %v760 = vadd.f32 %v591, %v759
  %761 = vmatmul.bf16.gmra.mxu0 %v487
  %v762 = vpop.f32.mrf.mxu0
  %v763 = vadd.f32 %v594, %v762
  %v764 = vpop.f32.mrf.mxu0
  %v765 = vadd.f32 %v596, %v764
  %766 = vmatmul.bf16.gmra.mxu0 %v490
  %v767 = vpop.f32.mrf.mxu0
  %v768 = vadd.f32 %v599, %v767
  %v769 = vpop.f32.mrf.mxu0
  %v770 = vadd.f32 %v601, %v769
  %771 = vmatmul.bf16.gmra.mxu0 %v493
  %v772 = vpop.f32.mrf.mxu0
  %v773 = vadd.f32 %v604, %v772
  %v774 = vpop.f32.mrf.mxu0
  %v775 = vadd.f32 %v606, %v774
  %776 = vmatmul.bf16.gmra.mxu0 %v496
  %v777 = vpop.f32.mrf.mxu0
  %v778 = vadd.f32 %v609, %v777
  %v779 = vpop.f32.mrf.mxu0
  %v780 = vadd.f32 %v611, %v779
  %781 = vmatmul.bf16.gmra.mxu0 %v499
  %v782 = vpop.f32.mrf.mxu0
  %v783 = vadd.f32 %v614, %v782
  %v784 = vpop.f32.mrf.mxu0
  %v785 = vadd.f32 %v616, %v784
  %786 = vmatmul.bf16.gmra.mxu0 %v502
  %v787 = vpop.f32.mrf.mxu0
  %v788 = vadd.f32 %v619, %v787
  %v789 = vpop.f32.mrf.mxu0
  %v790 = vadd.f32 %v621, %v789
  %791 = vmatmul.bf16.gmra.mxu0 %v505
  %v792 = vpop.f32.mrf.mxu0
  %v793 = vadd.f32 %v624, %v792
  %v794 = vpop.f32.mrf.mxu0
  %v795 = vadd.f32 %v626, %v794
  %796 = vmatmul.bf16.gmra.mxu0 %v508
  %v797 = vpop.f32.mrf.mxu0
  %v798 = vadd.f32 %v629, %v797
  %v799 = vpop.f32.mrf.mxu0
  %v800 = vadd.f32 %v631, %v799
  %801 = vmatmul.bf16.gmra.mxu0 %v511
  %v802 = vpop.f32.mrf.mxu0
  %v803 = vadd.f32 %v634, %v802
  %v804 = vpop.f32.mrf.mxu0
  %v805 = vadd.f32 %v636, %v804
  %806 = vmatmul.bf16.gmra.mxu0 %v514
  %v807 = vpop.f32.mrf.mxu0
  %v808 = vadd.f32 %v639, %v807
  %v809 = vpop.f32.mrf.mxu0
  %v810 = vadd.f32 %v641, %v809
  %811 = vmatmul.bf16.gmra.mxu0 %v517
  %v812 = vpop.f32.mrf.mxu0
  %v813 = vadd.f32 %v644, %v812
  %v814 = vpop.f32.mrf.mxu0
  %v815 = vadd.f32 %v646, %v814
  %816 = vmatmul.bf16.gmra.mxu0 %v520
  %v817 = vpop.f32.mrf.mxu0
  %v818 = vadd.f32 %v649, %v817
  %v819 = vpop.f32.mrf.mxu0
  %v820 = vadd.f32 %v651, %v819
  %821 = vmatmul.bf16.gmra.mxu0 %v523
  %v822 = vpop.f32.mrf.mxu0
  %v823 = vadd.f32 %v654, %v822
  %v824 = vpop.f32.mrf.mxu0
  %v825 = vadd.f32 %v656, %v824
  %826 = vmatmul.bf16.gmra.mxu0 %v526
  %v827 = vpop.f32.mrf.mxu0
  %v828 = vadd.f32 %v659, %v827
  %v829 = vpop.f32.mrf.mxu0
  %v830 = vadd.f32 %v661, %v829
  %831 = vmatmul.bf16.gmra.mxu0 %v529
  %v832 = vpop.f32.mrf.mxu0
  %v833 = vadd.f32 %v664, %v832
  %v834 = vpop.f32.mrf.mxu0
  %v835 = vadd.f32 %v666, %v834
  %836 = vmatmul.bf16.gmra.mxu0 %v532
  %v837 = vpop.f32.mrf.mxu0
  %v838 = vadd.f32 %v669, %v837
  %v839 = vpop.f32.mrf.mxu0
  %v840 = vadd.f32 %v671, %v839
  %841 = vmatmul.bf16.gmra.mxu0 %v535
  %v842 = vpop.f32.mrf.mxu0
  %v843 = vadd.f32 %v674, %v842
  %v844 = vpop.f32.mrf.mxu0
  %v845 = vadd.f32 %v676, %v844
  %846 = vmatmul.bf16.gmra.mxu0 %v538
  %v847 = vpop.f32.mrf.mxu0
  %v848 = vadd.f32 %v679, %v847
  %v849 = vpop.f32.mrf.mxu0
  %v850 = vadd.f32 %v681, %v849
  %851 = vmatmul.bf16.gmra.mxu0 %v541
  %v852 = vpop.f32.mrf.mxu0
  %v853 = vadd.f32 %v684, %v852
  %v854 = vpop.f32.mrf.mxu0
  %v855 = vadd.f32 %v686, %v854
  %856 = vmatmul.bf16.gmra.mxu0 %v544
  %v857 = vpop.f32.mrf.mxu0
  %v858 = vadd.f32 %v689, %v857
  %v859 = vpop.f32.mrf.mxu0
  %v860 = vadd.f32 %v691, %v859
  %861 = vmatmul.bf16.gmra.mxu0 %v547
  %v862 = vpop.f32.mrf.mxu0
  %v863 = vadd.f32 %v694, %v862
  %v864 = vpop.f32.mrf.mxu0
  %v865 = vadd.f32 %v696, %v864
  %866 = vmatmul.bf16.gmra.mxu0 %v550
  %v867 = vpop.f32.mrf.mxu0
  %v868 = vadd.f32 %v699, %v867
  %v869 = vpop.f32.mrf.mxu0
  %v870 = vadd.f32 %v701, %v869
  %871 = vmatmul.bf16.gmra.mxu0 %v553
  %v872 = vpop.f32.mrf.mxu0
  %v873 = vadd.f32 %v704, %v872
  %v874 = vpop.f32.mrf.mxu0
  %v875 = vadd.f32 %v706, %v874
  %876 = vmatmul.bf16.gmra.mxu0 %v556
  %v877 = vpop.f32.mrf.mxu0
  %v878 = vadd.f32 %v709, %v877
  %v879 = vpop.f32.mrf.mxu0
  %v880 = vadd.f32 %v711, %v879
  %881 = vmatmul.bf16.gmra.mxu0 %v559
  %v882 = vpop.f32.mrf.mxu0
  %v883 = vadd.f32 %v714, %v882
  %v884 = vpop.f32.mrf.mxu0
  %v885 = vadd.f32 %v716, %v884
  %886 = vmatmul.bf16.gmra.mxu0 %v562
  %v887 = vpop.f32.mrf.mxu0
  %v888 = vadd.f32 %v719, %v887
  %v889 = vpop.f32.mrf.mxu0
  %v890 = vadd.f32 %v721, %v889
  %891 = vmatmul.bf16.gmra.mxu0 %v565
  %v892 = vpop.f32.mrf.mxu0
  %v893 = vadd.f32 %v724, %v892
  %v894 = vpop.f32.mrf.mxu0
  %v895 = vadd.f32 %v726, %v894
  %896 = vmatmul.bf16.gmra.mxu0 %v568
  %v897 = vpop.f32.mrf.mxu0
  %v898 = vadd.f32 %v729, %v897
  %v899 = vpop.f32.mrf.mxu0
  %v900 = vadd.f32 %v731, %v899
  %901 = vmatmul.bf16.gmra.mxu0 %v571
  %v902 = vpop.f32.mrf.mxu0
  %v903 = vadd.f32 %v734, %v902
  %v904 = vpop.f32.mrf.mxu0
  %v905 = vadd.f32 %v736, %v904
  %906 = vmatmul.bf16.gmra.mxu0 %v574
  %v907 = vpop.f32.mrf.mxu0
  %v908 = vadd.f32 %v739, %v907
  %v909 = vpop.f32.mrf.mxu0
  %v910 = vadd.f32 %v741, %v909
  %911 = vmatmul.bf16.gmra.mxu0 %v577
  %v912 = vpop.f32.mrf.mxu0
  %v913 = vadd.f32 %v744, %v912
  %v914 = vpop.f32.mrf.mxu0
  %v915 = vadd.f32 %v746, %v914
  %916 = vdwg.mxu0
  %v917 = vmax.f32 %v758, 0.0
  %v918 = vmax.f32 %v760, 0.0
  %v919 = vmax.f32 %v763, 0.0
  %v920 = vmax.f32 %v765, 0.0
  %v921 = vmax.f32 %v768, 0.0
  %v922 = vmax.f32 %v770, 0.0
  %v923 = vmax.f32 %v773, 0.0
  %v924 = vmax.f32 %v775, 0.0
  %v925 = vmax.f32 %v778, 0.0
  %v926 = vmax.f32 %v780, 0.0
  %v927 = vmax.f32 %v783, 0.0
  %v928 = vmax.f32 %v785, 0.0
  %v929 = vmax.f32 %v788, 0.0
  %v930 = vmax.f32 %v790, 0.0
  %v931 = vmax.f32 %v793, 0.0
  %v932 = vmax.f32 %v795, 0.0
  %v933 = vmax.f32 %v798, 0.0
  %v934 = vmax.f32 %v800, 0.0
  %v935 = vmax.f32 %v803, 0.0
  %v936 = vmax.f32 %v805, 0.0
  %v937 = vmax.f32 %v808, 0.0
  %v938 = vmax.f32 %v810, 0.0
  %v939 = vmax.f32 %v813, 0.0
  %v940 = vmax.f32 %v815, 0.0
  %v941 = vmax.f32 %v818, 0.0
  %v942 = vmax.f32 %v820, 0.0
  %v943 = vmax.f32 %v823, 0.0
  %v944 = vmax.f32 %v825, 0.0
  %v945 = vmax.f32 %v828, 0.0
  %v946 = vmax.f32 %v830, 0.0
  %v947 = vmax.f32 %v833, 0.0
  %v948 = vmax.f32 %v835, 0.0
  %v949 = vmax.f32 %v838, 0.0
  %v950 = vmax.f32 %v840, 0.0
  %v951 = vmax.f32 %v843, 0.0
  %v952 = vmax.f32 %v845, 0.0
  %v953 = vmax.f32 %v848, 0.0
  %v954 = vmax.f32 %v850, 0.0
  %v955 = vmax.f32 %v853, 0.0
  %v956 = vmax.f32 %v855, 0.0
  %v957 = vmax.f32 %v858, 0.0
  %v958 = vmax.f32 %v860, 0.0
  %v959 = vmax.f32 %v863, 0.0
  %v960 = vmax.f32 %v865, 0.0
  %v961 = vmax.f32 %v868, 0.0
  %v962 = vmax.f32 %v870, 0.0
  %v963 = vmax.f32 %v873, 0.0
  %v964 = vmax.f32 %v875, 0.0
  %v965 = vmax.f32 %v878, 0.0
  %v966 = vmax.f32 %v880, 0.0
  %v967 = vmax.f32 %v883, 0.0
  %v968 = vmax.f32 %v885, 0.0
  %v969 = vmax.f32 %v888, 0.0
  %v970 = vmax.f32 %v890, 0.0
  %v971 = vmax.f32 %v893, 0.0
  %v972 = vmax.f32 %v895, 0.0
  %v973 = vmax.f32 %v898, 0.0
  %v974 = vmax.f32 %v900, 0.0
  %v975 = vmax.f32 %v903, 0.0
  %v976 = vmax.f32 %v905, 0.0
  %v977 = vmax.f32 %v908, 0.0
  %v978 = vmax.f32 %v910, 0.0
  %v979 = vmax.f32 %v913, 0.0
  %v980 = vmax.f32 %v915, 0.0
  %vm981 = vcmask 261120
  %v982 = vsel %vm981, %v917, 0.0
  %v983 = vsel %vm981, %v918, 0.0
  %v984 = vadd.f32 %v982, %v983
  %v985 = vsel %vm981, %v919, 0.0
  %v986 = vadd.f32 %v984, %v985
  %v987 = vsel %vm981, %v920, 0.0
  %v988 = vadd.f32 %v986, %v987
  %v989 = vsel %vm981, %v921, 0.0
  %v990 = vadd.f32 %v988, %v989
  %v991 = vsel %vm981, %v922, 0.0
  %v992 = vadd.f32 %v990, %v991
  %v993 = vsel %vm981, %v923, 0.0
  %v994 = vadd.f32 %v992, %v993
  %v995 = vsel %vm981, %v924, 0.0
  %v996 = vadd.f32 %v994, %v995
  %v997 = vsel %vm981, %v925, 0.0
  %v998 = vadd.f32 %v996, %v997
  %v999 = vsel %vm981, %v926, 0.0
  %v1000 = vadd.f32 %v998, %v999
  %v1001 = vsel %vm981, %v927, 0.0
  %v1002 = vadd.f32 %v1000, %v1001
  %v1003 = vsel %vm981, %v928, 0.0
  %v1004 = vadd.f32 %v1002, %v1003
  %v1005 = vsel %vm981, %v929, 0.0
  %v1006 = vadd.f32 %v1004, %v1005
  %v1007 = vsel %vm981, %v930, 0.0
  %v1008 = vadd.f32 %v1006, %v1007
  %v1009 = vsel %vm981, %v931, 0.0
  %v1010 = vadd.f32 %v1008, %v1009
  %v1011 = vsel %vm981, %v932, 0.0
  %v1012 = vadd.f32 %v1010, %v1011
  %v1013 = vsel %vm981, %v933, 0.0
  %v1014 = vadd.f32 %v1012, %v1013
  %v1015 = vsel %vm981, %v934, 0.0
  %v1016 = vadd.f32 %v1014, %v1015
  %v1017 = vsel %vm981, %v935, 0.0
  %v1018 = vadd.f32 %v1016, %v1017
  %v1019 = vsel %vm981, %v936, 0.0
  %v1020 = vadd.f32 %v1018, %v1019
  %v1021 = vsel %vm981, %v937, 0.0
  %v1022 = vadd.f32 %v1020, %v1021
  %v1023 = vsel %vm981, %v938, 0.0
  %v1024 = vadd.f32 %v1022, %v1023
  %v1025 = vsel %vm981, %v939, 0.0
  %v1026 = vadd.f32 %v1024, %v1025
  %v1027 = vsel %vm981, %v940, 0.0
  %v1028 = vadd.f32 %v1026, %v1027
  %v1029 = vsel %vm981, %v941, 0.0
  %v1030 = vadd.f32 %v1028, %v1029
  %v1031 = vsel %vm981, %v942, 0.0
  %v1032 = vadd.f32 %v1030, %v1031
  %v1033 = vsel %vm981, %v943, 0.0
  %v1034 = vadd.f32 %v1032, %v1033
  %v1035 = vsel %vm981, %v944, 0.0
  %v1036 = vadd.f32 %v1034, %v1035
  %v1037 = vsel %vm981, %v945, 0.0
  %v1038 = vadd.f32 %v1036, %v1037
  %v1039 = vsel %vm981, %v946, 0.0
  %v1040 = vadd.f32 %v1038, %v1039
  %v1041 = vsel %vm981, %v947, 0.0
  %v1042 = vadd.f32 %v1040, %v1041
  %v1043 = vsel %vm981, %v948, 0.0
  %v1044 = vadd.f32 %v1042, %v1043
  %v1045 = vrot.slane %v1044, 4
  %v1046 = vadd.f32 %v1044, %v1045
  %v1047 = vrot.slane %v1046, 2
  %v1048 = vadd.f32 %v1046, %v1047
  %v1049 = vrot.slane %v1048, 1
  %v1050 = vadd.f32 %v1048, %v1049
  %v1051 = vsel %vm981, %v949, 0.0
  %v1052 = vsel %vm981, %v950, 0.0
  %v1053 = vadd.f32 %v1051, %v1052
  %v1054 = vsel %vm981, %v951, 0.0
  %v1055 = vadd.f32 %v1053, %v1054
  %v1056 = vsel %vm981, %v952, 0.0
  %v1057 = vadd.f32 %v1055, %v1056
  %v1058 = vsel %vm981, %v953, 0.0
  %v1059 = vadd.f32 %v1057, %v1058
  %v1060 = vsel %vm981, %v954, 0.0
  %v1061 = vadd.f32 %v1059, %v1060
  %v1062 = vsel %vm981, %v955, 0.0
  %v1063 = vadd.f32 %v1061, %v1062
  %v1064 = vsel %vm981, %v956, 0.0
  %v1065 = vadd.f32 %v1063, %v1064
  %v1066 = vsel %vm981, %v957, 0.0
  %v1067 = vadd.f32 %v1065, %v1066
  %v1068 = vsel %vm981, %v958, 0.0
  %v1069 = vadd.f32 %v1067, %v1068
  %v1070 = vsel %vm981, %v959, 0.0
  %v1071 = vadd.f32 %v1069, %v1070
  %v1072 = vsel %vm981, %v960, 0.0
  %v1073 = vadd.f32 %v1071, %v1072
  %v1074 = vsel %vm981, %v961, 0.0
  %v1075 = vadd.f32 %v1073, %v1074
  %v1076 = vsel %vm981, %v962, 0.0
  %v1077 = vadd.f32 %v1075, %v1076
  %v1078 = vsel %vm981, %v963, 0.0
  %v1079 = vadd.f32 %v1077, %v1078
  %v1080 = vsel %vm981, %v964, 0.0
  %v1081 = vadd.f32 %v1079, %v1080
  %v1082 = vsel %vm981, %v965, 0.0
  %v1083 = vadd.f32 %v1081, %v1082
  %v1084 = vsel %vm981, %v966, 0.0
  %v1085 = vadd.f32 %v1083, %v1084
  %v1086 = vsel %vm981, %v967, 0.0
  %v1087 = vadd.f32 %v1085, %v1086
  %v1088 = vsel %vm981, %v968, 0.0
  %v1089 = vadd.f32 %v1087, %v1088
  %v1090 = vsel %vm981, %v969, 0.0
  %v1091 = vadd.f32 %v1089, %v1090
  %v1092 = vsel %vm981, %v970, 0.0
  %v1093 = vadd.f32 %v1091, %v1092
  %v1094 = vsel %vm981, %v971, 0.0
  %v1095 = vadd.f32 %v1093, %v1094
  %v1096 = vsel %vm981, %v972, 0.0
  %v1097 = vadd.f32 %v1095, %v1096
  %v1098 = vsel %vm981, %v973, 0.0
  %v1099 = vadd.f32 %v1097, %v1098
  %v1100 = vsel %vm981, %v974, 0.0
  %v1101 = vadd.f32 %v1099, %v1100
  %v1102 = vsel %vm981, %v975, 0.0
  %v1103 = vadd.f32 %v1101, %v1102
  %v1104 = vsel %vm981, %v976, 0.0
  %v1105 = vadd.f32 %v1103, %v1104
  %v1106 = vsel %vm981, %v977, 0.0
  %v1107 = vadd.f32 %v1105, %v1106
  %v1108 = vsel %vm981, %v978, 0.0
  %v1109 = vadd.f32 %v1107, %v1108
  %v1110 = vsel %vm981, %v979, 0.0
  %v1111 = vadd.f32 %v1109, %v1110
  %v1112 = vsel %vm981, %v980, 0.0
  %v1113 = vadd.f32 %v1111, %v1112
  %v1114 = vrot.slane %v1113, 4
  %v1115 = vadd.f32 %v1113, %v1114
  %v1116 = vrot.slane %v1115, 2
  %v1117 = vadd.f32 %v1115, %v1116
  %v1118 = vrot.slane %v1117, 1
  %v1119 = vadd.f32 %v1117, %v1118
  %v1120 = vrcp.pop 256.0
  %v1121 = vmul.f32 256.0, %v1120
  %v1122 = vsub.f32 1.0, %v1121
  %v1123 = vmul.f32 %v1120, %v1122
  %v1124 = vadd.f32 %v1120, %v1123
  %vm1125 = vweird.f32 %v1120
  %v1126 = vsel %vm1125, %v1120, %v1124
  %v1127 = vmul.f32 %v1050, %v1126
  %v1128 = vmul.f32 %v1119, %v1126
  %v1129 = vpack.c.bf16 %v1127, %v1127
  %v1130 = vpack.c.bf16 %v1128, %v1128
  %v1131 = vld [vmem:[%s5] sm:$0xf]
  %v1132 = vld [vmem:[%s5 + $0x4] sm:$0xf]
  %v1133 = vld [vmem:[%s5 + $0x8] sm:$0xf]
  %v1134 = vld [vmem:[%s5 + $0xc] sm:$0xf]
  %v1135 = vld [vmem:[%s6] sm:$0x1]
  %v1137 = vperm.slane %v1135, 0
  %v1141 = vunpack.c.l.b16 %v1129
  %v1142 = vunpack.c.l.b16 %v1130
  %vm1143 = vcmask 1041409
  %v1144 = vsel %vm1143, %v1142, %v1141
  %v1145 = vpack.c.b16 %v1144, %v1144
  %v1150 = vunpack.c.l.b16 %v1131
  %v1151 = vunpack.c.l.b16 %v1132
  %v1152 = vunpack.c.l.b16 %v1133
  %v1153 = vunpack.c.l.b16 %v1134
  %v1154 = vpack.c.b16 %v1151, %v1150
  %v1155 = vpack.c.b16 %v1153, %v1152
  %v1159 = vsel %vm981, %v1145, 0
  %1161 = vmatpush.bf16.msra.mxu0 0
  %1162 = vmatpush.bf16.msra.mxu0 0
  %1163 = vmatpush.bf16.msra.mxu0 0
  %1164 = vmatpush.bf16.msra.mxu0 0
  %1165 = vmatpush.bf16.msra.mxu0 0
  %1166 = vmatpush.bf16.msra.mxu0 0
  %1167 = vmatpush.bf16.msra.mxu0 %v1155
  %1168 = vmatpush.bf16.msra.mxu0 %v1154
  %1169 = vmatmul.bf16.gmra.mxu0 %v1159
  %v1170 = vpop.f32.mrf.mxu0
  %v1171 = vadd.f32 %v1137, %v1170
  %v1172 = vpop.f32.mrf.mxu0
  %1173 = vdwg.mxu0
  %v1174 = vld [vmem:[%s2] sm:$0x3f]
  %v1175 = vld [vmem:[%s7] sm:$0xf]
  %v1176 = vld [vmem:[%s7 + $0x4] sm:$0xf]
  %v1177 = vld [vmem:[%s7 + $0x8] sm:$0xf]
  %v1178 = vld [vmem:[%s7 + $0xc] sm:$0xf]
  %v1179 = vld [vmem:[%s7 + $0x10] sm:$0xf]
  %v1180 = vld [vmem:[%s7 + $0x14] sm:$0xf]
  %v1181 = vld [vmem:[%s7 + $0x18] sm:$0xf]
  %v1182 = vld [vmem:[%s7 + $0x1c] sm:$0xf]
  %v1183 = vld [vmem:[%s7 + $0x20] sm:$0xf]
  %v1184 = vld [vmem:[%s7 + $0x24] sm:$0xf]
  %v1185 = vld [vmem:[%s7 + $0x28] sm:$0xf]
  %v1186 = vld [vmem:[%s7 + $0x2c] sm:$0xf]
  %v1187 = vld [vmem:[%s7 + $0x30] sm:$0xf]
  %v1188 = vld [vmem:[%s7 + $0x34] sm:$0xf]
  %v1189 = vld [vmem:[%s7 + $0x38] sm:$0xf]
  %v1190 = vld [vmem:[%s7 + $0x3c] sm:$0xf]
  %v1191 = vld [vmem:[%s7 + $0x40] sm:$0xf]
  %v1192 = vld [vmem:[%s7 + $0x44] sm:$0xf]
  %v1193 = vld [vmem:[%s7 + $0x48] sm:$0xf]
  %v1194 = vld [vmem:[%s7 + $0x4c] sm:$0xf]
  %v1195 = vld [vmem:[%s7 + $0x50] sm:$0xf]
  %v1196 = vld [vmem:[%s7 + $0x54] sm:$0xf]
  %v1197 = vld [vmem:[%s7 + $0x58] sm:$0xf]
  %v1198 = vld [vmem:[%s7 + $0x5c] sm:$0xf]
  %v1199 = vld [vmem:[%s7 + $0x60] sm:$0xf]
  %v1200 = vld [vmem:[%s7 + $0x64] sm:$0xf]
  %v1201 = vld [vmem:[%s7 + $0x68] sm:$0xf]
  %v1202 = vld [vmem:[%s7 + $0x6c] sm:$0xf]
  %v1203 = vld [vmem:[%s7 + $0x70] sm:$0xf]
  %v1204 = vld [vmem:[%s7 + $0x74] sm:$0xf]
  %v1205 = vld [vmem:[%s7 + $0x78] sm:$0xf]
  %v1206 = vld [vmem:[%s7 + $0x7c] sm:$0xf]
  %v1207 = vld [vmem:[%s7 + $0x80] sm:$0xf]
  %v1208 = vld [vmem:[%s7 + $0x84] sm:$0xf]
  %v1209 = vld [vmem:[%s7 + $0x88] sm:$0xf]
  %v1210 = vld [vmem:[%s7 + $0x8c] sm:$0xf]
  %v1211 = vld [vmem:[%s7 + $0x90] sm:$0xf]
  %v1212 = vld [vmem:[%s7 + $0x94] sm:$0xf]
  %v1213 = vld [vmem:[%s7 + $0x98] sm:$0xf]
  %v1214 = vld [vmem:[%s7 + $0x9c] sm:$0xf]
  %v1215 = vld [vmem:[%s7 + $0xa0] sm:$0xf]
  %v1216 = vld [vmem:[%s7 + $0xa4] sm:$0xf]
  %v1217 = vld [vmem:[%s7 + $0xa8] sm:$0xf]
  %v1218 = vld [vmem:[%s7 + $0xac] sm:$0xf]
  %v1219 = vld [vmem:[%s7 + $0xb0] sm:$0xf]
  %v1220 = vld [vmem:[%s7 + $0xb4] sm:$0xf]
  %v1221 = vld [vmem:[%s7 + $0xb8] sm:$0xf]
  %v1222 = vld [vmem:[%s7 + $0xbc] sm:$0xf]
  %v1223 = vld [vmem:[%s7 + $0xc0] sm:$0xf]
  %v1224 = vld [vmem:[%s7 + $0xc4] sm:$0xf]
  %v1225 = vld [vmem:[%s7 + $0xc8] sm:$0xf]
  %v1226 = vld [vmem:[%s7 + $0xcc] sm:$0xf]
  %v1227 = vld [vmem:[%s7 + $0xd0] sm:$0xf]
  %v1228 = vld [vmem:[%s7 + $0xd4] sm:$0xf]
  %v1229 = vld [vmem:[%s7 + $0xd8] sm:$0xf]
  %v1230 = vld [vmem:[%s7 + $0xdc] sm:$0xf]
  %v1231 = vld [vmem:[%s7 + $0xe0] sm:$0xf]
  %v1232 = vld [vmem:[%s7 + $0xe4] sm:$0xf]
  %v1233 = vld [vmem:[%s7 + $0xe8] sm:$0xf]
  %v1234 = vld [vmem:[%s7 + $0xec] sm:$0xf]
  %v1235 = vld [vmem:[%s7 + $0xf0] sm:$0xf]
  %v1236 = vld [vmem:[%s7 + $0xf4] sm:$0xf]
  %v1237 = vld [vmem:[%s7 + $0xf8] sm:$0xf]
  %v1238 = vld [vmem:[%s7 + $0xfc] sm:$0xf]
  %v1239 = vld [vmem:[%s7 + $0x100] sm:$0xf]
  %v1240 = vld [vmem:[%s7 + $0x104] sm:$0xf]
  %v1241 = vld [vmem:[%s7 + $0x108] sm:$0xf]
  %v1242 = vld [vmem:[%s7 + $0x10c] sm:$0xf]
  %v1243 = vld [vmem:[%s7 + $0x110] sm:$0xf]
  %v1244 = vld [vmem:[%s7 + $0x114] sm:$0xf]
  %v1245 = vld [vmem:[%s7 + $0x118] sm:$0xf]
  %v1246 = vld [vmem:[%s7 + $0x11c] sm:$0xf]
  %v1247 = vld [vmem:[%s7 + $0x120] sm:$0xf]
  %v1248 = vld [vmem:[%s7 + $0x124] sm:$0xf]
  %v1249 = vld [vmem:[%s7 + $0x128] sm:$0xf]
  %v1250 = vld [vmem:[%s7 + $0x12c] sm:$0xf]
  %v1251 = vld [vmem:[%s7 + $0x130] sm:$0xf]
  %v1252 = vld [vmem:[%s7 + $0x134] sm:$0xf]
  %v1253 = vld [vmem:[%s7 + $0x138] sm:$0xf]
  %v1254 = vld [vmem:[%s7 + $0x13c] sm:$0xf]
  %v1255 = vld [vmem:[%s7 + $0x140] sm:$0xf]
  %v1256 = vld [vmem:[%s7 + $0x144] sm:$0xf]
  %v1257 = vld [vmem:[%s7 + $0x148] sm:$0xf]
  %v1258 = vld [vmem:[%s7 + $0x14c] sm:$0xf]
  %v1259 = vld [vmem:[%s7 + $0x150] sm:$0xf]
  %v1260 = vld [vmem:[%s7 + $0x154] sm:$0xf]
  %v1261 = vld [vmem:[%s7 + $0x158] sm:$0xf]
  %v1262 = vld [vmem:[%s7 + $0x15c] sm:$0xf]
  %v1263 = vld [vmem:[%s7 + $0x160] sm:$0xf]
  %v1264 = vld [vmem:[%s7 + $0x164] sm:$0xf]
  %v1265 = vld [vmem:[%s7 + $0x168] sm:$0xf]
  %v1266 = vld [vmem:[%s7 + $0x16c] sm:$0xf]
  %v1267 = vld [vmem:[%s7 + $0x170] sm:$0xf]
  %v1268 = vld [vmem:[%s7 + $0x174] sm:$0xf]
  %v1269 = vld [vmem:[%s7 + $0x178] sm:$0xf]
  %v1270 = vld [vmem:[%s7 + $0x17c] sm:$0xf]
  %v1271 = vld [vmem:[%s8] sm:$0x1]
  %v1273 = vperm.slane %v1271, 0
  %1276 = vst [vmem:[#allocation1] ss:$9 sm:$0xff] %v1174
  %v1277 = vld [vmem:[#allocation1] sm:$0xff]
  %v1278 = vld [vmem:[#allocation1 + $0x9] sm:$0xff]
  %v1279 = vld [vmem:[#allocation1 + $0x12] sm:$0xff]
  %v1280 = vld [vmem:[#allocation1 + $0x1b] sm:$0xff]
  %v1281 = vld [vmem:[#allocation1 + $0x24] sm:$0xff]
  %v1282 = vld [vmem:[#allocation1 + $0x2d] sm:$0xff]
  %v1385 = vunpack.c.l.b16 %v1175
  %v1386 = vunpack.c.l.b16 %v1176
  %v1387 = vunpack.c.l.b16 %v1177
  %v1388 = vunpack.c.l.b16 %v1178
  %v1389 = vunpack.c.l.b16 %v1179
  %v1390 = vunpack.c.l.b16 %v1180
  %v1391 = vunpack.c.l.b16 %v1181
  %v1392 = vunpack.c.l.b16 %v1182
  %v1393 = vunpack.c.l.b16 %v1183
  %v1394 = vunpack.c.l.b16 %v1184
  %v1395 = vunpack.c.l.b16 %v1185
  %v1396 = vunpack.c.l.b16 %v1186
  %v1397 = vunpack.c.l.b16 %v1187
  %v1398 = vunpack.c.l.b16 %v1188
  %v1399 = vunpack.c.l.b16 %v1189
  %v1400 = vunpack.c.l.b16 %v1190
  %v1401 = vunpack.c.l.b16 %v1191
  %v1402 = vunpack.c.l.b16 %v1192
  %v1403 = vunpack.c.l.b16 %v1193
  %v1404 = vunpack.c.l.b16 %v1194
  %v1405 = vunpack.c.l.b16 %v1195
  %v1406 = vunpack.c.l.b16 %v1196
  %v1407 = vunpack.c.l.b16 %v1197
  %v1408 = vunpack.c.l.b16 %v1198
  %v1409 = vunpack.c.l.b16 %v1199
  %v1410 = vunpack.c.l.b16 %v1200
  %v1411 = vunpack.c.l.b16 %v1201
  %v1412 = vunpack.c.l.b16 %v1202
  %v1413 = vunpack.c.l.b16 %v1203
  %v1414 = vunpack.c.l.b16 %v1204
  %v1415 = vunpack.c.l.b16 %v1205
  %v1416 = vunpack.c.l.b16 %v1206
  %v1417 = vunpack.c.l.b16 %v1207
  %v1418 = vunpack.c.l.b16 %v1208
  %v1419 = vunpack.c.l.b16 %v1209
  %v1420 = vunpack.c.l.b16 %v1210
  %v1421 = vunpack.c.l.b16 %v1211
  %v1422 = vunpack.c.l.b16 %v1212
  %v1423 = vunpack.c.l.b16 %v1213
  %v1424 = vunpack.c.l.b16 %v1214
  %v1425 = vunpack.c.l.b16 %v1215
  %v1426 = vunpack.c.l.b16 %v1216
  %v1427 = vunpack.c.l.b16 %v1217
  %v1428 = vunpack.c.l.b16 %v1218
  %v1429 = vunpack.c.l.b16 %v1219
  %v1430 = vunpack.c.l.b16 %v1220
  %v1431 = vunpack.c.l.b16 %v1221
  %v1432 = vunpack.c.l.b16 %v1222
  %v1433 = vunpack.c.l.b16 %v1223
  %v1434 = vunpack.c.l.b16 %v1224
  %v1435 = vunpack.c.l.b16 %v1225
  %v1436 = vunpack.c.l.b16 %v1226
  %v1437 = vunpack.c.l.b16 %v1227
  %v1438 = vunpack.c.l.b16 %v1228
  %v1439 = vunpack.c.l.b16 %v1229
  %v1440 = vunpack.c.l.b16 %v1230
  %v1441 = vunpack.c.l.b16 %v1231
  %v1442 = vunpack.c.l.b16 %v1232
  %v1443 = vunpack.c.l.b16 %v1233
  %v1444 = vunpack.c.l.b16 %v1234
  %v1445 = vunpack.c.l.b16 %v1235
  %v1446 = vunpack.c.l.b16 %v1236
  %v1447 = vunpack.c.l.b16 %v1237
  %v1448 = vunpack.c.l.b16 %v1238
  %v1449 = vunpack.c.l.b16 %v1239
  %v1450 = vunpack.c.l.b16 %v1240
  %v1451 = vunpack.c.l.b16 %v1241
  %v1452 = vunpack.c.l.b16 %v1242
  %v1453 = vunpack.c.l.b16 %v1243
  %v1454 = vunpack.c.l.b16 %v1244
  %v1455 = vunpack.c.l.b16 %v1245
  %v1456 = vunpack.c.l.b16 %v1246
  %v1457 = vunpack.c.l.b16 %v1247
  %v1458 = vunpack.c.l.b16 %v1248
  %v1459 = vunpack.c.l.b16 %v1249
  %v1460 = vunpack.c.l.b16 %v1250
  %v1461 = vunpack.c.l.b16 %v1251
  %v1462 = vunpack.c.l.b16 %v1252
  %v1463 = vunpack.c.l.b16 %v1253
  %v1464 = vunpack.c.l.b16 %v1254
  %v1465 = vunpack.c.l.b16 %v1255
  %v1466 = vunpack.c.l.b16 %v1256
  %v1467 = vunpack.c.l.b16 %v1257
  %v1468 = vunpack.c.l.b16 %v1258
  %v1469 = vunpack.c.l.b16 %v1259
  %v1470 = vunpack.c.l.b16 %v1260
  %v1471 = vunpack.c.l.b16 %v1261
  %v1472 = vunpack.c.l.b16 %v1262
  %v1473 = vunpack.c.l.b16 %v1263
  %v1474 = vunpack.c.l.b16 %v1264
  %v1475 = vunpack.c.l.b16 %v1265
  %v1476 = vunpack.c.l.b16 %v1266
  %v1477 = vunpack.c.l.b16 %v1267
  %v1478 = vunpack.c.l.b16 %v1268
  %v1479 = vunpack.c.l.b16 %v1269
  %v1480 = vunpack.c.l.b16 %v1270
  %v1481 = vpack.c.b16 %v1386, %v1385
  %v1482 = vpack.c.b16 %v1388, %v1387
  %v1483 = vpack.c.b16 %v1390, %v1389
  %v1484 = vpack.c.b16 %v1392, %v1391
  %v1485 = vpack.c.b16 %v1394, %v1393
  %v1486 = vpack.c.b16 %v1396, %v1395
  %v1487 = vpack.c.b16 %v1398, %v1397
  %v1488 = vpack.c.b16 %v1400, %v1399
  %v1489 = vpack.c.b16 %v1402, %v1401
  %v1490 = vpack.c.b16 %v1404, %v1403
  %v1491 = vpack.c.b16 %v1406, %v1405
  %v1492 = vpack.c.b16 %v1408, %v1407
  %v1493 = vpack.c.b16 %v1410, %v1409
  %v1494 = vpack.c.b16 %v1412, %v1411
  %v1495 = vpack.c.b16 %v1414, %v1413
  %v1496 = vpack.c.b16 %v1416, %v1415
  %v1497 = vpack.c.b16 %v1418, %v1417
  %v1498 = vpack.c.b16 %v1420, %v1419
  %v1499 = vpack.c.b16 %v1422, %v1421
  %v1500 = vpack.c.b16 %v1424, %v1423
  %v1501 = vpack.c.b16 %v1426, %v1425
  %v1502 = vpack.c.b16 %v1428, %v1427
  %v1503 = vpack.c.b16 %v1430, %v1429
  %v1504 = vpack.c.b16 %v1432, %v1431
  %v1505 = vpack.c.b16 %v1434, %v1433
  %v1506 = vpack.c.b16 %v1436, %v1435
  %v1507 = vpack.c.b16 %v1438, %v1437
  %v1508 = vpack.c.b16 %v1440, %v1439
  %v1509 = vpack.c.b16 %v1442, %v1441
  %v1510 = vpack.c.b16 %v1444, %v1443
  %v1511 = vpack.c.b16 %v1446, %v1445
  %v1512 = vpack.c.b16 %v1448, %v1447
  %v1513 = vpack.c.b16 %v1450, %v1449
  %v1514 = vpack.c.b16 %v1452, %v1451
  %v1515 = vpack.c.b16 %v1454, %v1453
  %v1516 = vpack.c.b16 %v1456, %v1455
  %v1517 = vpack.c.b16 %v1458, %v1457
  %v1518 = vpack.c.b16 %v1460, %v1459
  %v1519 = vpack.c.b16 %v1462, %v1461
  %v1520 = vpack.c.b16 %v1464, %v1463
  %v1521 = vpack.c.b16 %v1466, %v1465
  %v1522 = vpack.c.b16 %v1468, %v1467
  %v1523 = vpack.c.b16 %v1470, %v1469
  %v1524 = vpack.c.b16 %v1472, %v1471
  %v1525 = vpack.c.b16 %v1474, %v1473
  %v1526 = vpack.c.b16 %v1476, %v1475
  %v1527 = vpack.c.b16 %v1478, %v1477
  %v1528 = vpack.c.b16 %v1480, %v1479
  %1577 = vmatpush.bf16.msra.mxu0 %v1488
  %1578 = vmatpush.bf16.msra.mxu0 %v1487
  %1579 = vmatpush.bf16.msra.mxu0 %v1486
  %1580 = vmatpush.bf16.msra.mxu0 %v1485
  %1581 = vmatpush.bf16.msra.mxu0 %v1484
  %1582 = vmatpush.bf16.msra.mxu0 %v1483
  %1583 = vmatpush.bf16.msra.mxu0 %v1482
  %1584 = vmatpush.bf16.msra.mxu0 %v1481
  %1585 = vmatmul.bf16.gmra.mxu0 %v1277
  %v1586 = vpop.f32.mrf.mxu0
  %v1587 = vadd.f32 %v1273, %v1586
  %v1588 = vpop.f32.mrf.mxu0
  %1589 = vdwg.mxu0
  %1590 = vmatpush.bf16.msra.mxu0 %v1496
  %1591 = vmatpush.bf16.msra.mxu0 %v1495
  %1592 = vmatpush.bf16.msra.mxu0 %v1494
  %1593 = vmatpush.bf16.msra.mxu0 %v1493
  %1594 = vmatpush.bf16.msra.mxu0 %v1492
  %1595 = vmatpush.bf16.msra.mxu0 %v1491
  %1596 = vmatpush.bf16.msra.mxu0 %v1490
  %1597 = vmatpush.bf16.msra.mxu0 %v1489
  %1598 = vmatmul.bf16.gmra.mxu0 %v1278
  %v1599 = vpop.f32.mrf.mxu0
  %v1600 = vadd.f32 %v1587, %v1599
  %v1601 = vpop.f32.mrf.mxu0
  %1602 = vdwg.mxu0
  %1603 = vmatpush.bf16.msra.mxu0 %v1504
  %1604 = vmatpush.bf16.msra.mxu0 %v1503
  %1605 = vmatpush.bf16.msra.mxu0 %v1502
  %1606 = vmatpush.bf16.msra.mxu0 %v1501
  %1607 = vmatpush.bf16.msra.mxu0 %v1500
  %1608 = vmatpush.bf16.msra.mxu0 %v1499
  %1609 = vmatpush.bf16.msra.mxu0 %v1498
  %1610 = vmatpush.bf16.msra.mxu0 %v1497
  %1611 = vmatmul.bf16.gmra.mxu0 %v1279
  %v1612 = vpop.f32.mrf.mxu0
  %v1613 = vadd.f32 %v1600, %v1612
  %v1614 = vpop.f32.mrf.mxu0
  %1615 = vdwg.mxu0
  %1616 = vmatpush.bf16.msra.mxu0 %v1512
  %1617 = vmatpush.bf16.msra.mxu0 %v1511
  %1618 = vmatpush.bf16.msra.mxu0 %v1510
  %1619 = vmatpush.bf16.msra.mxu0 %v1509
  %1620 = vmatpush.bf16.msra.mxu0 %v1508
  %1621 = vmatpush.bf16.msra.mxu0 %v1507
  %1622 = vmatpush.bf16.msra.mxu0 %v1506
  %1623 = vmatpush.bf16.msra.mxu0 %v1505
  %1624 = vmatmul.bf16.gmra.mxu0 %v1280
  %v1625 = vpop.f32.mrf.mxu0
  %v1626 = vadd.f32 %v1613, %v1625
  %v1627 = vpop.f32.mrf.mxu0
  %1628 = vdwg.mxu0
  %1629 = vmatpush.bf16.msra.mxu0 %v1520
  %1630 = vmatpush.bf16.msra.mxu0 %v1519
  %1631 = vmatpush.bf16.msra.mxu0 %v1518
  %1632 = vmatpush.bf16.msra.mxu0 %v1517
  %1633 = vmatpush.bf16.msra.mxu0 %v1516
  %1634 = vmatpush.bf16.msra.mxu0 %v1515
  %1635 = vmatpush.bf16.msra.mxu0 %v1514
  %1636 = vmatpush.bf16.msra.mxu0 %v1513
  %1637 = vmatmul.bf16.gmra.mxu0 %v1281
  %v1638 = vpop.f32.mrf.mxu0
  %v1639 = vadd.f32 %v1626, %v1638
  %v1640 = vpop.f32.mrf.mxu0
  %1641 = vdwg.mxu0
  %1642 = vmatpush.bf16.msra.mxu0 %v1528
  %1643 = vmatpush.bf16.msra.mxu0 %v1527
  %1644 = vmatpush.bf16.msra.mxu0 %v1526
  %1645 = vmatpush.bf16.msra.mxu0 %v1525
  %1646 = vmatpush.bf16.msra.mxu0 %v1524
  %1647 = vmatpush.bf16.msra.mxu0 %v1523
  %1648 = vmatpush.bf16.msra.mxu0 %v1522
  %1649 = vmatpush.bf16.msra.mxu0 %v1521
  %1650 = vmatmul.bf16.gmra.mxu0 %v1282
  %v1651 = vpop.f32.mrf.mxu0
  %v1652 = vadd.f32 %v1639, %v1651
  %v1653 = vpop.f32.mrf.mxu0
  %1654 = vdwg.mxu0
  %v1655 = vld [vmem:[%s9] sm:$0x3]
  %v1656 = vld [vmem:[%s10] sm:$0x1]
  %v1657 = vld [vmem:[%s11] sm:$0xff]
  %v1658 = vld [vmem:[%s11 + $0x8] sm:$0xff]
  %v1659 = vld [vmem:[%s11 + $0x10] sm:$0xff]
  %v1660 = vld [vmem:[%s11 + $0x18] sm:$0xff]
  %v1661 = vld [vmem:[%s12] sm:$0xff]
  %v1662 = vld [vmem:[%s12 + $0x8] sm:$0xff]
  %v1663 = vld [vmem:[%s12 + $0x10] sm:$0xff]
  %v1664 = vld [vmem:[%s12 + $0x18] sm:$0xff]
  %v1665 = vld [vmem:[%s12 + $0x20] sm:$0xff]
  %v1666 = vld [vmem:[%s12 + $0x28] sm:$0xff]
  %v1667 = vld [vmem:[%s12 + $0x30] sm:$0xff]
  %v1668 = vld [vmem:[%s12 + $0x38] sm:$0xff]
  %v1669 = vld [vmem:[%s13] sm:$0x3]
  %v1670 = vld [vmem:[%s14] sm:$0x3]
  %v1671 = vld [vmem:[%s15] sm:$0x1]
  %v1672 = vld [vmem:[%s1] sm:$0x3]
  %v1673 = vlaneseq
  %v1674 = vand.u32 %v1673, 127
  %1676 = vset.pattern.permute.xlu0 0
  %1677 = vperm.xlu0 %1676, %v1672
  %v1678 = vpop.permute.xlu0 %1677
  %v1680 = vperm.slane %v1655, 0
  %v1681 = vmul.f32 %v1678, %v1680
  %1682 = vset.pattern.permute.xlu0 1
  %1683 = vperm.xlu0 %1682, %v1672
  %v1684 = vpop.permute.xlu0 %1683
  %v1686 = vperm.slane %v1655, 1
  %v1687 = vmul.f32 %v1684, %v1686
  %v1688 = vadd.f32 %v1681, %v1687
  %v1690 = vperm.slane %v1656, 0
  %v1692 = vadd.f32 %v1688, %v1690
  %v1693 = vmax.f32 %v1692, 0.0
  %v1694 = vpack.c.bf16 %v1693, %v1693
  %v1695 = vpack.c.bf16 %v1171, %v1171
  %v1704 = vunpack.c.l.b16 %v1661
  %v1705 = vunpack.c.h.b16 %v1661
  %v1706 = vunpack.c.l.b16 %v1662
  %v1707 = vunpack.c.h.b16 %v1662
  %v1708 = vunpack.c.l.b16 %v1663
  %v1709 = vunpack.c.h.b16 %v1663
  %v1710 = vunpack.c.l.b16 %v1664
  %v1711 = vunpack.c.h.b16 %v1664
  %v1712 = vunpack.c.l.b16 %v1665
  %v1713 = vunpack.c.h.b16 %v1665
  %v1714 = vunpack.c.l.b16 %v1666
  %v1715 = vunpack.c.h.b16 %v1666
  %v1716 = vunpack.c.l.b16 %v1667
  %v1717 = vunpack.c.h.b16 %v1667
  %v1718 = vunpack.c.l.b16 %v1668
  %v1719 = vunpack.c.h.b16 %v1668
  %v1720 = vpack.c.b16 %v1706, %v1704
  %v1721 = vpack.c.b16 %v1707, %v1705
  %v1722 = vpack.c.b16 %v1710, %v1708
  %v1723 = vpack.c.b16 %v1711, %v1709
  %v1724 = vpack.c.b16 %v1714, %v1712
  %v1725 = vpack.c.b16 %v1715, %v1713
  %v1726 = vpack.c.b16 %v1718, %v1716
  %v1727 = vpack.c.b16 %v1719, %v1717
  %vm1736 = vcmask 523264
  %v1738 = vsel %vm1736, %v1695, 0
  %1740 = vmatpush.bf16.msra.mxu0 0
  %1741 = vmatpush.bf16.msra.mxu0 0
  %1742 = vmatpush.bf16.msra.mxu0 0
  %1743 = vmatpush.bf16.msra.mxu0 0
  %1744 = vmatpush.bf16.msra.mxu0 %v1726
  %1745 = vmatpush.bf16.msra.mxu0 %v1724
  %1746 = vmatpush.bf16.msra.mxu0 %v1722
  %1747 = vmatpush.bf16.msra.mxu0 %v1720
  %1748 = vmatmul.bf16.gmra.mxu0 %v1738
  %v1749 = vpop.f32.mrf.mxu0
  %v1750 = vadd.f32 0.0, %v1749
  %v1751 = vpop.f32.mrf.mxu0
  %1752 = vdwg.mxu0
  %1753 = vmatpush.bf16.msra.mxu0 0
  %1754 = vmatpush.bf16.msra.mxu0 0
  %1755 = vmatpush.bf16.msra.mxu0 0
  %1756 = vmatpush.bf16.msra.mxu0 0
  %1757 = vmatpush.bf16.msra.mxu0 %v1727
  %1758 = vmatpush.bf16.msra.mxu0 %v1725
  %1759 = vmatpush.bf16.msra.mxu0 %v1723
  %1760 = vmatpush.bf16.msra.mxu0 %v1721
  %1761 = vmatmul.bf16.gmra.mxu0 %v1738
  %v1762 = vpop.f32.mrf.mxu0
  %v1763 = vadd.f32 0.0, %v1762
  %v1764 = vpop.f32.mrf.mxu0
  %1765 = vdwg.mxu0
  %v1770 = vunpack.c.l.b16 %v1657
  %v1771 = vunpack.c.h.b16 %v1657
  %v1772 = vunpack.c.l.b16 %v1658
  %v1773 = vunpack.c.h.b16 %v1658
  %v1774 = vunpack.c.l.b16 %v1659
  %v1775 = vunpack.c.h.b16 %v1659
  %v1776 = vunpack.c.l.b16 %v1660
  %v1777 = vunpack.c.h.b16 %v1660
  %v1778 = vpack.c.b16 %v1772, %v1770
  %v1779 = vpack.c.b16 %v1773, %v1771
  %v1780 = vpack.c.b16 %v1776, %v1774
  %v1781 = vpack.c.b16 %v1777, %v1775
  %v1787 = vsel %vm981, %v1694, 0
  %1789 = vmatpush.bf16.msra.mxu0 0
  %1790 = vmatpush.bf16.msra.mxu0 0
  %1791 = vmatpush.bf16.msra.mxu0 0
  %1792 = vmatpush.bf16.msra.mxu0 0
  %1793 = vmatpush.bf16.msra.mxu0 0
  %1794 = vmatpush.bf16.msra.mxu0 0
  %1795 = vmatpush.bf16.msra.mxu0 %v1780
  %1796 = vmatpush.bf16.msra.mxu0 %v1778
  %1797 = vmatmul.bf16.gmra.mxu0 %v1787
  %v1798 = vpop.f32.mrf.mxu0
  %v1799 = vadd.f32 %v1750, %v1798
  %v1800 = vpop.f32.mrf.mxu0
  %1801 = vdwg.mxu0
  %1802 = vmatpush.bf16.msra.mxu0 0
  %1803 = vmatpush.bf16.msra.mxu0 0
  %1804 = vmatpush.bf16.msra.mxu0 0
  %1805 = vmatpush.bf16.msra.mxu0 0
  %1806 = vmatpush.bf16.msra.mxu0 0
  %1807 = vmatpush.bf16.msra.mxu0 0
  %1808 = vmatpush.bf16.msra.mxu0 %v1781
  %1809 = vmatpush.bf16.msra.mxu0 %v1779
  %1810 = vmatmul.bf16.gmra.mxu0 %v1787
  %v1811 = vpop.f32.mrf.mxu0
  %v1812 = vadd.f32 %v1763, %v1811
  %v1813 = vpop.f32.mrf.mxu0
  %1814 = vdwg.mxu0
  %v1816 = vperm.slane %v1669, 0
  %v1817 = vperm.slane %v1669, 1
  %v1820 = vadd.f32 %v1799, %v1816
  %v1821 = vadd.f32 %v1812, %v1817
  %v1822 = vxor.u32 %v1820, 2147483648
  %v1823 = vmul.f32 %v1822, 1.442695
  %v1824 = vpow.pop %v1823
  %v1825 = vadd.f32 %v1824, 1.0
  %v1826 = vrcp.pop %v1825
  %v1827 = vmul.f32 %v1825, %v1826
  %v1828 = vsub.f32 1.0, %v1827
  %v1829 = vmul.f32 %v1826, %v1828
  %v1830 = vadd.f32 %v1826, %v1829
  %vm1831 = vweird.f32 %v1825
  %vm1832 = vweird.f32 %v1826
  %vm1833 = vmor %vm1831, %vm1832
  %v1834 = vsel %vm1833, %v1826, %v1830
  %v1835 = vand.u32 2147483647, %v1825
  %vm1836 = vcmp.eq.f32.partialorder %v1835, 8.507059e+37
  %v1837 = vand.u32 %v1825, 2147483648
  %v1838 = vor.u32 1.1754944e-38, %v1837
  %v1839 = vsel %vm1836, %v1838, %v1834
  %v1840 = vmul.f32 1.0, %v1839
  %v1841 = vtanh.pop %v1821
  %v1842 = vxor.u32 %v1821, 2147483648
  %v1843 = vmul.f32 %v1842, 1.442695
  %v1844 = vpow.pop %v1843
  %v1845 = vadd.f32 %v1844, 1.0
  %v1846 = vrcp.pop %v1845
  %v1847 = vmul.f32 %v1845, %v1846
  %v1848 = vsub.f32 1.0, %v1847
  %v1849 = vmul.f32 %v1846, %v1848
  %v1850 = vadd.f32 %v1846, %v1849
  %vm1851 = vweird.f32 %v1845
  %vm1852 = vweird.f32 %v1846
  %vm1853 = vmor %vm1851, %vm1852
  %v1854 = vsel %vm1853, %v1846, %v1850
  %v1855 = vand.u32 2147483647, %v1845
  %vm1856 = vcmp.eq.f32.partialorder %v1855, 8.507059e+37
  %v1857 = vand.u32 %v1845, 2147483648
  %v1858 = vor.u32 1.1754944e-38, %v1857
  %v1859 = vsel %vm1856, %v1858, %v1854
  %v1860 = vmul.f32 1.0, %v1859
  %1862 = vrot.lane.b32.xlu0 %v1652, 64
  %v1863 = vpop.permute.xlu0 %1862
  %v1865 = vmul.f32 %v1840, %v1863
  %v1866 = vmul.f32 %v1840, %v1841
  %1868 = vrot.lane.b32.xlu0 %v1866, 64
  %v1869 = vpop.permute.xlu0 %1868
  %v1871 = vadd.f32 %v1865, %v1869
  %v1872 = vtanh.pop %v1871
  %v1873 = vmul.f32 %v1860, %v1872
  %v1874 = vperm.slane %v1670, 0
  %1876 = vrot.lane.b32.xlu0 %v1874, 64
  %v1877 = vpop.permute.xlu0 %1876
  %v1879 = vmul.f32 %v1873, %v1877
  %1881 = vrot.lane.b32.xlu0 %v1879, 64
  %v1882 = vpop.permute.xlu0 %1881
  %vm1884 = vcmask 517120
  %v1885 = vsel %vm1884, %v1882, 0.0
  %1886 = vadd.xlane.f32.xlu0 %v1885
  %v1887 = vpop.xlane.xlu0 %1886
  %v1889 = vperm.slane %v1671, 0
  %v1891 = vadd.f32 %v1887, %v1889
  %v1892 = vperm.slane %v1670, 1
  %1894 = vrot.lane.b32.xlu0 %v1892, 64
  %v1895 = vpop.permute.xlu0 %1894
  %v1897 = vmul.f32 %v1873, %v1895
  %1899 = vrot.lane.b32.xlu0 %v1897, 64
  %v1900 = vpop.permute.xlu0 %1899
  %v1902 = vsel %vm1884, %v1900, 0.0
  %1903 = vadd.xlane.f32.xlu0 %v1902
  %v1904 = vpop.xlane.xlu0 %1903
  %v1905 = vadd.f32 %v1904, %v1889
  %vm1906 = vcmp.eq.s32.totalorder %v1674, 0
  %1908 = vset.pattern.permute.xlu0 0
  %1909 = vperm.xlu0 %1908, %v1891
  %v1910 = vpop.permute.xlu0 %1909
  %v1912 = vsel %vm1906, %v1910, 0.0
  %1914 = vset.pattern.permute.xlu0 1
  %1915 = vperm.xlu0 %1914, %v1905
  %v1916 = vpop.permute.xlu0 %1915
  %v1918 = vsel %vm1906, %v1916, 0.0
  %v1919 = vmul.f32 %v1910, %v1680
  %v1920 = vmul.f32 %v1916, %v1686
  %v1921 = vadd.f32 %v1919, %v1920
  %v1922 = vadd.f32 %v1921, %v1690
  %v1923 = vmax.f32 %v1922, 0.0
  %v1924 = vpack.c.bf16 %v1923, %v1923
  %v1925 = vpack.c.bf16 %v1873, %v1873
  %1927 = vrot.lane.b32.xlu0 %v1925, 64
  %v1928 = vpop.permute.xlu0 %1927
  %v1930 = vsel %vm1736, %v1928, 0
  %1932 = vmatpush.bf16.msra.mxu0 0
  %1933 = vmatpush.bf16.msra.mxu0 0
  %1934 = vmatpush.bf16.msra.mxu0 0
  %1935 = vmatpush.bf16.msra.mxu0 0
  %1936 = vmatpush.bf16.msra.mxu0 %v1726
  %1937 = vmatpush.bf16.msra.mxu0 %v1724
  %1938 = vmatpush.bf16.msra.mxu0 %v1722
  %1939 = vmatpush.bf16.msra.mxu0 %v1720
  %1940 = vmatmul.bf16.gmra.mxu0 %v1930
  %v1941 = vpop.f32.mrf.mxu0
  %v1942 = vadd.f32 0.0, %v1941
  %v1943 = vpop.f32.mrf.mxu0
  %1944 = vdwg.mxu0
  %1945 = vmatpush.bf16.msra.mxu0 0
  %1946 = vmatpush.bf16.msra.mxu0 0
  %1947 = vmatpush.bf16.msra.mxu0 0
  %1948 = vmatpush.bf16.msra.mxu0 0
  %1949 = vmatpush.bf16.msra.mxu0 %v1727
  %1950 = vmatpush.bf16.msra.mxu0 %v1725
  %1951 = vmatpush.bf16.msra.mxu0 %v1723
  %1952 = vmatpush.bf16.msra.mxu0 %v1721
  %1953 = vmatmul.bf16.gmra.mxu0 %v1930
  %v1954 = vpop.f32.mrf.mxu0
  %v1955 = vadd.f32 0.0, %v1954
  %v1956 = vpop.f32.mrf.mxu0
  %1957 = vdwg.mxu0
  %v1959 = vsel %vm981, %v1924, 0
  %1961 = vmatpush.bf16.msra.mxu0 0
  %1962 = vmatpush.bf16.msra.mxu0 0
  %1963 = vmatpush.bf16.msra.mxu0 0
  %1964 = vmatpush.bf16.msra.mxu0 0
  %1965 = vmatpush.bf16.msra.mxu0 0
  %1966 = vmatpush.bf16.msra.mxu0 0
  %1967 = vmatpush.bf16.msra.mxu0 %v1780
  %1968 = vmatpush.bf16.msra.mxu0 %v1778
  %1969 = vmatmul.bf16.gmra.mxu0 %v1959
  %v1970 = vpop.f32.mrf.mxu0
  %v1971 = vadd.f32 %v1942, %v1970
  %v1972 = vpop.f32.mrf.mxu0
  %1973 = vdwg.mxu0
  %1974 = vmatpush.bf16.msra.mxu0 0
  %1975 = vmatpush.bf16.msra.mxu0 0
  %1976 = vmatpush.bf16.msra.mxu0 0
  %1977 = vmatpush.bf16.msra.mxu0 0
  %1978 = vmatpush.bf16.msra.mxu0 0
  %1979 = vmatpush.bf16.msra.mxu0 0
  %1980 = vmatpush.bf16.msra.mxu0 %v1781
  %1981 = vmatpush.bf16.msra.mxu0 %v1779
  %1982 = vmatmul.bf16.gmra.mxu0 %v1959
  %v1983 = vpop.f32.mrf.mxu0
  %v1984 = vadd.f32 %v1955, %v1983
  %v1985 = vpop.f32.mrf.mxu0
  %1986 = vdwg.mxu0
  %v1987 = vadd.f32 %v1971, %v1816
  %v1988 = vadd.f32 %v1984, %v1817
  %v1989 = vxor.u32 %v1987, 2147483648
  %v1990 = vmul.f32 %v1989, 1.442695
  %v1991 = vpow.pop %v1990
  %v1992 = vadd.f32 %v1991, 1.0
  %v1993 = vrcp.pop %v1992
  %v1994 = vmul.f32 %v1992, %v1993
  %v1995 = vsub.f32 1.0, %v1994
  %v1996 = vmul.f32 %v1993, %v1995
  %v1997 = vadd.f32 %v1993, %v1996
  %vm1998 = vweird.f32 %v1992
  %vm1999 = vweird.f32 %v1993
  %vm2000 = vmor %vm1998, %vm1999
  %v2001 = vsel %vm2000, %v1993, %v1997
  %v2002 = vand.u32 2147483647, %v1992
  %vm2003 = vcmp.eq.f32.partialorder %v2002, 8.507059e+37
  %v2004 = vand.u32 %v1992, 2147483648
  %v2005 = vor.u32 1.1754944e-38, %v2004
  %v2006 = vsel %vm2003, %v2005, %v2001
  %v2007 = vmul.f32 1.0, %v2006
  %v2008 = vtanh.pop %v1988
  %v2009 = vxor.u32 %v1988, 2147483648
  %v2010 = vmul.f32 %v2009, 1.442695
  %v2011 = vpow.pop %v2010
  %v2012 = vadd.f32 %v2011, 1.0
  %v2013 = vrcp.pop %v2012
  %v2014 = vmul.f32 %v2012, %v2013
  %v2015 = vsub.f32 1.0, %v2014
  %v2016 = vmul.f32 %v2013, %v2015
  %v2017 = vadd.f32 %v2013, %v2016
  %vm2018 = vweird.f32 %v2012
  %vm2019 = vweird.f32 %v2013
  %vm2020 = vmor %vm2018, %vm2019
  %v2021 = vsel %vm2020, %v2013, %v2017
  %v2022 = vand.u32 2147483647, %v2012
  %vm2023 = vcmp.eq.f32.partialorder %v2022, 8.507059e+37
  %v2024 = vand.u32 %v2012, 2147483648
  %v2025 = vor.u32 1.1754944e-38, %v2024
  %v2026 = vsel %vm2023, %v2025, %v2021
  %v2027 = vmul.f32 1.0, %v2026
  %v2028 = vmul.f32 %v2007, %v1871
  %v2029 = vmul.f32 %v2007, %v2008
  %2031 = vrot.lane.b32.xlu0 %v2029, 64
  %v2032 = vpop.permute.xlu0 %2031
  %v2034 = vadd.f32 %v2028, %v2032
  %v2035 = vtanh.pop %v2034
  %v2036 = vmul.f32 %v2027, %v2035
  %v2037 = vmul.f32 %v2036, %v1877
  %2039 = vrot.lane.b32.xlu0 %v2037, 64
  %v2040 = vpop.permute.xlu0 %2039
  %v2042 = vsel %vm1884, %v2040, 0.0
  %2043 = vadd.xlane.f32.xlu0 %v2042
  %v2044 = vpop.xlane.xlu0 %2043
  %v2045 = vadd.f32 %v2044, %v1889
  %v2046 = vmul.f32 %v2036, %v1895
  %2048 = vrot.lane.b32.xlu0 %v2046, 64
  %v2049 = vpop.permute.xlu0 %2048
  %v2051 = vsel %vm1884, %v2049, 0.0
  %2052 = vadd.xlane.f32.xlu0 %v2051
  %v2053 = vpop.xlane.xlu0 %2052
  %v2054 = vadd.f32 %v2053, %v1889
  %vm2055 = vcmp.eq.s32.totalorder %v1674, 1
  %2057 = vset.pattern.permute.xlu0 0
  %2058 = vperm.xlu0 %2057, %v2045
  %v2059 = vpop.permute.xlu0 %2058
  %v2061 = vsel %vm2055, %v2059, %v1912
  %2063 = vset.pattern.permute.xlu0 1
  %2064 = vperm.xlu0 %2063, %v2054
  %v2065 = vpop.permute.xlu0 %2064
  %v2067 = vsel %vm2055, %v2065, %v1918
  %v2068 = vmul.f32 %v2059, %v1680
  %v2069 = vmul.f32 %v2065, %v1686
  %v2070 = vadd.f32 %v2068, %v2069
  %v2071 = vadd.f32 %v2070, %v1690
  %v2072 = vmax.f32 %v2071, 0.0
  %v2073 = vpack.c.bf16 %v2072, %v2072
  %v2074 = vpack.c.bf16 %v2036, %v2036
  %2076 = vrot.lane.b32.xlu0 %v2074, 64
  %v2077 = vpop.permute.xlu0 %2076
  %v2079 = vsel %vm1736, %v2077, 0
  %2081 = vmatpush.bf16.msra.mxu0 0
  %2082 = vmatpush.bf16.msra.mxu0 0
  %2083 = vmatpush.bf16.msra.mxu0 0
  %2084 = vmatpush.bf16.msra.mxu0 0
  %2085 = vmatpush.bf16.msra.mxu0 %v1726
  %2086 = vmatpush.bf16.msra.mxu0 %v1724
  %2087 = vmatpush.bf16.msra.mxu0 %v1722
  %2088 = vmatpush.bf16.msra.mxu0 %v1720
  %2089 = vmatmul.bf16.gmra.mxu0 %v2079
  %v2090 = vpop.f32.mrf.mxu0
  %v2091 = vadd.f32 0.0, %v2090
  %v2092 = vpop.f32.mrf.mxu0
  %2093 = vdwg.mxu0
  %2094 = vmatpush.bf16.msra.mxu0 0
  %2095 = vmatpush.bf16.msra.mxu0 0
  %2096 = vmatpush.bf16.msra.mxu0 0
  %2097 = vmatpush.bf16.msra.mxu0 0
  %2098 = vmatpush.bf16.msra.mxu0 %v1727
  %2099 = vmatpush.bf16.msra.mxu0 %v1725
  %2100 = vmatpush.bf16.msra.mxu0 %v1723
  %2101 = vmatpush.bf16.msra.mxu0 %v1721
  %2102 = vmatmul.bf16.gmra.mxu0 %v2079
  %v2103 = vpop.f32.mrf.mxu0
  %v2104 = vadd.f32 0.0, %v2103
  %v2105 = vpop.f32.mrf.mxu0
  %2106 = vdwg.mxu0
  %v2108 = vsel %vm981, %v2073, 0
  %2110 = vmatpush.bf16.msra.mxu0 0
  %2111 = vmatpush.bf16.msra.mxu0 0
  %2112 = vmatpush.bf16.msra.mxu0 0
  %2113 = vmatpush.bf16.msra.mxu0 0
  %2114 = vmatpush.bf16.msra.mxu0 0
  %2115 = vmatpush.bf16.msra.mxu0 0
  %2116 = vmatpush.bf16.msra.mxu0 %v1780
  %2117 = vmatpush.bf16.msra.mxu0 %v1778
  %2118 = vmatmul.bf16.gmra.mxu0 %v2108
  %v2119 = vpop.f32.mrf.mxu0
  %v2120 = vadd.f32 %v2091, %v2119
  %v2121 = vpop.f32.mrf.mxu0
  %2122 = vdwg.mxu0
  %2123 = vmatpush.bf16.msra.mxu0 0
  %2124 = vmatpush.bf16.msra.mxu0 0
  %2125 = vmatpush.bf16.msra.mxu0 0
  %2126 = vmatpush.bf16.msra.mxu0 0
  %2127 = vmatpush.bf16.msra.mxu0 0
  %2128 = vmatpush.bf16.msra.mxu0 0
  %2129 = vmatpush.bf16.msra.mxu0 %v1781
  %2130 = vmatpush.bf16.msra.mxu0 %v1779
  %2131 = vmatmul.bf16.gmra.mxu0 %v2108
  %v2132 = vpop.f32.mrf.mxu0
  %v2133 = vadd.f32 %v2104, %v2132
  %v2134 = vpop.f32.mrf.mxu0
  %2135 = vdwg.mxu0
  %v2136 = vadd.f32 %v2120, %v1816
  %v2137 = vadd.f32 %v2133, %v1817
  %v2138 = vxor.u32 %v2136, 2147483648
  %v2139 = vmul.f32 %v2138, 1.442695
  %v2140 = vpow.pop %v2139
  %v2141 = vadd.f32 %v2140, 1.0
  %v2142 = vrcp.pop %v2141
  %v2143 = vmul.f32 %v2141, %v2142
  %v2144 = vsub.f32 1.0, %v2143
  %v2145 = vmul.f32 %v2142, %v2144
  %v2146 = vadd.f32 %v2142, %v2145
  %vm2147 = vweird.f32 %v2141
  %vm2148 = vweird.f32 %v2142
  %vm2149 = vmor %vm2147, %vm2148
  %v2150 = vsel %vm2149, %v2142, %v2146
  %v2151 = vand.u32 2147483647, %v2141
  %vm2152 = vcmp.eq.f32.partialorder %v2151, 8.507059e+37
  %v2153 = vand.u32 %v2141, 2147483648
  %v2154 = vor.u32 1.1754944e-38, %v2153
  %v2155 = vsel %vm2152, %v2154, %v2150
  %v2156 = vmul.f32 1.0, %v2155
  %v2157 = vtanh.pop %v2137
  %v2158 = vxor.u32 %v2137, 2147483648
  %v2159 = vmul.f32 %v2158, 1.442695
  %v2160 = vpow.pop %v2159
  %v2161 = vadd.f32 %v2160, 1.0
  %v2162 = vrcp.pop %v2161
  %v2163 = vmul.f32 %v2161, %v2162
  %v2164 = vsub.f32 1.0, %v2163
  %v2165 = vmul.f32 %v2162, %v2164
  %v2166 = vadd.f32 %v2162, %v2165
  %vm2167 = vweird.f32 %v2161
  %vm2168 = vweird.f32 %v2162
  %vm2169 = vmor %vm2167, %vm2168
  %v2170 = vsel %vm2169, %v2162, %v2166
  %v2171 = vand.u32 2147483647, %v2161
  %vm2172 = vcmp.eq.f32.partialorder %v2171, 8.507059e+37
  %v2173 = vand.u32 %v2161, 2147483648
  %v2174 = vor.u32 1.1754944e-38, %v2173
  %v2175 = vsel %vm2172, %v2174, %v2170
  %v2176 = vmul.f32 1.0, %v2175
  %v2177 = vmul.f32 %v2156, %v2034
  %v2178 = vmul.f32 %v2156, %v2157
  %2180 = vrot.lane.b32.xlu0 %v2178, 64
  %v2181 = vpop.permute.xlu0 %2180
  %v2183 = vadd.f32 %v2177, %v2181
  %v2184 = vtanh.pop %v2183
  %v2185 = vmul.f32 %v2176, %v2184
  %v2186 = vmul.f32 %v2185, %v1877
  %2188 = vrot.lane.b32.xlu0 %v2186, 64
  %v2189 = vpop.permute.xlu0 %2188
  %v2191 = vsel %vm1884, %v2189, 0.0
  %2192 = vadd.xlane.f32.xlu0 %v2191
  %v2193 = vpop.xlane.xlu0 %2192
  %v2194 = vadd.f32 %v2193, %v1889
  %v2195 = vmul.f32 %v2185, %v1895
  %2197 = vrot.lane.b32.xlu0 %v2195, 64
  %v2198 = vpop.permute.xlu0 %2197
  %v2200 = vsel %vm1884, %v2198, 0.0
  %2201 = vadd.xlane.f32.xlu0 %v2200
  %v2202 = vpop.xlane.xlu0 %2201
  %v2203 = vadd.f32 %v2202, %v1889
  %vm2204 = vcmp.eq.s32.totalorder %v1674, 2
  %2206 = vset.pattern.permute.xlu0 0
  %2207 = vperm.xlu0 %2206, %v2194
  %v2208 = vpop.permute.xlu0 %2207
  %v2210 = vsel %vm2204, %v2208, %v2061
  %2212 = vset.pattern.permute.xlu0 1
  %2213 = vperm.xlu0 %2212, %v2203
  %v2214 = vpop.permute.xlu0 %2213
  %v2216 = vsel %vm2204, %v2214, %v2067
  %v2217 = vmul.f32 %v2208, %v1680
  %v2218 = vmul.f32 %v2214, %v1686
  %v2219 = vadd.f32 %v2217, %v2218
  %v2220 = vadd.f32 %v2219, %v1690
  %v2221 = vmax.f32 %v2220, 0.0
  %v2222 = vpack.c.bf16 %v2221, %v2221
  %v2223 = vpack.c.bf16 %v2185, %v2185
  %2225 = vrot.lane.b32.xlu0 %v2223, 64
  %v2226 = vpop.permute.xlu0 %2225
  %v2228 = vsel %vm1736, %v2226, 0
  %2230 = vmatpush.bf16.msra.mxu0 0
  %2231 = vmatpush.bf16.msra.mxu0 0
  %2232 = vmatpush.bf16.msra.mxu0 0
  %2233 = vmatpush.bf16.msra.mxu0 0
  %2234 = vmatpush.bf16.msra.mxu0 %v1726
  %2235 = vmatpush.bf16.msra.mxu0 %v1724
  %2236 = vmatpush.bf16.msra.mxu0 %v1722
  %2237 = vmatpush.bf16.msra.mxu0 %v1720
  %2238 = vmatmul.bf16.gmra.mxu0 %v2228
  %v2239 = vpop.f32.mrf.mxu0
  %v2240 = vadd.f32 0.0, %v2239
  %v2241 = vpop.f32.mrf.mxu0
  %2242 = vdwg.mxu0
  %2243 = vmatpush.bf16.msra.mxu0 0
  %2244 = vmatpush.bf16.msra.mxu0 0
  %2245 = vmatpush.bf16.msra.mxu0 0
  %2246 = vmatpush.bf16.msra.mxu0 0
  %2247 = vmatpush.bf16.msra.mxu0 %v1727
  %2248 = vmatpush.bf16.msra.mxu0 %v1725
  %2249 = vmatpush.bf16.msra.mxu0 %v1723
  %2250 = vmatpush.bf16.msra.mxu0 %v1721
  %2251 = vmatmul.bf16.gmra.mxu0 %v2228
  %v2252 = vpop.f32.mrf.mxu0
  %v2253 = vadd.f32 0.0, %v2252
  %v2254 = vpop.f32.mrf.mxu0
  %2255 = vdwg.mxu0
  %v2257 = vsel %vm981, %v2222, 0
  %2259 = vmatpush.bf16.msra.mxu0 0
  %2260 = vmatpush.bf16.msra.mxu0 0
  %2261 = vmatpush.bf16.msra.mxu0 0
  %2262 = vmatpush.bf16.msra.mxu0 0
  %2263 = vmatpush.bf16.msra.mxu0 0
  %2264 = vmatpush.bf16.msra.mxu0 0
  %2265 = vmatpush.bf16.msra.mxu0 %v1780
  %2266 = vmatpush.bf16.msra.mxu0 %v1778
  %2267 = vmatmul.bf16.gmra.mxu0 %v2257
  %v2268 = vpop.f32.mrf.mxu0
  %v2269 = vadd.f32 %v2240, %v2268
  %v2270 = vpop.f32.mrf.mxu0
  %2271 = vdwg.mxu0
  %2272 = vmatpush.bf16.msra.mxu0 0
  %2273 = vmatpush.bf16.msra.mxu0 0
  %2274 = vmatpush.bf16.msra.mxu0 0
  %2275 = vmatpush.bf16.msra.mxu0 0
  %2276 = vmatpush.bf16.msra.mxu0 0
  %2277 = vmatpush.bf16.msra.mxu0 0
  %2278 = vmatpush.bf16.msra.mxu0 %v1781
  %2279 = vmatpush.bf16.msra.mxu0 %v1779
  %2280 = vmatmul.bf16.gmra.mxu0 %v2257
  %v2281 = vpop.f32.mrf.mxu0
  %v2282 = vadd.f32 %v2253, %v2281
  %v2283 = vpop.f32.mrf.mxu0
  %2284 = vdwg.mxu0
  %v2285 = vadd.f32 %v2269, %v1816
  %v2286 = vadd.f32 %v2282, %v1817
  %v2287 = vxor.u32 %v2285, 2147483648
  %v2288 = vmul.f32 %v2287, 1.442695
  %v2289 = vpow.pop %v2288
  %v2290 = vadd.f32 %v2289, 1.0
  %v2291 = vrcp.pop %v2290
  %v2292 = vmul.f32 %v2290, %v2291
  %v2293 = vsub.f32 1.0, %v2292
  %v2294 = vmul.f32 %v2291, %v2293
  %v2295 = vadd.f32 %v2291, %v2294
  %vm2296 = vweird.f32 %v2290
  %vm2297 = vweird.f32 %v2291
  %vm2298 = vmor %vm2296, %vm2297
  %v2299 = vsel %vm2298, %v2291, %v2295
  %v2300 = vand.u32 2147483647, %v2290
  %vm2301 = vcmp.eq.f32.partialorder %v2300, 8.507059e+37
  %v2302 = vand.u32 %v2290, 2147483648
  %v2303 = vor.u32 1.1754944e-38, %v2302
  %v2304 = vsel %vm2301, %v2303, %v2299
  %v2305 = vmul.f32 1.0, %v2304
  %v2306 = vtanh.pop %v2286
  %v2307 = vxor.u32 %v2286, 2147483648
  %v2308 = vmul.f32 %v2307, 1.442695
  %v2309 = vpow.pop %v2308
  %v2310 = vadd.f32 %v2309, 1.0
  %v2311 = vrcp.pop %v2310
  %v2312 = vmul.f32 %v2310, %v2311
  %v2313 = vsub.f32 1.0, %v2312
  %v2314 = vmul.f32 %v2311, %v2313
  %v2315 = vadd.f32 %v2311, %v2314
  %vm2316 = vweird.f32 %v2310
  %vm2317 = vweird.f32 %v2311
  %vm2318 = vmor %vm2316, %vm2317
  %v2319 = vsel %vm2318, %v2311, %v2315
  %v2320 = vand.u32 2147483647, %v2310
  %vm2321 = vcmp.eq.f32.partialorder %v2320, 8.507059e+37
  %v2322 = vand.u32 %v2310, 2147483648
  %v2323 = vor.u32 1.1754944e-38, %v2322
  %v2324 = vsel %vm2321, %v2323, %v2319
  %v2325 = vmul.f32 1.0, %v2324
  %v2326 = vmul.f32 %v2305, %v2183
  %v2327 = vmul.f32 %v2305, %v2306
  %2329 = vrot.lane.b32.xlu0 %v2327, 64
  %v2330 = vpop.permute.xlu0 %2329
  %v2332 = vadd.f32 %v2326, %v2330
  %v2333 = vtanh.pop %v2332
  %v2334 = vmul.f32 %v2325, %v2333
  %v2335 = vmul.f32 %v2334, %v1877
  %2337 = vrot.lane.b32.xlu0 %v2335, 64
  %v2338 = vpop.permute.xlu0 %2337
  %v2340 = vsel %vm1884, %v2338, 0.0
  %2341 = vadd.xlane.f32.xlu0 %v2340
  %v2342 = vpop.xlane.xlu0 %2341
  %v2343 = vadd.f32 %v2342, %v1889
  %v2344 = vmul.f32 %v2334, %v1895
  %2346 = vrot.lane.b32.xlu0 %v2344, 64
  %v2347 = vpop.permute.xlu0 %2346
  %v2349 = vsel %vm1884, %v2347, 0.0
  %2350 = vadd.xlane.f32.xlu0 %v2349
  %v2351 = vpop.xlane.xlu0 %2350
  %v2352 = vadd.f32 %v2351, %v1889
  %vm2353 = vcmp.eq.s32.totalorder %v1674, 3
  %2355 = vset.pattern.permute.xlu0 0
  %2356 = vperm.xlu0 %2355, %v2343
  %v2357 = vpop.permute.xlu0 %2356
  %v2359 = vsel %vm2353, %v2357, %v2210
  %2361 = vset.pattern.permute.xlu0 1
  %2362 = vperm.xlu0 %2361, %v2352
  %v2363 = vpop.permute.xlu0 %2362
  %v2365 = vsel %vm2353, %v2363, %v2216
  %v2366 = vmul.f32 %v2357, %v1680
  %v2367 = vmul.f32 %v2363, %v1686
  %v2368 = vadd.f32 %v2366, %v2367
  %v2369 = vadd.f32 %v2368, %v1690
  %v2370 = vmax.f32 %v2369, 0.0
  %v2371 = vpack.c.bf16 %v2370, %v2370
  %v2372 = vpack.c.bf16 %v2334, %v2334
  %2374 = vrot.lane.b32.xlu0 %v2372, 64
  %v2375 = vpop.permute.xlu0 %2374
  %v2377 = vsel %vm1736, %v2375, 0
  %2379 = vmatpush.bf16.msra.mxu0 0
  %2380 = vmatpush.bf16.msra.mxu0 0
  %2381 = vmatpush.bf16.msra.mxu0 0
  %2382 = vmatpush.bf16.msra.mxu0 0
  %2383 = vmatpush.bf16.msra.mxu0 %v1726
  %2384 = vmatpush.bf16.msra.mxu0 %v1724
  %2385 = vmatpush.bf16.msra.mxu0 %v1722
  %2386 = vmatpush.bf16.msra.mxu0 %v1720
  %2387 = vmatmul.bf16.gmra.mxu0 %v2377
  %v2388 = vpop.f32.mrf.mxu0
  %v2389 = vadd.f32 0.0, %v2388
  %v2390 = vpop.f32.mrf.mxu0
  %2391 = vdwg.mxu0
  %2392 = vmatpush.bf16.msra.mxu0 0
  %2393 = vmatpush.bf16.msra.mxu0 0
  %2394 = vmatpush.bf16.msra.mxu0 0
  %2395 = vmatpush.bf16.msra.mxu0 0
  %2396 = vmatpush.bf16.msra.mxu0 %v1727
  %2397 = vmatpush.bf16.msra.mxu0 %v1725
  %2398 = vmatpush.bf16.msra.mxu0 %v1723
  %2399 = vmatpush.bf16.msra.mxu0 %v1721
  %2400 = vmatmul.bf16.gmra.mxu0 %v2377
  %v2401 = vpop.f32.mrf.mxu0
  %v2402 = vadd.f32 0.0, %v2401
  %v2403 = vpop.f32.mrf.mxu0
  %2404 = vdwg.mxu0
  %v2406 = vsel %vm981, %v2371, 0
  %2408 = vmatpush.bf16.msra.mxu0 0
  %2409 = vmatpush.bf16.msra.mxu0 0
  %2410 = vmatpush.bf16.msra.mxu0 0
  %2411 = vmatpush.bf16.msra.mxu0 0
  %2412 = vmatpush.bf16.msra.mxu0 0
  %2413 = vmatpush.bf16.msra.mxu0 0
  %2414 = vmatpush.bf16.msra.mxu0 %v1780
  %2415 = vmatpush.bf16.msra.mxu0 %v1778
  %2416 = vmatmul.bf16.gmra.mxu0 %v2406
  %v2417 = vpop.f32.mrf.mxu0
  %v2418 = vadd.f32 %v2389, %v2417
  %v2419 = vpop.f32.mrf.mxu0
  %2420 = vdwg.mxu0
  %2421 = vmatpush.bf16.msra.mxu0 0
  %2422 = vmatpush.bf16.msra.mxu0 0
  %2423 = vmatpush.bf16.msra.mxu0 0
  %2424 = vmatpush.bf16.msra.mxu0 0
  %2425 = vmatpush.bf16.msra.mxu0 0
  %2426 = vmatpush.bf16.msra.mxu0 0
  %2427 = vmatpush.bf16.msra.mxu0 %v1781
  %2428 = vmatpush.bf16.msra.mxu0 %v1779
  %2429 = vmatmul.bf16.gmra.mxu0 %v2406
  %v2430 = vpop.f32.mrf.mxu0
  %v2431 = vadd.f32 %v2402, %v2430
  %v2432 = vpop.f32.mrf.mxu0
  %2433 = vdwg.mxu0
  %v2434 = vadd.f32 %v2418, %v1816
  %v2435 = vadd.f32 %v2431, %v1817
  %v2436 = vxor.u32 %v2434, 2147483648
  %v2437 = vmul.f32 %v2436, 1.442695
  %v2438 = vpow.pop %v2437
  %v2439 = vadd.f32 %v2438, 1.0
  %v2440 = vrcp.pop %v2439
  %v2441 = vmul.f32 %v2439, %v2440
  %v2442 = vsub.f32 1.0, %v2441
  %v2443 = vmul.f32 %v2440, %v2442
  %v2444 = vadd.f32 %v2440, %v2443
  %vm2445 = vweird.f32 %v2439
  %vm2446 = vweird.f32 %v2440
  %vm2447 = vmor %vm2445, %vm2446
  %v2448 = vsel %vm2447, %v2440, %v2444
  %v2449 = vand.u32 2147483647, %v2439
  %vm2450 = vcmp.eq.f32.partialorder %v2449, 8.507059e+37
  %v2451 = vand.u32 %v2439, 2147483648
  %v2452 = vor.u32 1.1754944e-38, %v2451
  %v2453 = vsel %vm2450, %v2452, %v2448
  %v2454 = vmul.f32 1.0, %v2453
  %v2455 = vtanh.pop %v2435
  %v2456 = vxor.u32 %v2435, 2147483648
  %v2457 = vmul.f32 %v2456, 1.442695
  %v2458 = vpow.pop %v2457
  %v2459 = vadd.f32 %v2458, 1.0
  %v2460 = vrcp.pop %v2459
  %v2461 = vmul.f32 %v2459, %v2460
  %v2462 = vsub.f32 1.0, %v2461
  %v2463 = vmul.f32 %v2460, %v2462
  %v2464 = vadd.f32 %v2460, %v2463
  %vm2465 = vweird.f32 %v2459
  %vm2466 = vweird.f32 %v2460
  %vm2467 = vmor %vm2465, %vm2466
  %v2468 = vsel %vm2467, %v2460, %v2464
  %v2469 = vand.u32 2147483647, %v2459
  %vm2470 = vcmp.eq.f32.partialorder %v2469, 8.507059e+37
  %v2471 = vand.u32 %v2459, 2147483648
  %v2472 = vor.u32 1.1754944e-38, %v2471
  %v2473 = vsel %vm2470, %v2472, %v2468
  %v2474 = vmul.f32 1.0, %v2473
  %v2475 = vmul.f32 %v2454, %v2332
  %v2476 = vmul.f32 %v2454, %v2455
  %2478 = vrot.lane.b32.xlu0 %v2476, 64
  %v2479 = vpop.permute.xlu0 %2478
  %v2481 = vadd.f32 %v2475, %v2479
  %v2482 = vtanh.pop %v2481
  %v2483 = vmul.f32 %v2474, %v2482
  %v2484 = vmul.f32 %v2483, %v1877
  %2486 = vrot.lane.b32.xlu0 %v2484, 64
  %v2487 = vpop.permute.xlu0 %2486
  %v2489 = vsel %vm1884, %v2487, 0.0
  %2490 = vadd.xlane.f32.xlu0 %v2489
  %v2491 = vpop.xlane.xlu0 %2490
  %v2492 = vadd.f32 %v2491, %v1889
  %v2493 = vmul.f32 %v2483, %v1895
  %2495 = vrot.lane.b32.xlu0 %v2493, 64
  %v2496 = vpop.permute.xlu0 %2495
  %v2498 = vsel %vm1884, %v2496, 0.0
  %2499 = vadd.xlane.f32.xlu0 %v2498
  %v2500 = vpop.xlane.xlu0 %2499
  %v2501 = vadd.f32 %v2500, %v1889
  %vm2502 = vcmp.eq.s32.totalorder %v1674, 4
  %2504 = vset.pattern.permute.xlu0 0
  %2505 = vperm.xlu0 %2504, %v2492
  %v2506 = vpop.permute.xlu0 %2505
  %v2508 = vsel %vm2502, %v2506, %v2359
  %2510 = vset.pattern.permute.xlu0 1
  %2511 = vperm.xlu0 %2510, %v2501
  %v2512 = vpop.permute.xlu0 %2511
  %v2514 = vsel %vm2502, %v2512, %v2365
  %v2515 = vmul.f32 %v2506, %v1680
  %v2516 = vmul.f32 %v2512, %v1686
  %v2517 = vadd.f32 %v2515, %v2516
  %v2518 = vadd.f32 %v2517, %v1690
  %v2519 = vmax.f32 %v2518, 0.0
  %v2520 = vpack.c.bf16 %v2519, %v2519
  %v2521 = vpack.c.bf16 %v2483, %v2483
  %2523 = vrot.lane.b32.xlu0 %v2521, 64
  %v2524 = vpop.permute.xlu0 %2523
  %v2526 = vsel %vm1736, %v2524, 0
  %2528 = vmatpush.bf16.msra.mxu0 0
  %2529 = vmatpush.bf16.msra.mxu0 0
  %2530 = vmatpush.bf16.msra.mxu0 0
  %2531 = vmatpush.bf16.msra.mxu0 0
  %2532 = vmatpush.bf16.msra.mxu0 %v1726
  %2533 = vmatpush.bf16.msra.mxu0 %v1724
  %2534 = vmatpush.bf16.msra.mxu0 %v1722
  %2535 = vmatpush.bf16.msra.mxu0 %v1720
  %2536 = vmatmul.bf16.gmra.mxu0 %v2526
  %v2537 = vpop.f32.mrf.mxu0
  %v2538 = vadd.f32 0.0, %v2537
  %v2539 = vpop.f32.mrf.mxu0
  %2540 = vdwg.mxu0
  %2541 = vmatpush.bf16.msra.mxu0 0
  %2542 = vmatpush.bf16.msra.mxu0 0
  %2543 = vmatpush.bf16.msra.mxu0 0
  %2544 = vmatpush.bf16.msra.mxu0 0
  %2545 = vmatpush.bf16.msra.mxu0 %v1727
  %2546 = vmatpush.bf16.msra.mxu0 %v1725
  %2547 = vmatpush.bf16.msra.mxu0 %v1723
  %2548 = vmatpush.bf16.msra.mxu0 %v1721
  %2549 = vmatmul.bf16.gmra.mxu0 %v2526
  %v2550 = vpop.f32.mrf.mxu0
  %v2551 = vadd.f32 0.0, %v2550
  %v2552 = vpop.f32.mrf.mxu0
  %2553 = vdwg.mxu0
  %v2555 = vsel %vm981, %v2520, 0
  %2557 = vmatpush.bf16.msra.mxu0 0
  %2558 = vmatpush.bf16.msra.mxu0 0
  %2559 = vmatpush.bf16.msra.mxu0 0
  %2560 = vmatpush.bf16.msra.mxu0 0
  %2561 = vmatpush.bf16.msra.mxu0 0
  %2562 = vmatpush.bf16.msra.mxu0 0
  %2563 = vmatpush.bf16.msra.mxu0 %v1780
  %2564 = vmatpush.bf16.msra.mxu0 %v1778
  %2565 = vmatmul.bf16.gmra.mxu0 %v2555
  %v2566 = vpop.f32.mrf.mxu0
  %v2567 = vadd.f32 %v2538, %v2566
  %v2568 = vpop.f32.mrf.mxu0
  %2569 = vdwg.mxu0
  %2570 = vmatpush.bf16.msra.mxu0 0
  %2571 = vmatpush.bf16.msra.mxu0 0
  %2572 = vmatpush.bf16.msra.mxu0 0
  %2573 = vmatpush.bf16.msra.mxu0 0
  %2574 = vmatpush.bf16.msra.mxu0 0
  %2575 = vmatpush.bf16.msra.mxu0 0
  %2576 = vmatpush.bf16.msra.mxu0 %v1781
  %2577 = vmatpush.bf16.msra.mxu0 %v1779
  %2578 = vmatmul.bf16.gmra.mxu0 %v2555
  %v2579 = vpop.f32.mrf.mxu0
  %v2580 = vadd.f32 %v2551, %v2579
  %v2581 = vpop.f32.mrf.mxu0
  %2582 = vdwg.mxu0
  %v2583 = vadd.f32 %v2567, %v1816
  %v2584 = vadd.f32 %v2580, %v1817
  %v2585 = vxor.u32 %v2583, 2147483648
  %v2586 = vmul.f32 %v2585, 1.442695
  %v2587 = vpow.pop %v2586
  %v2588 = vadd.f32 %v2587, 1.0
  %v2589 = vrcp.pop %v2588
  %v2590 = vmul.f32 %v2588, %v2589
  %v2591 = vsub.f32 1.0, %v2590
  %v2592 = vmul.f32 %v2589, %v2591
  %v2593 = vadd.f32 %v2589, %v2592
  %vm2594 = vweird.f32 %v2588
  %vm2595 = vweird.f32 %v2589
  %vm2596 = vmor %vm2594, %vm2595
  %v2597 = vsel %vm2596, %v2589, %v2593
  %v2598 = vand.u32 2147483647, %v2588
  %vm2599 = vcmp.eq.f32.partialorder %v2598, 8.507059e+37
  %v2600 = vand.u32 %v2588, 2147483648
  %v2601 = vor.u32 1.1754944e-38, %v2600
  %v2602 = vsel %vm2599, %v2601, %v2597
  %v2603 = vmul.f32 1.0, %v2602
  %v2604 = vtanh.pop %v2584
  %v2605 = vxor.u32 %v2584, 2147483648
  %v2606 = vmul.f32 %v2605, 1.442695
  %v2607 = vpow.pop %v2606
  %v2608 = vadd.f32 %v2607, 1.0
  %v2609 = vrcp.pop %v2608
  %v2610 = vmul.f32 %v2608, %v2609
  %v2611 = vsub.f32 1.0, %v2610
  %v2612 = vmul.f32 %v2609, %v2611
  %v2613 = vadd.f32 %v2609, %v2612
  %vm2614 = vweird.f32 %v2608
  %vm2615 = vweird.f32 %v2609
  %vm2616 = vmor %vm2614, %vm2615
  %v2617 = vsel %vm2616, %v2609, %v2613
  %v2618 = vand.u32 2147483647, %v2608
  %vm2619 = vcmp.eq.f32.partialorder %v2618, 8.507059e+37
  %v2620 = vand.u32 %v2608, 2147483648
  %v2621 = vor.u32 1.1754944e-38, %v2620
  %v2622 = vsel %vm2619, %v2621, %v2617
  %v2623 = vmul.f32 1.0, %v2622
  %v2624 = vmul.f32 %v2603, %v2481
  %v2625 = vmul.f32 %v2603, %v2604
  %2627 = vrot.lane.b32.xlu0 %v2625, 64
  %v2628 = vpop.permute.xlu0 %2627
  %v2630 = vadd.f32 %v2624, %v2628
  %v2631 = vtanh.pop %v2630
  %v2632 = vmul.f32 %v2623, %v2631
  %v2633 = vmul.f32 %v2632, %v1877
  %2635 = vrot.lane.b32.xlu0 %v2633, 64
  %v2636 = vpop.permute.xlu0 %2635
  %v2638 = vsel %vm1884, %v2636, 0.0
  %2639 = vadd.xlane.f32.xlu0 %v2638
  %v2640 = vpop.xlane.xlu0 %2639
  %v2641 = vadd.f32 %v2640, %v1889
  %v2642 = vmul.f32 %v2632, %v1895
  %2644 = vrot.lane.b32.xlu0 %v2642, 64
  %v2645 = vpop.permute.xlu0 %2644
  %v2647 = vsel %vm1884, %v2645, 0.0
  %2648 = vadd.xlane.f32.xlu0 %v2647
  %v2649 = vpop.xlane.xlu0 %2648
  %v2650 = vadd.f32 %v2649, %v1889
  %vm2651 = vcmp.eq.s32.totalorder %v1674, 5
  %2653 = vset.pattern.permute.xlu0 0
  %2654 = vperm.xlu0 %2653, %v2641
  %v2655 = vpop.permute.xlu0 %2654
  %v2657 = vsel %vm2651, %v2655, %v2508
  %2659 = vset.pattern.permute.xlu0 1
  %2660 = vperm.xlu0 %2659, %v2650
  %v2661 = vpop.permute.xlu0 %2660
  %v2663 = vsel %vm2651, %v2661, %v2514
  %v2664 = vmul.f32 %v2655, %v1680
  %v2665 = vmul.f32 %v2661, %v1686
  %v2666 = vadd.f32 %v2664, %v2665
  %v2667 = vadd.f32 %v2666, %v1690
  %v2668 = vmax.f32 %v2667, 0.0
  %v2669 = vpack.c.bf16 %v2668, %v2668
  %v2670 = vpack.c.bf16 %v2632, %v2632
  %2672 = vrot.lane.b32.xlu0 %v2670, 64
  %v2673 = vpop.permute.xlu0 %2672
  %v2675 = vsel %vm1736, %v2673, 0
  %2677 = vmatpush.bf16.msra.mxu0 0
  %2678 = vmatpush.bf16.msra.mxu0 0
  %2679 = vmatpush.bf16.msra.mxu0 0
  %2680 = vmatpush.bf16.msra.mxu0 0
  %2681 = vmatpush.bf16.msra.mxu0 %v1726
  %2682 = vmatpush.bf16.msra.mxu0 %v1724
  %2683 = vmatpush.bf16.msra.mxu0 %v1722
  %2684 = vmatpush.bf16.msra.mxu0 %v1720
  %2685 = vmatmul.bf16.gmra.mxu0 %v2675
  %v2686 = vpop.f32.mrf.mxu0
  %v2687 = vadd.f32 0.0, %v2686
  %v2688 = vpop.f32.mrf.mxu0
  %2689 = vdwg.mxu0
  %2690 = vmatpush.bf16.msra.mxu0 0
  %2691 = vmatpush.bf16.msra.mxu0 0
  %2692 = vmatpush.bf16.msra.mxu0 0
  %2693 = vmatpush.bf16.msra.mxu0 0
  %2694 = vmatpush.bf16.msra.mxu0 %v1727
  %2695 = vmatpush.bf16.msra.mxu0 %v1725
  %2696 = vmatpush.bf16.msra.mxu0 %v1723
  %2697 = vmatpush.bf16.msra.mxu0 %v1721
  %2698 = vmatmul.bf16.gmra.mxu0 %v2675
  %v2699 = vpop.f32.mrf.mxu0
  %v2700 = vadd.f32 0.0, %v2699
  %v2701 = vpop.f32.mrf.mxu0
  %2702 = vdwg.mxu0
  %v2704 = vsel %vm981, %v2669, 0
  %2706 = vmatpush.bf16.msra.mxu0 0
  %2707 = vmatpush.bf16.msra.mxu0 0
  %2708 = vmatpush.bf16.msra.mxu0 0
  %2709 = vmatpush.bf16.msra.mxu0 0
  %2710 = vmatpush.bf16.msra.mxu0 0
  %2711 = vmatpush.bf16.msra.mxu0 0
  %2712 = vmatpush.bf16.msra.mxu0 %v1780
  %2713 = vmatpush.bf16.msra.mxu0 %v1778
  %2714 = vmatmul.bf16.gmra.mxu0 %v2704
  %v2715 = vpop.f32.mrf.mxu0
  %v2716 = vadd.f32 %v2687, %v2715
  %v2717 = vpop.f32.mrf.mxu0
  %2718 = vdwg.mxu0
  %2719 = vmatpush.bf16.msra.mxu0 0
  %2720 = vmatpush.bf16.msra.mxu0 0
  %2721 = vmatpush.bf16.msra.mxu0 0
  %2722 = vmatpush.bf16.msra.mxu0 0
  %2723 = vmatpush.bf16.msra.mxu0 0
  %2724 = vmatpush.bf16.msra.mxu0 0
  %2725 = vmatpush.bf16.msra.mxu0 %v1781
  %2726 = vmatpush.bf16.msra.mxu0 %v1779
  %2727 = vmatmul.bf16.gmra.mxu0 %v2704
  %v2728 = vpop.f32.mrf.mxu0
  %v2729 = vadd.f32 %v2700, %v2728
  %v2730 = vpop.f32.mrf.mxu0
  %2731 = vdwg.mxu0
  %v2732 = vadd.f32 %v2716, %v1816
  %v2733 = vadd.f32 %v2729, %v1817
  %v2734 = vxor.u32 %v2732, 2147483648
  %v2735 = vmul.f32 %v2734, 1.442695
  %v2736 = vpow.pop %v2735
  %v2737 = vadd.f32 %v2736, 1.0
  %v2738 = vrcp.pop %v2737
  %v2739 = vmul.f32 %v2737, %v2738
  %v2740 = vsub.f32 1.0, %v2739
  %v2741 = vmul.f32 %v2738, %v2740
  %v2742 = vadd.f32 %v2738, %v2741
  %vm2743 = vweird.f32 %v2737
  %vm2744 = vweird.f32 %v2738
  %vm2745 = vmor %vm2743, %vm2744
  %v2746 = vsel %vm2745, %v2738, %v2742
  %v2747 = vand.u32 2147483647, %v2737
  %vm2748 = vcmp.eq.f32.partialorder %v2747, 8.507059e+37
  %v2749 = vand.u32 %v2737, 2147483648
  %v2750 = vor.u32 1.1754944e-38, %v2749
  %v2751 = vsel %vm2748, %v2750, %v2746
  %v2752 = vmul.f32 1.0, %v2751
  %v2753 = vtanh.pop %v2733
  %v2754 = vxor.u32 %v2733, 2147483648
  %v2755 = vmul.f32 %v2754, 1.442695
  %v2756 = vpow.pop %v2755
  %v2757 = vadd.f32 %v2756, 1.0
  %v2758 = vrcp.pop %v2757
  %v2759 = vmul.f32 %v2757, %v2758
  %v2760 = vsub.f32 1.0, %v2759
  %v2761 = vmul.f32 %v2758, %v2760
  %v2762 = vadd.f32 %v2758, %v2761
  %vm2763 = vweird.f32 %v2757
  %vm2764 = vweird.f32 %v2758
  %vm2765 = vmor %vm2763, %vm2764
  %v2766 = vsel %vm2765, %v2758, %v2762
  %v2767 = vand.u32 2147483647, %v2757
  %vm2768 = vcmp.eq.f32.partialorder %v2767, 8.507059e+37
  %v2769 = vand.u32 %v2757, 2147483648
  %v2770 = vor.u32 1.1754944e-38, %v2769
  %v2771 = vsel %vm2768, %v2770, %v2766
  %v2772 = vmul.f32 1.0, %v2771
  %v2773 = vmul.f32 %v2752, %v2630
  %v2774 = vmul.f32 %v2752, %v2753
  %2776 = vrot.lane.b32.xlu0 %v2774, 64
  %v2777 = vpop.permute.xlu0 %2776
  %v2779 = vadd.f32 %v2773, %v2777
  %v2780 = vtanh.pop %v2779
  %v2781 = vmul.f32 %v2772, %v2780
  %v2782 = vmul.f32 %v2781, %v1877
  %2784 = vrot.lane.b32.xlu0 %v2782, 64
  %v2785 = vpop.permute.xlu0 %2784
  %v2787 = vsel %vm1884, %v2785, 0.0
  %2788 = vadd.xlane.f32.xlu0 %v2787
  %v2789 = vpop.xlane.xlu0 %2788
  %v2790 = vadd.f32 %v2789, %v1889
  %v2791 = vmul.f32 %v2781, %v1895
  %2793 = vrot.lane.b32.xlu0 %v2791, 64
  %v2794 = vpop.permute.xlu0 %2793
  %v2796 = vsel %vm1884, %v2794, 0.0
  %2797 = vadd.xlane.f32.xlu0 %v2796
  %v2798 = vpop.xlane.xlu0 %2797
  %v2799 = vadd.f32 %v2798, %v1889
  %vm2800 = vcmp.eq.s32.totalorder %v1674, 6
  %2802 = vset.pattern.permute.xlu0 0
  %2803 = vperm.xlu0 %2802, %v2790
  %v2804 = vpop.permute.xlu0 %2803
  %v2806 = vsel %vm2800, %v2804, %v2657
  %2808 = vset.pattern.permute.xlu0 1
  %2809 = vperm.xlu0 %2808, %v2799
  %v2810 = vpop.permute.xlu0 %2809
  %v2812 = vsel %vm2800, %v2810, %v2663
  %v2813 = vmul.f32 %v2804, %v1680
  %v2814 = vmul.f32 %v2810, %v1686
  %v2815 = vadd.f32 %v2813, %v2814
  %v2816 = vadd.f32 %v2815, %v1690
  %v2817 = vmax.f32 %v2816, 0.0
  %v2818 = vpack.c.bf16 %v2817, %v2817
  %v2819 = vpack.c.bf16 %v2781, %v2781
  %2821 = vrot.lane.b32.xlu0 %v2819, 64
  %v2822 = vpop.permute.xlu0 %2821
  %v2824 = vsel %vm1736, %v2822, 0
  %2826 = vmatpush.bf16.msra.mxu0 0
  %2827 = vmatpush.bf16.msra.mxu0 0
  %2828 = vmatpush.bf16.msra.mxu0 0
  %2829 = vmatpush.bf16.msra.mxu0 0
  %2830 = vmatpush.bf16.msra.mxu0 %v1726
  %2831 = vmatpush.bf16.msra.mxu0 %v1724
  %2832 = vmatpush.bf16.msra.mxu0 %v1722
  %2833 = vmatpush.bf16.msra.mxu0 %v1720
  %2834 = vmatmul.bf16.gmra.mxu0 %v2824
  %v2835 = vpop.f32.mrf.mxu0
  %v2836 = vadd.f32 0.0, %v2835
  %v2837 = vpop.f32.mrf.mxu0
  %2838 = vdwg.mxu0
  %2839 = vmatpush.bf16.msra.mxu0 0
  %2840 = vmatpush.bf16.msra.mxu0 0
  %2841 = vmatpush.bf16.msra.mxu0 0
  %2842 = vmatpush.bf16.msra.mxu0 0
  %2843 = vmatpush.bf16.msra.mxu0 %v1727
  %2844 = vmatpush.bf16.msra.mxu0 %v1725
  %2845 = vmatpush.bf16.msra.mxu0 %v1723
  %2846 = vmatpush.bf16.msra.mxu0 %v1721
  %2847 = vmatmul.bf16.gmra.mxu0 %v2824
  %v2848 = vpop.f32.mrf.mxu0
  %v2849 = vadd.f32 0.0, %v2848
  %v2850 = vpop.f32.mrf.mxu0
  %2851 = vdwg.mxu0
  %v2853 = vsel %vm981, %v2818, 0
  %2855 = vmatpush.bf16.msra.mxu0 0
  %2856 = vmatpush.bf16.msra.mxu0 0
  %2857 = vmatpush.bf16.msra.mxu0 0
  %2858 = vmatpush.bf16.msra.mxu0 0
  %2859 = vmatpush.bf16.msra.mxu0 0
  %2860 = vmatpush.bf16.msra.mxu0 0
  %2861 = vmatpush.bf16.msra.mxu0 %v1780
  %2862 = vmatpush.bf16.msra.mxu0 %v1778
  %2863 = vmatmul.bf16.gmra.mxu0 %v2853
  %v2864 = vpop.f32.mrf.mxu0
  %v2865 = vadd.f32 %v2836, %v2864
  %v2866 = vpop.f32.mrf.mxu0
  %2867 = vdwg.mxu0
  %2868 = vmatpush.bf16.msra.mxu0 0
  %2869 = vmatpush.bf16.msra.mxu0 0
  %2870 = vmatpush.bf16.msra.mxu0 0
  %2871 = vmatpush.bf16.msra.mxu0 0
  %2872 = vmatpush.bf16.msra.mxu0 0
  %2873 = vmatpush.bf16.msra.mxu0 0
  %2874 = vmatpush.bf16.msra.mxu0 %v1781
  %2875 = vmatpush.bf16.msra.mxu0 %v1779
  %2876 = vmatmul.bf16.gmra.mxu0 %v2853
  %v2877 = vpop.f32.mrf.mxu0
  %v2878 = vadd.f32 %v2849, %v2877
  %v2879 = vpop.f32.mrf.mxu0
  %2880 = vdwg.mxu0
  %v2881 = vadd.f32 %v2865, %v1816
  %v2882 = vadd.f32 %v2878, %v1817
  %v2883 = vxor.u32 %v2881, 2147483648
  %v2884 = vmul.f32 %v2883, 1.442695
  %v2885 = vpow.pop %v2884
  %v2886 = vadd.f32 %v2885, 1.0
  %v2887 = vrcp.pop %v2886
  %v2888 = vmul.f32 %v2886, %v2887
  %v2889 = vsub.f32 1.0, %v2888
  %v2890 = vmul.f32 %v2887, %v2889
  %v2891 = vadd.f32 %v2887, %v2890
  %vm2892 = vweird.f32 %v2886
  %vm2893 = vweird.f32 %v2887
  %vm2894 = vmor %vm2892, %vm2893
  %v2895 = vsel %vm2894, %v2887, %v2891
  %v2896 = vand.u32 2147483647, %v2886
  %vm2897 = vcmp.eq.f32.partialorder %v2896, 8.507059e+37
  %v2898 = vand.u32 %v2886, 2147483648
  %v2899 = vor.u32 1.1754944e-38, %v2898
  %v2900 = vsel %vm2897, %v2899, %v2895
  %v2901 = vmul.f32 1.0, %v2900
  %v2902 = vtanh.pop %v2882
  %v2903 = vxor.u32 %v2882, 2147483648
  %v2904 = vmul.f32 %v2903, 1.442695
  %v2905 = vpow.pop %v2904
  %v2906 = vadd.f32 %v2905, 1.0
  %v2907 = vrcp.pop %v2906
  %v2908 = vmul.f32 %v2906, %v2907
  %v2909 = vsub.f32 1.0, %v2908
  %v2910 = vmul.f32 %v2907, %v2909
  %v2911 = vadd.f32 %v2907, %v2910
  %vm2912 = vweird.f32 %v2906
  %vm2913 = vweird.f32 %v2907
  %vm2914 = vmor %vm2912, %vm2913
  %v2915 = vsel %vm2914, %v2907, %v2911
  %v2916 = vand.u32 2147483647, %v2906
  %vm2917 = vcmp.eq.f32.partialorder %v2916, 8.507059e+37
  %v2918 = vand.u32 %v2906, 2147483648
  %v2919 = vor.u32 1.1754944e-38, %v2918
  %v2920 = vsel %vm2917, %v2919, %v2915
  %v2921 = vmul.f32 1.0, %v2920
  %v2922 = vmul.f32 %v2901, %v2779
  %v2923 = vmul.f32 %v2901, %v2902
  %2925 = vrot.lane.b32.xlu0 %v2923, 64
  %v2926 = vpop.permute.xlu0 %2925
  %v2928 = vadd.f32 %v2922, %v2926
  %v2929 = vtanh.pop %v2928
  %v2930 = vmul.f32 %v2921, %v2929
  %v2931 = vmul.f32 %v2930, %v1877
  %2933 = vrot.lane.b32.xlu0 %v2931, 64
  %v2934 = vpop.permute.xlu0 %2933
  %v2936 = vsel %vm1884, %v2934, 0.0
  %2937 = vadd.xlane.f32.xlu0 %v2936
  %v2938 = vpop.xlane.xlu0 %2937
  %v2939 = vadd.f32 %v2938, %v1889
  %v2940 = vmul.f32 %v2930, %v1895
  %2942 = vrot.lane.b32.xlu0 %v2940, 64
  %v2943 = vpop.permute.xlu0 %2942
  %v2945 = vsel %vm1884, %v2943, 0.0
  %2946 = vadd.xlane.f32.xlu0 %v2945
  %v2947 = vpop.xlane.xlu0 %2946
  %v2948 = vadd.f32 %v2947, %v1889
  %vm2949 = vcmp.eq.s32.totalorder %v1674, 7
  %2951 = vset.pattern.permute.xlu0 0
  %2952 = vperm.xlu0 %2951, %v2939
  %v2953 = vpop.permute.xlu0 %2952
  %v2955 = vsel %vm2949, %v2953, %v2806
  %2957 = vset.pattern.permute.xlu0 1
  %2958 = vperm.xlu0 %2957, %v2948
  %v2959 = vpop.permute.xlu0 %2958
  %v2961 = vsel %vm2949, %v2959, %v2812
  %vm2962 = vcmask 58368
  %2963 = vst.msk [vmem:[%s16] sm:$0x3] %vm2962, %v2955
  %s2964 = scalar_lea.vmem %s16, 2
  %2965 = vst.msk [vmem:[%s2964] sm:$0x3] %vm2962, %v2961
  // Predicated region
  $region66: #{lstm_model_forward.1} parent=0 // pred_check
    _
  $region67: #{lstm_model_forward.1} parent=0 // pred_check_branch
    %2967 = sbr.rel (0) target = $region69
  $region68: #{lstm_model_forward.1} parent=0 // pred_region
    _
  $region69: #{lstm_model_forward.1} parent=0 // pred_fallthru
    _
  // Predicated region
  $region70: #{lstm_model_forward.1} parent=0 // pred_check
    _
  $region71: #{lstm_model_forward.1} parent=0 // pred_check_branch
    %2969 = sbr.rel (0) target = $region73
  $region72: #{lstm_model_forward.1} parent=0 // pred_region
    _
  $region73: #{lstm_model_forward.1} parent=0 // pred_fallthru
    _

</llo_original>
